<compile_context>
chip_gen: v6e
topology: v6e:2x2x1
jax: 0.10.0
libtpu: 0.0.40
codegen_flags: <defaults>
</compile_context>

<pallas_src>
import jax
import jax.numpy as jnp
from jax.experimental import pallas as pl
from jax.experimental.pallas import tpu as pltpu

EPS = 1e-5
TM = 256      # flattened padded spatial rows per grid step (multiple of 8)
LANE = 128    # TPU lane width; channel dims padded to multiples of this


def _round_up(x, m):
    return (x + m - 1) // m * m


# ---------------------------------------------------------------------------
# Kernel 1: 3x3 conv as 9 shifted MXU matmuls + masked per-tile BN statistics.
# ---------------------------------------------------------------------------
def _make_conv_stats_kernel(tm, halo_pad, wp, cin_p, cout_p):
    # Tap offsets into the staged row window: output row q needs input rows
    # q + dy*Wp + dx for (dy, dx) in {0,1,2}^2 (window base already shifted).
    offs = [dy * wp + dx for dy in range(3) for dx in range(3)]

    def kernel(x_main_ref, x_halo_ref, w_ref, mask_ref,
               y_ref, stats_ref, buf_ref):
        # Stage the contiguous (tm + halo) row window in VMEM.  The scratch is
        # f32 so the 9 row-shifted (sublane-unaligned) slices below are plain
        # f32 sublane slices; HBM traffic stays bf16.
        buf_ref[0:tm, :] = x_main_ref[...].astype(jnp.float32)
        buf_ref[tm:tm + halo_pad, :] = x_halo_ref[...].astype(jnp.float32)

        acc = jnp.zeros((tm, cout_p), jnp.float32)
        for t, off in enumerate(offs):
            xs = buf_ref[off:off + tm, :].astype(jnp.bfloat16)   # MXU LHS
            wt = w_ref[t * cin_p:(t + 1) * cin_p, :]             # MXU RHS
            acc = acc + jnp.dot(xs, wt, preferred_element_type=jnp.float32)

        y_ref[...] = acc

        # Single-pass masked statistics (interior output rows only).
        m = mask_ref[...]                      # (tm, 1) f32 in {0, 1}
        ym = acc * m
        stats_ref[0:1, :] = jnp.sum(ym, axis=0, keepdims=True)        # sum
        stats_ref[1:2, :] = jnp.sum(ym * acc, axis=0, keepdims=True)  # sum sq
        stats_ref[2:8, :] = jnp.zeros((6, cout_p), jnp.float32)

    return kernel


def _conv3x3_stats(x_main, x_halo, w, mask, *, wp, halo_pad):
    mp_pad, cin_p = x_main.shape
    cout_p = w.shape[1]
    gm = mp_pad // TM
    kernel = _make_conv_stats_kernel(TM, halo_pad, wp, cin_p, cout_p)
    return pl.pallas_call(
        kernel,
        out_shape=(jax.ShapeDtypeStruct((mp_pad, cout_p), jnp.float32),
                   jax.ShapeDtypeStruct((gm * 8, cout_p), jnp.float32)),
        grid=(gm,),
        in_specs=[
            pl.BlockSpec((TM, cin_p), lambda i: (i, 0)),
            pl.BlockSpec((halo_pad, cin_p), lambda i: (i, 0)),
            pl.BlockSpec((9 * cin_p, cout_p), lambda i: (0, 0)),  # resident
            pl.BlockSpec((TM, 1), lambda i: (i, 0)),
        ],
        out_specs=(pl.BlockSpec((TM, cout_p), lambda i: (i, 0)),
                   pl.BlockSpec((8, cout_p), lambda i: (i, 0))),
        scratch_shapes=[pltpu.VMEM((TM + halo_pad, cin_p), jnp.float32)],
        compiler_params=pltpu.CompilerParams(
            dimension_semantics=("parallel",),
            vmem_limit_bytes=32 * 1024 * 1024),
    )(x_main, x_halo, w, mask)


# ---------------------------------------------------------------------------
# Kernel 2: BN affine + (optional residual) + ReLU, tiled over M.
# ---------------------------------------------------------------------------
def _bn_apply_kernel(y_ref, scale_ref, bias_ref, mask_ref, o_ref):
    v = y_ref[...] * scale_ref[...] + bias_ref[...]
    o_ref[...] = (jnp.maximum(v, 0.0) * mask_ref[...]).astype(o_ref.dtype)


def _bn_apply_res_kernel(y_ref, scale_ref, bias_ref, mask_ref, res_ref, o_ref):
    v = y_ref[...] * scale_ref[...] + bias_ref[...] + res_ref[...]
    o_ref[...] = (jnp.maximum(v, 0.0) * mask_ref[...]).astype(o_ref.dtype)


def _bn_apply(y, scale, bias, mask, residual=None, *, out_dtype):
    mp_pad, c = y.shape
    gm = mp_pad // TM
    args = [y, scale, bias, mask]
    in_specs = [
        pl.BlockSpec((TM, c), lambda i: (i, 0)),
        pl.BlockSpec((1, c), lambda i: (0, 0)),   # resident, never re-fetched
        pl.BlockSpec((1, c), lambda i: (0, 0)),
        pl.BlockSpec((TM, 1), lambda i: (i, 0)),
    ]
    kernel = _bn_apply_kernel
    if residual is not None:
        kernel = _bn_apply_res_kernel
        args.append(residual)
        in_specs.append(pl.BlockSpec((TM, c), lambda i: (i, 0)))
    return pl.pallas_call(
        kernel,
        out_shape=jax.ShapeDtypeStruct((mp_pad, c), out_dtype),
        grid=(gm,),
        in_specs=in_specs,
        out_specs=pl.BlockSpec((TM, c), lambda i: (i, 0)),
        compiler_params=pltpu.CompilerParams(
            dimension_semantics=("parallel",),
            vmem_limit_bytes=32 * 1024 * 1024),
    )(*args)


# ---------------------------------------------------------------------------
# Glue (pure JAX data plumbing, no compute of substance).
# ---------------------------------------------------------------------------
def _main_and_halo(feat, gm, halo_pad, wp):
    """feat: (Mp_pad, Cp) padded-flat feature map with zero borders.

    Returns the main stream plus a small per-tile halo stream so each grid
    step can assemble its contiguous (TM + halo) row window from two disjoint
    auto-pipelined blocks (no overlapping blocks, no 9x im2col expansion)."""
    mp_pad, _ = feat.shape
    xin = jnp.pad(feat, ((wp + 1, halo_pad - (wp + 1)), (0, 0)))
    x_main = xin[:mp_pad]
    idx = (jnp.arange(gm, dtype=jnp.int32)[:, None] + 1) * TM \
        + jnp.arange(halo_pad, dtype=jnp.int32)[None, :]
    x_halo = jnp.take(xin, idx.reshape(-1), axis=0)
    return x_main, x_halo


def _pad_weight(w, cin_p, cout_p):
    kh, kw, ci, co = w.shape
    wpad = jnp.pad(w, ((0, 0), (0, 0), (0, cin_p - ci), (0, cout_p - co)))
    return wpad.reshape(kh * kw * cin_p, cout_p).astype(jnp.bfloat16)


def _pad_vec(v, cp):
    return jnp.pad(v.astype(jnp.float32), (0, cp - v.shape[0]))


def _conv_bn_stage(feat, w_p, gamma_p, beta_p, mask, count, geom,
                   residual=None, out_dtype=jnp.float32):
    wp, halo_pad, gm = geom
    x_main, x_halo = _main_and_halo(feat, gm, halo_pad, wp)
    y, stats = _conv3x3_stats(x_main, x_halo, w_p, mask,
                              wp=wp, halo_pad=halo_pad)
    cout_p = w_p.shape[1]
    stats = stats.reshape(gm, 8, cout_p)
    s1 = jnp.sum(stats[:, 0, :], axis=0)
    s2 = jnp.sum(stats[:, 1, :], axis=0)
    mean = s1 / count
    var = s2 / count - mean * mean           # biased variance, f32 accumulation
    inv = jax.lax.rsqrt(var + EPS)
    scale = (gamma_p * inv).reshape(1, cout_p)
    bias = (beta_p - mean * gamma_p * inv).reshape(1, cout_p)
    return _bn_apply(y, scale, bias, mask, residual, out_dtype=out_dtype)


def bottleneck_forward(x_nchw, params):
    """Forward pass of the Bottleneck module (stride=1). Input NCHW."""
    n, cin, h, w = x_nchw.shape
    planes = params["w1"].shape[3]
    hp, wp = h + 2, w + 2
    mp = n * hp * wp                         # rows in padded-flat layout
    m = n * h * w                            # BN reduction size (interior)
    mp_pad = _round_up(mp, TM)
    gm = mp_pad // TM
    halo_pad = _round_up(2 * wp + 2, 16)
    cin_p = _round_up(cin, LANE)
    cpl_p = _round_up(planes, LANE)
    geom = (wp, halo_pad, gm)

    # Interior-row mask: 1 for real output positions, 0 for spatial padding
    # and row padding.  Used for BN statistics and to re-zero stage-1 borders.
    q = jnp.arange(mp_pad, dtype=jnp.int32)
    i_idx = (q // wp) % hp
    j_idx = q % wp
    interior = ((q < mp) & (i_idx >= 1) & (i_idx <= h)
                & (j_idx >= 1) & (j_idx <= w))
    mask = interior.astype(jnp.float32).reshape(mp_pad, 1)

    # Input in padded-flat NHWC layout with lane-padded channels.
    x_nhwc = jnp.transpose(x_nchw, (0, 2, 3, 1)).astype(jnp.float32)
    xpf = jnp.pad(x_nhwc, ((0, 0), (1, 1), (1, 1), (0, cin_p - cin)))
    xpf = xpf.reshape(mp, cin_p)
    xpf = jnp.pad(xpf, ((0, mp_pad - mp), (0, 0)))   # (Mp_pad, Cin_p) f32

    w1 = _pad_weight(params["w1"], cin_p, cpl_p)     # (9*Cin_p, Cpl_p) bf16
    w2 = _pad_weight(params["w2"], cpl_p, cin_p)     # (9*Cpl_p, Cin_p) bf16
    g1 = _pad_vec(params["g1"], cpl_p)
    b1 = _pad_vec(params["b1"], cpl_p)
    g2 = _pad_vec(params["g2"], cin_p)
    b2 = _pad_vec(params["b2"], cin_p)

    # Stage 1: out1 = relu(bn1(conv1(x)))    (no residual -> no zeros DMA)
    out1 = _conv_bn_stage(xpf.astype(jnp.bfloat16), w1, g1, b1, mask,
                          float(m), geom, residual=None,
                          out_dtype=jnp.bfloat16)

    # Stage 2: out = relu(bn2(conv2(out1)) + x)
    out2 = _conv_bn_stage(out1, w2, g2, b2, mask, float(m), geom,
                          residual=xpf, out_dtype=jnp.float32)

    out = out2[:mp].reshape(n, hp, wp, cin_p)[:, 1:h + 1, 1:w + 1, :cin]
    return jnp.transpose(out, (0, 3, 1, 2))          # back to NCHW


def init_params(key, inplanes, planes):
    """Deterministic synthetic parameters (no checkpoint loading)."""
    k1, k2, k3, k4, k5, k6 = jax.random.split(key, 6)
    return {
        "w1": 0.1 * jax.random.normal(k1, (3, 3, inplanes, planes), jnp.float32),
        "w2": 0.1 * jax.random.normal(k2, (3, 3, planes, inplanes), jnp.float32),
        "g1": 1.0 + 0.1 * jax.random.normal(k3, (planes,), jnp.float32),
        "b1": 0.1 * jax.random.normal(k4, (planes,), jnp.float32),
        "g2": 1.0 + 0.1 * jax.random.normal(k5, (inplanes,), jnp.float32),
        "b2": 0.1 * jax.random.normal(k6, (inplanes,), jnp.float32),
    }


def _ref_forward(x_nchw, params):
    """Pure-JAX reference (inputs rounded to bf16 like the kernel path)."""
    def rq(a):
        return a.astype(jnp.bfloat16).astype(jnp.float32)

    def conv(xh, wt):
        return jax.lax.conv_general_dilated(
            xh, wt, window_strides=(1, 1), padding=((1, 1), (1, 1)),
            dimension_numbers=("NHWC", "HWIO", "NHWC"))

    def bn(y, g, b):
        mean = jnp.mean(y, axis=(0, 1, 2))
        var = jnp.var(y, axis=(0, 1, 2))
        return (y - mean) * jax.lax.rsqrt(var + EPS) * g + b

    x = jnp.transpose(x_nchw, (0, 2, 3, 1)).astype(jnp.float32)
    y1 = conv(rq(x), rq(params["w1"]))
    o1 = jnp.maximum(bn(y1, params["g1"], params["b1"]), 0.0)
    y2 = conv(rq(o1), rq(params["w2"]))
    o2 = jnp.maximum(bn(y2, params["g2"], params["b2"]) + x, 0.0)
    return jnp.transpose(o2, (0, 3, 1, 2))


if __name__ == "__main__":
    key = jax.random.PRNGKey(0)
    kx, kp = jax.random.split(key)

    N, Cin, H, W = 2, 4, 16, 16   # NCHW, as in PyTorch
    planes = 8

    x = jax.random.normal(kx, (N, Cin, H, W), jnp.float32)
    params = init_params(kp, Cin, planes)

    out = jax.jit(bottleneck_forward)(x, params)
    out = jax.block_until_ready(out)

    assert out.shape == (N, Cin, H, W)
    assert bool(jnp.all(out >= 0.0))                 # final ReLU
    assert bool(jnp.all(jnp.isfinite(out)))

    ref = _ref_forward(x, params)
    max_err = float(jnp.max(jnp.abs(out - ref)))
    assert max_err < 2e-1, f"mismatch vs reference: max_err={max_err}"

    print("KERNEL_OK")
</pallas_src>

<mosaic_0001>
module attributes {stable_mosaic.version = 11 : i64} {
  func.func @kernel(%arg0: i32, %arg1: memref<256x128xbf16, #tpu.memory_space<vmem>>, %arg2: memref<48x128xbf16, #tpu.memory_space<vmem>>, %arg3: memref<1152x128xbf16, #tpu.memory_space<vmem>>, %arg4: memref<256x1xf32, #tpu.memory_space<vmem>>, %arg5: memref<256x128xf32, #tpu.memory_space<vmem>>, %arg6: memref<8x128xf32, #tpu.memory_space<vmem>>, %arg7: memref<304x128xf32, #tpu.memory_space<vmem>>) attributes {dimension_semantics = [#tpu.dimension_semantics<parallel>], iteration_bounds = array<i64: 3>, scalar_prefetch = 0 : i64, scratch_operands = 1 : i64, tpu.core_type = #tpu.core_type<tc>, window_params = [{transform_indices = @transform_0, window_bounds = array<i64: 256, 128>}, {transform_indices = @transform_1, window_bounds = array<i64: 48, 128>}, {pipeline_mode = #tpu.pipeline_mode<synchronous>, transform_indices = @transform_2, window_bounds = array<i64: 1152, 128>}, {transform_indices = @transform_3, window_bounds = array<i64: 256, 1>}, {transform_indices = @transform_4, window_bounds = array<i64: 256, 128>}, {transform_indices = @transform_5, window_bounds = array<i64: 8, 128>}]} {
    %c0 = arith.constant 0 : index
    %c0_0 = arith.constant 0 : index
    %0 = vector.load %arg1[%c0, %c0_0] : memref<256x128xbf16, #tpu.memory_space<vmem>>, vector<256x128xbf16>
    %1 = arith.extf %0 : vector<256x128xbf16> to vector<256x128xf32>
    %c0_1 = arith.constant 0 : index
    %c0_2 = arith.constant 0 : index
    %2 = vector.load %arg7[%c0_1, %c0_2] : memref<304x128xf32, #tpu.memory_space<vmem>>, vector<256x128xf32>
    tpu.vector_store %arg7[%c0_1, %c0_2], %1 {strides = array<i32>} : memref<304x128xf32, #tpu.memory_space<vmem>>, vector<256x128xf32>,
    %c0_3 = arith.constant 0 : index
    %c0_4 = arith.constant 0 : index
    %3 = vector.load %arg2[%c0_3, %c0_4] : memref<48x128xbf16, #tpu.memory_space<vmem>>, vector<48x128xbf16>
    %4 = arith.extf %3 : vector<48x128xbf16> to vector<48x128xf32>
    %c256 = arith.constant 256 : index
    %c0_5 = arith.constant 0 : index
    %5 = vector.load %arg7[%c256, %c0_5] : memref<304x128xf32, #tpu.memory_space<vmem>>, vector<48x128xf32>
    tpu.vector_store %arg7[%c256, %c0_5], %4 {strides = array<i32>} : memref<304x128xf32, #tpu.memory_space<vmem>>, vector<48x128xf32>,
    %cst = arith.constant 0.000000e+00 : f32
    %6 = vector.broadcast %cst : f32 to vector<256x128xf32>
    %c0_6 = arith.constant 0 : index
    %c0_7 = arith.constant 0 : index
    %7 = vector.load %arg7[%c0_6, %c0_7] : memref<304x128xf32, #tpu.memory_space<vmem>>, vector<256x128xf32>
    %8 = arith.truncf %7 : vector<256x128xf32> to vector<256x128xbf16>
    %c0_8 = arith.constant 0 : index
    %c0_9 = arith.constant 0 : index
    %9 = vector.load %arg3[%c0_8, %c0_9] : memref<1152x128xbf16, #tpu.memory_space<vmem>>, vector<128x128xbf16>
    %cst_10 = arith.constant dense<0.000000e+00> : vector<256x128xf32>
    %10 = tpu.matmul %8, %9, %cst_10 {dimension_numbers = #tpu.dot_dimension_numbers<[1], [0], [0], [1], [0, 0, 1, 1], [], []>} : vector<256x128xbf16>, vector<128x128xbf16>, vector<256x128xf32> -> vector<256x128xf32>
    %11 = arith.addf %6, %10 : vector<256x128xf32>
    %c1 = arith.constant 1 : index
    %c0_11 = arith.constant 0 : index
    %12 = vector.load %arg7[%c1, %c0_11] : memref<304x128xf32, #tpu.memory_space<vmem>>, vector<256x128xf32>
    %13 = arith.truncf %12 : vector<256x128xf32> to vector<256x128xbf16>
    %c128 = arith.constant 128 : index
    %c0_12 = arith.constant 0 : index
    %14 = vector.load %arg3[%c128, %c0_12] : memref<1152x128xbf16, #tpu.memory_space<vmem>>, vector<128x128xbf16>
    %cst_13 = arith.constant dense<0.000000e+00> : vector<256x128xf32>
    %15 = tpu.matmul %13, %14, %cst_13 {dimension_numbers = #tpu.dot_dimension_numbers<[1], [0], [0], [1], [0, 0, 1, 1], [], []>} : vector<256x128xbf16>, vector<128x128xbf16>, vector<256x128xf32> -> vector<256x128xf32>
    %16 = arith.addf %11, %15 : vector<256x128xf32>
    %c2 = arith.constant 2 : index
    %c0_14 = arith.constant 0 : index
    %17 = vector.load %arg7[%c2, %c0_14] : memref<304x128xf32, #tpu.memory_space<vmem>>, vector<256x128xf32>
    %18 = arith.truncf %17 : vector<256x128xf32> to vector<256x128xbf16>
    %c256_15 = arith.constant 256 : index
    %c0_16 = arith.constant 0 : index
    %19 = vector.load %arg3[%c256_15, %c0_16] : memref<1152x128xbf16, #tpu.memory_space<vmem>>, vector<128x128xbf16>
    %cst_17 = arith.constant dense<0.000000e+00> : vector<256x128xf32>
    %20 = tpu.matmul %18, %19, %cst_17 {dimension_numbers = #tpu.dot_dimension_numbers<[1], [0], [0], [1], [0, 0, 1, 1], [], []>} : vector<256x128xbf16>, vector<128x128xbf16>, vector<256x128xf32> -> vector<256x128xf32>
    %21 = arith.addf %16, %20 : vector<256x128xf32>
    %c18 = arith.constant 18 : index
    %c0_18 = arith.constant 0 : index
    %22 = vector.load %arg7[%c18, %c0_18] : memref<304x128xf32, #tpu.memory_space<vmem>>, vector<256x128xf32>
    %23 = arith.truncf %22 : vector<256x128xf32> to vector<256x128xbf16>
    %c384 = arith.constant 384 : index
    %c0_19 = arith.constant 0 : index
    %24 = vector.load %arg3[%c384, %c0_19] : memref<1152x128xbf16, #tpu.memory_space<vmem>>, vector<128x128xbf16>
    %cst_20 = arith.constant dense<0.000000e+00> : vector<256x128xf32>
    %25 = tpu.matmul %23, %24, %cst_20 {dimension_numbers = #tpu.dot_dimension_numbers<[1], [0], [0], [1], [0, 0, 1, 1], [], []>} : vector<256x128xbf16>, vector<128x128xbf16>, vector<256x128xf32> -> vector<256x128xf32>
    %26 = arith.addf %21, %25 : vector<256x128xf32>
    %c19 = arith.constant 19 : index
    %c0_21 = arith.constant 0 : index
    %27 = vector.load %arg7[%c19, %c0_21] : memref<304x128xf32, #tpu.memory_space<vmem>>, vector<256x128xf32>
    %28 = arith.truncf %27 : vector<256x128xf32> to vector<256x128xbf16>
    %c512 = arith.constant 512 : index
    %c0_22 = arith.constant 0 : index
    %29 = vector.load %arg3[%c512, %c0_22] : memref<1152x128xbf16, #tpu.memory_space<vmem>>, vector<128x128xbf16>
    %cst_23 = arith.constant dense<0.000000e+00> : vector<256x128xf32>
    %30 = tpu.matmul %28, %29, %cst_23 {dimension_numbers = #tpu.dot_dimension_numbers<[1], [0], [0], [1], [0, 0, 1, 1], [], []>} : vector<256x128xbf16>, vector<128x128xbf16>, vector<256x128xf32> -> vector<256x128xf32>
    %31 = arith.addf %26, %30 : vector<256x128xf32>
    %c20 = arith.constant 20 : index
    %c0_24 = arith.constant 0 : index
    %32 = vector.load %arg7[%c20, %c0_24] : memref<304x128xf32, #tpu.memory_space<vmem>>, vector<256x128xf32>
    %33 = arith.truncf %32 : vector<256x128xf32> to vector<256x128xbf16>
    %c640 = arith.constant 640 : index
    %c0_25 = arith.constant 0 : index
    %34 = vector.load %arg3[%c640, %c0_25] : memref<1152x128xbf16, #tpu.memory_space<vmem>>, vector<128x128xbf16>
    %cst_26 = arith.constant dense<0.000000e+00> : vector<256x128xf32>
    %35 = tpu.matmul %33, %34, %cst_26 {dimension_numbers = #tpu.dot_dimension_numbers<[1], [0], [0], [1], [0, 0, 1, 1], [], []>} : vector<256x128xbf16>, vector<128x128xbf16>, vector<256x128xf32> -> vector<256x128xf32>
    %36 = arith.addf %31, %35 : vector<256x128xf32>
    %c36 = arith.constant 36 : index
    %c0_27 = arith.constant 0 : index
    %37 = vector.load %arg7[%c36, %c0_27] : memref<304x128xf32, #tpu.memory_space<vmem>>, vector<256x128xf32>
    %38 = arith.truncf %37 : vector<256x128xf32> to vector<256x128xbf16>
    %c768 = arith.constant 768 : index
    %c0_28 = arith.constant 0 : index
    %39 = vector.load %arg3[%c768, %c0_28] : memref<1152x128xbf16, #tpu.memory_space<vmem>>, vector<128x128xbf16>
    %cst_29 = arith.constant dense<0.000000e+00> : vector<256x128xf32>
    %40 = tpu.matmul %38, %39, %cst_29 {dimension_numbers = #tpu.dot_dimension_numbers<[1], [0], [0], [1], [0, 0, 1, 1], [], []>} : vector<256x128xbf16>, vector<128x128xbf16>, vector<256x128xf32> -> vector<256x128xf32>
    %41 = arith.addf %36, %40 : vector<256x128xf32>
    %c37 = arith.constant 37 : index
    %c0_30 = arith.constant 0 : index
    %42 = vector.load %arg7[%c37, %c0_30] : memref<304x128xf32, #tpu.memory_space<vmem>>, vector<256x128xf32>
    %43 = arith.truncf %42 : vector<256x128xf32> to vector<256x128xbf16>
    %c896 = arith.constant 896 : index
    %c0_31 = arith.constant 0 : index
    %44 = vector.load %arg3[%c896, %c0_31] : memref<1152x128xbf16, #tpu.memory_space<vmem>>, vector<128x128xbf16>
    %cst_32 = arith.constant dense<0.000000e+00> : vector<256x128xf32>
    %45 = tpu.matmul %43, %44, %cst_32 {dimension_numbers = #tpu.dot_dimension_numbers<[1], [0], [0], [1], [0, 0, 1, 1], [], []>} : vector<256x128xbf16>, vector<128x128xbf16>, vector<256x128xf32> -> vector<256x128xf32>
    %46 = arith.addf %41, %45 : vector<256x128xf32>
    %c38 = arith.constant 38 : index
    %c0_33 = arith.constant 0 : index
    %47 = vector.load %arg7[%c38, %c0_33] : memref<304x128xf32, #tpu.memory_space<vmem>>, vector<256x128xf32>
    %48 = arith.truncf %47 : vector<256x128xf32> to vector<256x128xbf16>
    %c1024 = arith.constant 1024 : index
    %c0_34 = arith.constant 0 : index
    %49 = vector.load %arg3[%c1024, %c0_34] : memref<1152x128xbf16, #tpu.memory_space<vmem>>, vector<128x128xbf16>
    %cst_35 = arith.constant dense<0.000000e+00> : vector<256x128xf32>
    %50 = tpu.matmul %48, %49, %cst_35 {dimension_numbers = #tpu.dot_dimension_numbers<[1], [0], [0], [1], [0, 0, 1, 1], [], []>} : vector<256x128xbf16>, vector<128x128xbf16>, vector<256x128xf32> -> vector<256x128xf32>
    %51 = arith.addf %46, %50 : vector<256x128xf32>
    %c0_36 = arith.constant 0 : index
    %c0_37 = arith.constant 0 : index
    %52 = vector.load %arg5[%c0_36, %c0_37] : memref<256x128xf32, #tpu.memory_space<vmem>>, vector<256x128xf32>
    tpu.vector_store %arg5[%c0_36, %c0_37], %51 {strides = array<i32>} : memref<256x128xf32, #tpu.memory_space<vmem>>, vector<256x128xf32>,
    %c0_38 = arith.constant 0 : index
    %c0_39 = arith.constant 0 : index
    %53 = vector.load %arg4[%c0_38, %c0_39] : memref<256x1xf32, #tpu.memory_space<vmem>>, vector<256x1xf32>
    %54 = vector.broadcast %53 : vector<256x1xf32> to vector<256x128xf32>
    %55 = arith.mulf %51, %54 : vector<256x128xf32>
    %cst_40 = arith.constant dense<0.000000e+00> : vector<128xf32>
    %56 = vector.multi_reduction <add>, %55, %cst_40 [0] : vector<256x128xf32> to vector<128xf32>
    %57 = vector.shape_cast %56 : vector<128xf32> to vector<1x128xf32>
    %c0_41 = arith.constant 0 : index
    %c0_42 = arith.constant 0 : index
    %58 = vector.load %arg6[%c0_41, %c0_42] : memref<8x128xf32, #tpu.memory_space<vmem>>, vector<1x128xf32>
    tpu.vector_store %arg6[%c0_41, %c0_42], %57 {strides = array<i32>} : memref<8x128xf32, #tpu.memory_space<vmem>>, vector<1x128xf32>,
    %59 = arith.mulf %55, %51 : vector<256x128xf32>
    %cst_43 = arith.constant dense<0.000000e+00> : vector<128xf32>
    %60 = vector.multi_reduction <add>, %59, %cst_43 [0] : vector<256x128xf32> to vector<128xf32>
    %61 = vector.shape_cast %60 : vector<128xf32> to vector<1x128xf32>
    %c1_44 = arith.constant 1 : index
    %c0_45 = arith.constant 0 : index
    %62 = vector.load %arg6[%c1_44, %c0_45] : memref<8x128xf32, #tpu.memory_space<vmem>>, vector<1x128xf32>
    tpu.vector_store %arg6[%c1_44, %c0_45], %61 {strides = array<i32>} : memref<8x128xf32, #tpu.memory_space<vmem>>, vector<1x128xf32>,
    %cst_46 = arith.constant 0.000000e+00 : f32
    %63 = vector.broadcast %cst_46 : f32 to vector<6x128xf32>
    %c2_47 = arith.constant 2 : index
    %c0_48 = arith.constant 0 : index
    %64 = vector.load %arg6[%c2_47, %c0_48] : memref<8x128xf32, #tpu.memory_space<vmem>>, vector<6x128xf32>
    tpu.vector_store %arg6[%c2_47, %c0_48], %63 {strides = array<i32>} : memref<8x128xf32, #tpu.memory_space<vmem>>, vector<6x128xf32>,
    return
  }
  func.func @transform_0(%arg0: i32) -> (i32, i32) {
    %c0_i32 = arith.constant 0 : i32
    %c0_i32_0 = arith.constant 0 : i32
    return %arg0, %c0_i32 : i32, i32
  }
  func.func @transform_1(%arg0: i32) -> (i32, i32) {
    %c0_i32 = arith.constant 0 : i32
    %c0_i32_0 = arith.constant 0 : i32
    return %arg0, %c0_i32 : i32, i32
  }
  func.func @transform_2(%arg0: i32) -> (i32, i32) {
    %c0_i32 = arith.constant 0 : i32
    %c0_i32_0 = arith.constant 0 : i32
    %c0_i32_1 = arith.constant 0 : i32
    return %c0_i32, %c0_i32_0 : i32, i32
  }
  func.func @transform_3(%arg0: i32) -> (i32, i32) {
    %c0_i32 = arith.constant 0 : i32
    %c0_i32_0 = arith.constant 0 : i32
    return %arg0, %c0_i32 : i32, i32
  }
  func.func @transform_4(%arg0: i32) -> (i32, i32) {
    %c0_i32 = arith.constant 0 : i32
    %c0_i32_0 = arith.constant 0 : i32
    return %arg0, %c0_i32 : i32, i32
  }
  func.func @transform_5(%arg0: i32) -> (i32, i32) {
    %c0_i32 = arith.constant 0 : i32
    %c0_i32_0 = arith.constant 0 : i32
    return %arg0, %c0_i32 : i32, i32
  }
}

module attributes {stable_mosaic.version = 11 : i64} {
  func.func @_bn_apply_kernel(%arg0: i32, %arg1: memref<256x128xf32, #tpu.memory_space<vmem>>, %arg2: memref<1x128xf32, #tpu.memory_space<vmem>>, %arg3: memref<1x128xf32, #tpu.memory_space<vmem>>, %arg4: memref<256x1xf32, #tpu.memory_space<vmem>>, %arg5: memref<256x128xbf16, #tpu.memory_space<vmem>>) attributes {dimension_semantics = [#tpu.dimension_semantics<parallel>], iteration_bounds = array<i64: 3>, scalar_prefetch = 0 : i64, scratch_operands = 0 : i64, tpu.core_type = #tpu.core_type<tc>, window_params = [{transform_indices = @transform_0, window_bounds = array<i64: 256, 128>}, {pipeline_mode = #tpu.pipeline_mode<synchronous>, transform_indices = @transform_1, window_bounds = array<i64: 1, 128>}, {pipeline_mode = #tpu.pipeline_mode<synchronous>, transform_indices = @transform_2, window_bounds = array<i64: 1, 128>}, {transform_indices = @transform_3, window_bounds = array<i64: 256, 1>}, {transform_indices = @transform_4, window_bounds = array<i64: 256, 128>}]} {
    %c0 = arith.constant 0 : index
    %c0_0 = arith.constant 0 : index
    %0 = vector.load %arg1[%c0, %c0_0] : memref<256x128xf32, #tpu.memory_space<vmem>>, vector<256x128xf32>
    %c0_1 = arith.constant 0 : index
    %c0_2 = arith.constant 0 : index
    %1 = vector.load %arg2[%c0_1, %c0_2] : memref<1x128xf32, #tpu.memory_space<vmem>>, vector<1x128xf32>
    %2 = vector.broadcast %1 : vector<1x128xf32> to vector<256x128xf32>
    %3 = arith.mulf %0, %2 : vector<256x128xf32>
    %c0_3 = arith.constant 0 : index
    %c0_4 = arith.constant 0 : index
    %4 = vector.load %arg3[%c0_3, %c0_4] : memref<1x128xf32, #tpu.memory_space<vmem>>, vector<1x128xf32>
    %5 = vector.broadcast %4 : vector<1x128xf32> to vector<256x128xf32>
    %6 = arith.addf %3, %5 : vector<256x128xf32>
    %cst = arith.constant 0.000000e+00 : f32
    %7 = vector.broadcast %cst : f32 to vector<256x128xf32>
    %8 = arith.maximumf %6, %7 : vector<256x128xf32>
    %c0_5 = arith.constant 0 : index
    %c0_6 = arith.constant 0 : index
    %9 = vector.load %arg4[%c0_5, %c0_6] : memref<256x1xf32, #tpu.memory_space<vmem>>, vector<256x1xf32>
    %10 = vector.broadcast %9 : vector<256x1xf32> to vector<256x128xf32>
    %11 = arith.mulf %8, %10 : vector<256x128xf32>
    %12 = arith.truncf %11 : vector<256x128xf32> to vector<256x128xbf16>
    %c0_7 = arith.constant 0 : index
    %c0_8 = arith.constant 0 : index
    %13 = vector.load %arg5[%c0_7, %c0_8] : memref<256x128xbf16, #tpu.memory_space<vmem>>, vector<256x128xbf16>
    tpu.vector_store %arg5[%c0_7, %c0_8], %12 {strides = array<i32>} : memref<256x128xbf16, #tpu.memory_space<vmem>>, vector<256x128xbf16>,
    return
  }
  func.func @transform_0(%arg0: i32) -> (i32, i32) {
    %c0_i32 = arith.constant 0 : i32
    %c0_i32_0 = arith.constant 0 : i32
    return %arg0, %c0_i32 : i32, i32
  }
  func.func @transform_1(%arg0: i32) -> (i32, i32) {
    %c0_i32 = arith.constant 0 : i32
    %c0_i32_0 = arith.constant 0 : i32
    %c0_i32_1 = arith.constant 0 : i32
    return %c0_i32, %c0_i32_0 : i32, i32
  }
  func.func @transform_2(%arg0: i32) -> (i32, i32) {
    %c0_i32 = arith.constant 0 : i32
    %c0_i32_0 = arith.constant 0 : i32
    %c0_i32_1 = arith.constant 0 : i32
    return %c0_i32, %c0_i32_0 : i32, i32
  }
  func.func @transform_3(%arg0: i32) -> (i32, i32) {
    %c0_i32 = arith.constant 0 : i32
    %c0_i32_0 = arith.constant 0 : i32
    return %arg0, %c0_i32 : i32, i32
  }
  func.func @transform_4(%arg0: i32) -> (i32, i32) {
    %c0_i32 = arith.constant 0 : i32
    %c0_i32_0 = arith.constant 0 : i32
    return %arg0, %c0_i32 : i32, i32
  }
}

module attributes {stable_mosaic.version = 11 : i64} {
  func.func @_bn_apply_res_kernel(%arg0: i32, %arg1: memref<256x128xf32, #tpu.memory_space<vmem>>, %arg2: memref<1x128xf32, #tpu.memory_space<vmem>>, %arg3: memref<1x128xf32, #tpu.memory_space<vmem>>, %arg4: memref<256x1xf32, #tpu.memory_space<vmem>>, %arg5: memref<256x128xf32, #tpu.memory_space<vmem>>, %arg6: memref<256x128xf32, #tpu.memory_space<vmem>>) attributes {dimension_semantics = [#tpu.dimension_semantics<parallel>], iteration_bounds = array<i64: 3>, scalar_prefetch = 0 : i64, scratch_operands = 0 : i64, tpu.core_type = #tpu.core_type<tc>, window_params = [{transform_indices = @transform_0, window_bounds = array<i64: 256, 128>}, {pipeline_mode = #tpu.pipeline_mode<synchronous>, transform_indices = @transform_1, window_bounds = array<i64: 1, 128>}, {pipeline_mode = #tpu.pipeline_mode<synchronous>, transform_indices = @transform_2, window_bounds = array<i64: 1, 128>}, {transform_indices = @transform_3, window_bounds = array<i64: 256, 1>}, {transform_indices = @transform_4, window_bounds = array<i64: 256, 128>}, {transform_indices = @transform_5, window_bounds = array<i64: 256, 128>}]} {
    %c0 = arith.constant 0 : index
    %c0_0 = arith.constant 0 : index
    %0 = vector.load %arg1[%c0, %c0_0] : memref<256x128xf32, #tpu.memory_space<vmem>>, vector<256x128xf32>
    %c0_1 = arith.constant 0 : index
    %c0_2 = arith.constant 0 : index
    %1 = vector.load %arg2[%c0_1, %c0_2] : memref<1x128xf32, #tpu.memory_space<vmem>>, vector<1x128xf32>
    %2 = vector.broadcast %1 : vector<1x128xf32> to vector<256x128xf32>
    %3 = arith.mulf %0, %2 : vector<256x128xf32>
    %c0_3 = arith.constant 0 : index
    %c0_4 = arith.constant 0 : index
    %4 = vector.load %arg3[%c0_3, %c0_4] : memref<1x128xf32, #tpu.memory_space<vmem>>, vector<1x128xf32>
    %5 = vector.broadcast %4 : vector<1x128xf32> to vector<256x128xf32>
    %6 = arith.addf %3, %5 : vector<256x128xf32>
    %c0_5 = arith.constant 0 : index
    %c0_6 = arith.constant 0 : index
    %7 = vector.load %arg5[%c0_5, %c0_6] : memref<256x128xf32, #tpu.memory_space<vmem>>, vector<256x128xf32>
    %8 = arith.addf %6, %7 : vector<256x128xf32>
    %cst = arith.constant 0.000000e+00 : f32
    %9 = vector.broadcast %cst : f32 to vector<256x128xf32>
    %10 = arith.maximumf %8, %9 : vector<256x128xf32>
    %c0_7 = arith.constant 0 : index
    %c0_8 = arith.constant 0 : index
    %11 = vector.load %arg4[%c0_7, %c0_8] : memref<256x1xf32, #tpu.memory_space<vmem>>, vector<256x1xf32>
    %12 = vector.broadcast %11 : vector<256x1xf32> to vector<256x128xf32>
    %13 = arith.mulf %10, %12 : vector<256x128xf32>
    %c0_9 = arith.constant 0 : index
    %c0_10 = arith.constant 0 : index
    %14 = vector.load %arg6[%c0_9, %c0_10] : memref<256x128xf32, #tpu.memory_space<vmem>>, vector<256x128xf32>
    tpu.vector_store %arg6[%c0_9, %c0_10], %13 {strides = array<i32>} : memref<256x128xf32, #tpu.memory_space<vmem>>, vector<256x128xf32>,
    return
  }
  func.func @transform_0(%arg0: i32) -> (i32, i32) {
    %c0_i32 = arith.constant 0 : i32
    %c0_i32_0 = arith.constant 0 : i32
    return %arg0, %c0_i32 : i32, i32
  }
  func.func @transform_1(%arg0: i32) -> (i32, i32) {
    %c0_i32 = arith.constant 0 : i32
    %c0_i32_0 = arith.constant 0 : i32
    %c0_i32_1 = arith.constant 0 : i32
    return %c0_i32, %c0_i32_0 : i32, i32
  }
  func.func @transform_2(%arg0: i32) -> (i32, i32) {
    %c0_i32 = arith.constant 0 : i32
    %c0_i32_0 = arith.constant 0 : i32
    %c0_i32_1 = arith.constant 0 : i32
    return %c0_i32, %c0_i32_0 : i32, i32
  }
  func.func @transform_3(%arg0: i32) -> (i32, i32) {
    %c0_i32 = arith.constant 0 : i32
    %c0_i32_0 = arith.constant 0 : i32
    return %arg0, %c0_i32 : i32, i32
  }
  func.func @transform_4(%arg0: i32) -> (i32, i32) {
    %c0_i32 = arith.constant 0 : i32
    %c0_i32_0 = arith.constant 0 : i32
    return %arg0, %c0_i32 : i32, i32
  }
  func.func @transform_5(%arg0: i32) -> (i32, i32) {
    %c0_i32 = arith.constant 0 : i32
    %c0_i32_0 = arith.constant 0 : i32
    return %arg0, %c0_i32 : i32, i32
  }
}

</mosaic_0001>

<llo_original>
// kernel: bottleneck_forward.5
$region0: #{bottleneck_forward.5}
  #allocation0 [shape = 'u32[]', space=smem, size = 0x4, offset = 0x4, fixed_abs, tag = 'smem constant byte address 0x4 - core index']
  #allocation1 [shape = 'u32[144,128]{1,0:T(1,128)}', space=vmem, size = 0x12000, scoped, tag = 'internal scratch']
  %s0 = inlined_call_operand.vmem [shape: f32[768,128], index: 0, kind: input, shape index: {}]
  %s1 = inlined_call_operand.vmem [shape: f32[1,128], index: 1, kind: input, shape index: {}]
  %s2 = inlined_call_operand.vmem [shape: f32[1,128], index: 2, kind: input, shape index: {}]
  %s3 = inlined_call_operand.vmem [shape: f32[768,1], index: 3, kind: input, shape index: {}]
  %s4 = inlined_call_operand.vmem [shape: bf16[768,128], index: 4, kind: output, shape index: {}]
  %s5 = sld [smem:[#allocation0]]
  $region49: #{bottleneck_forward.5} parent=0
    _
  %s7 = ssub.s32 1, %s5
  %s8 = scalar_select 0, %s7, %s5
  loop: start=0, step=1, limit=5
  $region2: #{bottleneck_forward.5} parent=0 // loop_pre_header
    _
  $region3: #{bottleneck_forward.5} parent=0 // loop_header
    %s10 = sphi 0, %s14
    %p11 = scmp.ge.s32.totalorder %s10, 5
    %s20 = sphi 0, %s22
    %s23 = sphi 0, %s20
    %s24 = sphi 0, %s23
    %s40 = sphi 0, %s24
    %s44 = sphi 0, %s44
    %s46 = sphi 0, %s44
    %s47 = sphi 0, %s46
    %s61 = sphi 0, %s47
    %s65 = sphi 0, %s65
    %s67 = sphi 0, %s65
    %s68 = sphi 0, %s67
    %s82 = sphi 0, %s68
    %s88 = sphi 0, %s90
    %s91 = sphi 0, %s88
    %s92 = sphi 0, %s91
    %s108 = sphi 0, %s92
    %s114 = sphi 0, %s116
    %s117 = sphi 0, %s114
    %s118 = sphi 0, %s117
    %s134 = sphi 0, %s118
  $region4: #{bottleneck_forward.5} parent=0 // loop_header_branch
    %13 = sbr.rel (%p11) target = $region8
  $region5: #{bottleneck_forward.5} parent=0 // loop_body
    %s15 = ssub.s32 %s10, 1
    %s16 = ssub.s32 %s10, 2
    %s17 = sadd.s32 %s10, 1
    %s18 = ssub.s32 %s10, %s17
    %p19 = scmp.eq.s32.totalorder %s18, 0
    %s21 = sadd.s32 %s20, 1
    %s22 = scalar_select %p19, %s20, %s21
    %p25 = pneg %p19
    %p26 = scmp.eq.s32.totalorder %s10, 2
    %p27 = por %p25, %p26
    %p28 = scmp.ne.s32.totalorder %s20, %s23
    %p29 = scmp.eq.s32.totalorder %s10, 0
    %p30 = por %p28, %p29
    %p31 = scmp.ne.s32.totalorder %s20, %s23
    %p32 = scmp.eq.s32.totalorder %s15, 2
    %p33 = por %p31, %p32
    %p34 = scmp.ne.s32.totalorder %s23, %s24
    %p35 = scmp.eq.s32.totalorder %s15, 0
    %p36 = por %p34, %p35
    %p37 = scmp.ne.s32.totalorder %s23, %s24
    %p38 = scmp.eq.s32.totalorder %s16, 2
    %p39 = por %p37, %p38
    %p41 = scmp.ne.s32.totalorder %s24, %s40
    %p42 = scmp.eq.s32.totalorder %s16, 0
    %p43 = por %p41, %p42
    %s45 = sadd.s32 %s44, 1
    %p48 = scmp.eq.s32.totalorder %s10, 2
    %p49 = scmp.ne.s32.totalorder %s44, %s46
    %p50 = scmp.eq.s32.totalorder %s10, 0
    %p51 = por %p49, %p50
    %p52 = scmp.ne.s32.totalorder %s44, %s46
    %p53 = scmp.eq.s32.totalorder %s15, 2
    %p54 = por %p52, %p53
    %p55 = scmp.ne.s32.totalorder %s46, %s47
    %p56 = scmp.eq.s32.totalorder %s15, 0
    %p57 = por %p55, %p56
    %p58 = scmp.ne.s32.totalorder %s46, %s47
    %p59 = scmp.eq.s32.totalorder %s16, 2
    %p60 = por %p58, %p59
    %p62 = scmp.ne.s32.totalorder %s47, %s61
    %p63 = scmp.eq.s32.totalorder %s16, 0
    %p64 = por %p62, %p63
    %s66 = sadd.s32 %s65, 1
    %p69 = scmp.eq.s32.totalorder %s10, 2
    %p70 = scmp.ne.s32.totalorder %s65, %s67
    %p71 = scmp.eq.s32.totalorder %s10, 0
    %p72 = por %p70, %p71
    %p73 = scmp.ne.s32.totalorder %s65, %s67
    %p74 = scmp.eq.s32.totalorder %s15, 2
    %p75 = por %p73, %p74
    %p76 = scmp.ne.s32.totalorder %s67, %s68
    %p77 = scmp.eq.s32.totalorder %s15, 0
    %p78 = por %p76, %p77
    %p79 = scmp.ne.s32.totalorder %s67, %s68
    %p80 = scmp.eq.s32.totalorder %s16, 2
    %p81 = por %p79, %p80
    %p83 = scmp.ne.s32.totalorder %s68, %s82
    %p84 = scmp.eq.s32.totalorder %s16, 0
    %p85 = por %p83, %p84
    %s86 = ssub.s32 %s10, %s17
    %p87 = scmp.eq.s32.totalorder %s86, 0
    %s89 = sadd.s32 %s88, 1
    %s90 = scalar_select %p87, %s88, %s89
    %p93 = pneg %p87
    %p94 = scmp.eq.s32.totalorder %s10, 2
    %p95 = por %p93, %p94
    %p96 = scmp.ne.s32.totalorder %s88, %s91
    %p97 = scmp.eq.s32.totalorder %s10, 0
    %p98 = por %p96, %p97
    %p99 = scmp.ne.s32.totalorder %s88, %s91
    %p100 = scmp.eq.s32.totalorder %s15, 2
    %p101 = por %p99, %p100
    %p102 = scmp.ne.s32.totalorder %s91, %s92
    %p103 = scmp.eq.s32.totalorder %s15, 0
    %p104 = por %p102, %p103
    %p105 = scmp.ne.s32.totalorder %s91, %s92
    %p106 = scmp.eq.s32.totalorder %s16, 2
    %p107 = por %p105, %p106
    %p109 = scmp.ne.s32.totalorder %s92, %s108
    %p110 = scmp.eq.s32.totalorder %s16, 0
    %p111 = por %p109, %p110
    %s112 = ssub.s32 %s10, %s17
    %p113 = scmp.eq.s32.totalorder %s112, 0
    %s115 = sadd.s32 %s114, 1
    %s116 = scalar_select %p113, %s114, %s115
    %p119 = pneg %p113
    %p120 = scmp.eq.s32.totalorder %s10, 2
    %p121 = por %p119, %p120
    %p122 = scmp.ne.s32.totalorder %s114, %s117
    %p123 = scmp.eq.s32.totalorder %s10, 0
    %p124 = por %p122, %p123
    %p125 = scmp.ne.s32.totalorder %s114, %s117
    %p126 = scmp.eq.s32.totalorder %s15, 2
    %p127 = por %p125, %p126
    %p128 = scmp.ne.s32.totalorder %s117, %s118
    %p129 = scmp.eq.s32.totalorder %s15, 0
    %p130 = por %p128, %p129
    %p131 = scmp.ne.s32.totalorder %s117, %s118
    %p132 = scmp.eq.s32.totalorder %s16, 2
    %p133 = por %p131, %p132
    %p135 = scmp.ne.s32.totalorder %s118, %s134
    %p136 = scmp.eq.s32.totalorder %s16, 0
    %p137 = por %p135, %p136
    %p138 = scmp.le.s32.totalorder 1, %s10
    %p139 = scmp.lt.s32.totalorder %s10, 4
    %p140 = pnand %p138, %p139
    %p141 = pneg %p140
    // Predicated region
    $region9: #{bottleneck_forward.5} parent=5 // pred_check
      _
    $region10: #{bottleneck_forward.5} parent=5 // pred_check_branch
      %143 = sbr.rel (%p140) target = $region12
    $region11: #{bottleneck_forward.5} parent=5 // pred_region
      %s144 = ssub.s32 %s10, 1
      // Predicated region
      $region13: #{bottleneck_forward.5} parent=11 // pred_check
        %p145 = pneg %p57
      $region14: #{bottleneck_forward.5} parent=11 // pred_check_branch
        %147 = sbr.rel (%p145) target = $region16
      $region15: #{bottleneck_forward.5} parent=11 // pred_region
        _
      $region16: #{bottleneck_forward.5} parent=11 // pred_fallthru
        _
      // Predicated region
      $region17: #{bottleneck_forward.5} parent=11 // pred_check
        %p148 = pneg %p78
      $region18: #{bottleneck_forward.5} parent=11 // pred_check_branch
        %150 = sbr.rel (%p148) target = $region20
      $region19: #{bottleneck_forward.5} parent=11 // pred_region
        _
      $region20: #{bottleneck_forward.5} parent=11 // pred_fallthru
        _
    $region12: #{bottleneck_forward.5} parent=5 // pred_fallthru
      _
    %p151 = scmp.lt.s32.totalorder %s10, 3
    // Predicated region
    $region21: #{bottleneck_forward.5} parent=5 // pred_check
      %p152 = pneg %p151
    $region22: #{bottleneck_forward.5} parent=5 // pred_check_branch
      %154 = sbr.rel (%p152) target = $region24
    $region23: #{bottleneck_forward.5} parent=5 // pred_region
      // Predicated region
      $region25: #{bottleneck_forward.5} parent=23 // pred_check
        %p155 = pneg %p30
      $region26: #{bottleneck_forward.5} parent=23 // pred_check_branch
        %157 = sbr.rel (%p155) target = $region28
      $region27: #{bottleneck_forward.5} parent=23 // pred_region
        %s158 = smul.u32 32, %s10
        %p159 = scmp.lt.s32.totalorder %s158, 95
        %s160 = scalar_select %p159, %s158, 95
        %s161 = smul.addr %s160, 8
        %s162 = scalar_lea.vmem %s0, %s161
        %s163 = smul.u32 32, %s10
      $region28: #{bottleneck_forward.5} parent=23 // pred_fallthru
        _
      // Predicated region
      $region29: #{bottleneck_forward.5} parent=23 // pred_check
        %p164 = pneg %p98
      $region30: #{bottleneck_forward.5} parent=23 // pred_check_branch
        %166 = sbr.rel (%p164) target = $region32
      $region31: #{bottleneck_forward.5} parent=23 // pred_region
        %s167 = smul.u32 32, %s10
        %p168 = scmp.lt.s32.totalorder %s167, 95
        %s169 = scalar_select %p168, %s167, 95
        %s170 = smul.addr %s169, 8
        %s171 = scalar_lea.vmem %s3, %s170
        %s172 = smul.u32 32, %s10
      $region32: #{bottleneck_forward.5} parent=23 // pred_fallthru
        _
    $region24: #{bottleneck_forward.5} parent=5 // pred_fallthru
      _
    %p173 = scmp.le.s32.totalorder 1, %s10
    %p174 = scmp.lt.s32.totalorder %s10, 4
    %p175 = pnand %p173, %p174
    %p176 = pneg %p175
    // Predicated region
    $region33: #{bottleneck_forward.5} parent=5 // pred_check
      _
    $region34: #{bottleneck_forward.5} parent=5 // pred_check_branch
      %178 = sbr.rel (%p175) target = $region36
    $region35: #{bottleneck_forward.5} parent=5 // pred_region
      %s179 = ssub.s32 %s10, 1
      %s180 = smul.u32 32, %s15
      %p181 = scmp.lt.s32.totalorder %s180, 95
      %s182 = scalar_select %p181, %s180, 95
      %s183 = smul.addr %s182, 8
      %s184 = scalar_lea.vmem %s0, %s183
      %p185 = pneg %p36
      %p186 = pneg %p33
      %p187 = pneg %p57
      %p188 = pneg %p54
      %p189 = pneg %p78
      %p190 = pneg %p75
      %s191 = smul.u32 32, %s15
      %p192 = scmp.lt.s32.totalorder %s191, 95
      %s193 = scalar_select %p192, %s191, 95
      %s194 = smul.addr %s193, 8
      %s195 = scalar_lea.vmem %s3, %s194
      %p196 = pneg %p104
      %p197 = pneg %p101
      %p198 = pneg %p130
      %p199 = pneg %p127
      %s200 = smul.u32 32, %s15
      %p201 = scmp.lt.s32.totalorder %s200, 95
      %s202 = scalar_select %p201, %s200, 95
      %s203 = smul.addr %s202, 4
      %s204 = scalar_lea.vmem %s4, %s203
      %s205 = smul.u32 32, %s15
      %p206 = scmp.lt.s32.totalorder %s205, 95
      %s207 = scalar_select %p206, %s205, 95
      %s208 = smul.addr %s207, 8
      %s209 = scalar_lea.vmem %s0, %s208
      %s210 = smul.u32 32, %s15
      %s211 = smul.u32 32, %s15
      %p212 = scmp.lt.s32.totalorder %s211, 95
      %s213 = scalar_select %p212, %s211, 95
      %s214 = smul.addr %s213, 8
      %s215 = scalar_lea.vmem %s3, %s214
      %s216 = smul.u32 32, %s15
      %s217 = smul.u32 32, %s15
      %p218 = scmp.lt.s32.totalorder %s217, 95
      %s219 = scalar_select %p218, %s217, 95
      %s220 = smul.addr %s219, 4
      %s221 = scalar_lea.vmem %s4, %s220
      %s222 = smul.u32 32, %s15
      %v223 = vld [vmem:[%s209] sm:$0xff]
      %v224 = vld [vmem:[%s209 + $0x8] sm:$0xff]
      %v225 = vld [vmem:[%s209 + $0x10] sm:$0xff]
      %v226 = vld [vmem:[%s209 + $0x18] sm:$0xff]
      %v227 = vld [vmem:[%s209 + $0x20] sm:$0xff]
      %v228 = vld [vmem:[%s209 + $0x28] sm:$0xff]
      %v229 = vld [vmem:[%s209 + $0x30] sm:$0xff]
      %v230 = vld [vmem:[%s209 + $0x38] sm:$0xff]
      %v231 = vld [vmem:[%s209 + $0x40] sm:$0xff]
      %v232 = vld [vmem:[%s209 + $0x48] sm:$0xff]
      %v233 = vld [vmem:[%s209 + $0x50] sm:$0xff]
      %v234 = vld [vmem:[%s209 + $0x58] sm:$0xff]
      %v235 = vld [vmem:[%s209 + $0x60] sm:$0xff]
      %v236 = vld [vmem:[%s209 + $0x68] sm:$0xff]
      %v237 = vld [vmem:[%s209 + $0x70] sm:$0xff]
      %v238 = vld [vmem:[%s209 + $0x78] sm:$0xff]
      %v239 = vld [vmem:[%s209 + $0x80] sm:$0xff]
      %v240 = vld [vmem:[%s209 + $0x88] sm:$0xff]
      %v241 = vld [vmem:[%s209 + $0x90] sm:$0xff]
      %v242 = vld [vmem:[%s209 + $0x98] sm:$0xff]
      %v243 = vld [vmem:[%s209 + $0xa0] sm:$0xff]
      %v244 = vld [vmem:[%s209 + $0xa8] sm:$0xff]
      %v245 = vld [vmem:[%s209 + $0xb0] sm:$0xff]
      %v246 = vld [vmem:[%s209 + $0xb8] sm:$0xff]
      %v247 = vld [vmem:[%s209 + $0xc0] sm:$0xff]
      %v248 = vld [vmem:[%s209 + $0xc8] sm:$0xff]
      %v249 = vld [vmem:[%s209 + $0xd0] sm:$0xff]
      %v250 = vld [vmem:[%s209 + $0xd8] sm:$0xff]
      %v251 = vld [vmem:[%s209 + $0xe0] sm:$0xff]
      %v252 = vld [vmem:[%s209 + $0xe8] sm:$0xff]
      %v253 = vld [vmem:[%s209 + $0xf0] sm:$0xff]
      %v254 = vld [vmem:[%s209 + $0xf8] sm:$0xff]
      %v255 = vld [vmem:[%s1] sm:$0x1]
      %v257 = vlaneseq
      %v258 = vshrl.u32 %v257, 7
      %v259 = vsub.s32 0, %v258
      %v260 = vrot.slane %v255, %v259
      %v262 = vmul.f32 %v223, %v260
      %v263 = vmul.f32 %v224, %v260
      %v264 = vmul.f32 %v225, %v260
      %v265 = vmul.f32 %v226, %v260
      %v266 = vmul.f32 %v227, %v260
      %v267 = vmul.f32 %v228, %v260
      %v268 = vmul.f32 %v229, %v260
      %v269 = vmul.f32 %v230, %v260
      %v270 = vmul.f32 %v231, %v260
      %v271 = vmul.f32 %v232, %v260
      %v272 = vmul.f32 %v233, %v260
      %v273 = vmul.f32 %v234, %v260
      %v274 = vmul.f32 %v235, %v260
      %v275 = vmul.f32 %v236, %v260
      %v276 = vmul.f32 %v237, %v260
      %v277 = vmul.f32 %v238, %v260
      %v278 = vmul.f32 %v239, %v260
      %v279 = vmul.f32 %v240, %v260
      %v280 = vmul.f32 %v241, %v260
      %v281 = vmul.f32 %v242, %v260
      %v282 = vmul.f32 %v243, %v260
      %v283 = vmul.f32 %v244, %v260
      %v284 = vmul.f32 %v245, %v260
      %v285 = vmul.f32 %v246, %v260
      %v286 = vmul.f32 %v247, %v260
      %v287 = vmul.f32 %v248, %v260
      %v288 = vmul.f32 %v249, %v260
      %v289 = vmul.f32 %v250, %v260
      %v290 = vmul.f32 %v251, %v260
      %v291 = vmul.f32 %v252, %v260
      %v292 = vmul.f32 %v253, %v260
      %v293 = vmul.f32 %v254, %v260
      %v294 = vld [vmem:[%s2] sm:$0x1]
      %v296 = vlaneseq
      %v297 = vshrl.u32 %v296, 7
      %v298 = vsub.s32 0, %v297
      %v299 = vrot.slane %v294, %v298
      %v301 = vadd.f32 %v262, %v299
      %v302 = vadd.f32 %v263, %v299
      %v303 = vadd.f32 %v264, %v299
      %v304 = vadd.f32 %v265, %v299
      %v305 = vadd.f32 %v266, %v299
      %v306 = vadd.f32 %v267, %v299
      %v307 = vadd.f32 %v268, %v299
      %v308 = vadd.f32 %v269, %v299
      %v309 = vadd.f32 %v270, %v299
      %v310 = vadd.f32 %v271, %v299
      %v311 = vadd.f32 %v272, %v299
      %v312 = vadd.f32 %v273, %v299
      %v313 = vadd.f32 %v274, %v299
      %v314 = vadd.f32 %v275, %v299
      %v315 = vadd.f32 %v276, %v299
      %v316 = vadd.f32 %v277, %v299
      %v317 = vadd.f32 %v278, %v299
      %v318 = vadd.f32 %v279, %v299
      %v319 = vadd.f32 %v280, %v299
      %v320 = vadd.f32 %v281, %v299
      %v321 = vadd.f32 %v282, %v299
      %v322 = vadd.f32 %v283, %v299
      %v323 = vadd.f32 %v284, %v299
      %v324 = vadd.f32 %v285, %v299
      %v325 = vadd.f32 %v286, %v299
      %v326 = vadd.f32 %v287, %v299
      %v327 = vadd.f32 %v288, %v299
      %v328 = vadd.f32 %v289, %v299
      %v329 = vadd.f32 %v290, %v299
      %v330 = vadd.f32 %v291, %v299
      %v331 = vadd.f32 %v292, %v299
      %v332 = vadd.f32 %v293, %v299
      %v333 = vmax.f32 %v301, 0.0
      %v334 = vmax.f32 %v302, 0.0
      %v335 = vmax.f32 %v303, 0.0
      %v336 = vmax.f32 %v304, 0.0
      %v337 = vmax.f32 %v305, 0.0
      %v338 = vmax.f32 %v306, 0.0
      %v339 = vmax.f32 %v307, 0.0
      %v340 = vmax.f32 %v308, 0.0
      %v341 = vmax.f32 %v309, 0.0
      %v342 = vmax.f32 %v310, 0.0
      %v343 = vmax.f32 %v311, 0.0
      %v344 = vmax.f32 %v312, 0.0
      %v345 = vmax.f32 %v313, 0.0
      %v346 = vmax.f32 %v314, 0.0
      %v347 = vmax.f32 %v315, 0.0
      %v348 = vmax.f32 %v316, 0.0
      %v349 = vmax.f32 %v317, 0.0
      %v350 = vmax.f32 %v318, 0.0
      %v351 = vmax.f32 %v319, 0.0
      %v352 = vmax.f32 %v320, 0.0
      %v353 = vmax.f32 %v321, 0.0
      %v354 = vmax.f32 %v322, 0.0
      %v355 = vmax.f32 %v323, 0.0
      %v356 = vmax.f32 %v324, 0.0
      %v357 = vmax.f32 %v325, 0.0
      %v358 = vmax.f32 %v326, 0.0
      %v359 = vmax.f32 %v327, 0.0
      %v360 = vmax.f32 %v328, 0.0
      %v361 = vmax.f32 %v329, 0.0
      %v362 = vmax.f32 %v330, 0.0
      %v363 = vmax.f32 %v331, 0.0
      %v364 = vmax.f32 %v332, 0.0
      %v365 = vld [vmem:[%s215] sm:$0xff]
      %v366 = vld [vmem:[%s215 + $0x8] sm:$0xff]
      %v367 = vld [vmem:[%s215 + $0x10] sm:$0xff]
      %v368 = vld [vmem:[%s215 + $0x18] sm:$0xff]
      %v369 = vld [vmem:[%s215 + $0x20] sm:$0xff]
      %v370 = vld [vmem:[%s215 + $0x28] sm:$0xff]
      %v371 = vld [vmem:[%s215 + $0x30] sm:$0xff]
      %v372 = vld [vmem:[%s215 + $0x38] sm:$0xff]
      %v373 = vld [vmem:[%s215 + $0x40] sm:$0xff]
      %v374 = vld [vmem:[%s215 + $0x48] sm:$0xff]
      %v375 = vld [vmem:[%s215 + $0x50] sm:$0xff]
      %v376 = vld [vmem:[%s215 + $0x58] sm:$0xff]
      %v377 = vld [vmem:[%s215 + $0x60] sm:$0xff]
      %v378 = vld [vmem:[%s215 + $0x68] sm:$0xff]
      %v379 = vld [vmem:[%s215 + $0x70] sm:$0xff]
      %v380 = vld [vmem:[%s215 + $0x78] sm:$0xff]
      %v381 = vld [vmem:[%s215 + $0x80] sm:$0xff]
      %v382 = vld [vmem:[%s215 + $0x88] sm:$0xff]
      %v383 = vld [vmem:[%s215 + $0x90] sm:$0xff]
      %v384 = vld [vmem:[%s215 + $0x98] sm:$0xff]
      %v385 = vld [vmem:[%s215 + $0xa0] sm:$0xff]
      %v386 = vld [vmem:[%s215 + $0xa8] sm:$0xff]
      %v387 = vld [vmem:[%s215 + $0xb0] sm:$0xff]
      %v388 = vld [vmem:[%s215 + $0xb8] sm:$0xff]
      %v389 = vld [vmem:[%s215 + $0xc0] sm:$0xff]
      %v390 = vld [vmem:[%s215 + $0xc8] sm:$0xff]
      %v391 = vld [vmem:[%s215 + $0xd0] sm:$0xff]
      %v392 = vld [vmem:[%s215 + $0xd8] sm:$0xff]
      %v393 = vld [vmem:[%s215 + $0xe0] sm:$0xff]
      %v394 = vld [vmem:[%s215 + $0xe8] sm:$0xff]
      %v395 = vld [vmem:[%s215 + $0xf0] sm:$0xff]
      %v396 = vld [vmem:[%s215 + $0xf8] sm:$0xff]
      %398 = vset.pattern.permute.xlu0 0
      %399 = vperm.xlu0 %398, %v365
      %v400 = vpop.permute.xlu0 %399
      %403 = vset.pattern.permute.xlu0 0
      %404 = vperm.xlu0 %403, %v366
      %v405 = vpop.permute.xlu0 %404
      %408 = vset.pattern.permute.xlu0 0
      %409 = vperm.xlu0 %408, %v367
      %v410 = vpop.permute.xlu0 %409
      %413 = vset.pattern.permute.xlu0 0
      %414 = vperm.xlu0 %413, %v368
      %v415 = vpop.permute.xlu0 %414
      %418 = vset.pattern.permute.xlu0 0
      %419 = vperm.xlu0 %418, %v369
      %v420 = vpop.permute.xlu0 %419
      %423 = vset.pattern.permute.xlu0 0
      %424 = vperm.xlu0 %423, %v370
      %v425 = vpop.permute.xlu0 %424
      %428 = vset.pattern.permute.xlu0 0
      %429 = vperm.xlu0 %428, %v371
      %v430 = vpop.permute.xlu0 %429
      %433 = vset.pattern.permute.xlu0 0
      %434 = vperm.xlu0 %433, %v372
      %v435 = vpop.permute.xlu0 %434
      %438 = vset.pattern.permute.xlu0 0
      %439 = vperm.xlu0 %438, %v373
      %v440 = vpop.permute.xlu0 %439
      %443 = vset.pattern.permute.xlu0 0
      %444 = vperm.xlu0 %443, %v374
      %v445 = vpop.permute.xlu0 %444
      %448 = vset.pattern.permute.xlu0 0
      %449 = vperm.xlu0 %448, %v375
      %v450 = vpop.permute.xlu0 %449
      %453 = vset.pattern.permute.xlu0 0
      %454 = vperm.xlu0 %453, %v376
      %v455 = vpop.permute.xlu0 %454
      %458 = vset.pattern.permute.xlu0 0
      %459 = vperm.xlu0 %458, %v377
      %v460 = vpop.permute.xlu0 %459
      %463 = vset.pattern.permute.xlu0 0
      %464 = vperm.xlu0 %463, %v378
      %v465 = vpop.permute.xlu0 %464
      %468 = vset.pattern.permute.xlu0 0
      %469 = vperm.xlu0 %468, %v379
      %v470 = vpop.permute.xlu0 %469
      %473 = vset.pattern.permute.xlu0 0
      %474 = vperm.xlu0 %473, %v380
      %v475 = vpop.permute.xlu0 %474
      %478 = vset.pattern.permute.xlu0 0
      %479 = vperm.xlu0 %478, %v381
      %v480 = vpop.permute.xlu0 %479
      %483 = vset.pattern.permute.xlu0 0
      %484 = vperm.xlu0 %483, %v382
      %v485 = vpop.permute.xlu0 %484
      %488 = vset.pattern.permute.xlu0 0
      %489 = vperm.xlu0 %488, %v383
      %v490 = vpop.permute.xlu0 %489
      %493 = vset.pattern.permute.xlu0 0
      %494 = vperm.xlu0 %493, %v384
      %v495 = vpop.permute.xlu0 %494
      %498 = vset.pattern.permute.xlu0 0
      %499 = vperm.xlu0 %498, %v385
      %v500 = vpop.permute.xlu0 %499
      %503 = vset.pattern.permute.xlu0 0
      %504 = vperm.xlu0 %503, %v386
      %v505 = vpop.permute.xlu0 %504
      %508 = vset.pattern.permute.xlu0 0
      %509 = vperm.xlu0 %508, %v387
      %v510 = vpop.permute.xlu0 %509
      %513 = vset.pattern.permute.xlu0 0
      %514 = vperm.xlu0 %513, %v388
      %v515 = vpop.permute.xlu0 %514
      %518 = vset.pattern.permute.xlu0 0
      %519 = vperm.xlu0 %518, %v389
      %v520 = vpop.permute.xlu0 %519
      %523 = vset.pattern.permute.xlu0 0
      %524 = vperm.xlu0 %523, %v390
      %v525 = vpop.permute.xlu0 %524
      %528 = vset.pattern.permute.xlu0 0
      %529 = vperm.xlu0 %528, %v391
      %v530 = vpop.permute.xlu0 %529
      %533 = vset.pattern.permute.xlu0 0
      %534 = vperm.xlu0 %533, %v392
      %v535 = vpop.permute.xlu0 %534
      %538 = vset.pattern.permute.xlu0 0
      %539 = vperm.xlu0 %538, %v393
      %v540 = vpop.permute.xlu0 %539
      %543 = vset.pattern.permute.xlu0 0
      %544 = vperm.xlu0 %543, %v394
      %v545 = vpop.permute.xlu0 %544
      %548 = vset.pattern.permute.xlu0 0
      %549 = vperm.xlu0 %548, %v395
      %v550 = vpop.permute.xlu0 %549
      %553 = vset.pattern.permute.xlu0 0
      %554 = vperm.xlu0 %553, %v396
      %v555 = vpop.permute.xlu0 %554
      %v557 = vmul.f32 %v333, %v400
      %v558 = vmul.f32 %v334, %v405
      %v559 = vmul.f32 %v335, %v410
      %v560 = vmul.f32 %v336, %v415
      %v561 = vmul.f32 %v337, %v420
      %v562 = vmul.f32 %v338, %v425
      %v563 = vmul.f32 %v339, %v430
      %v564 = vmul.f32 %v340, %v435
      %v565 = vmul.f32 %v341, %v440
      %v566 = vmul.f32 %v342, %v445
      %v567 = vmul.f32 %v343, %v450
      %v568 = vmul.f32 %v344, %v455
      %v569 = vmul.f32 %v345, %v460
      %v570 = vmul.f32 %v346, %v465
      %v571 = vmul.f32 %v347, %v470
      %v572 = vmul.f32 %v348, %v475
      %v573 = vmul.f32 %v349, %v480
      %v574 = vmul.f32 %v350, %v485
      %v575 = vmul.f32 %v351, %v490
      %v576 = vmul.f32 %v352, %v495
      %v577 = vmul.f32 %v353, %v500
      %v578 = vmul.f32 %v354, %v505
      %v579 = vmul.f32 %v355, %v510
      %v580 = vmul.f32 %v356, %v515
      %v581 = vmul.f32 %v357, %v520
      %v582 = vmul.f32 %v358, %v525
      %v583 = vmul.f32 %v359, %v530
      %v584 = vmul.f32 %v360, %v535
      %v585 = vmul.f32 %v361, %v540
      %v586 = vmul.f32 %v362, %v545
      %v587 = vmul.f32 %v363, %v550
      %v588 = vmul.f32 %v364, %v555
      %v589 = vpack.c.bf16 %v558, %v557
      %v590 = vpack.c.bf16 %v560, %v559
      %v591 = vpack.c.bf16 %v562, %v561
      %v592 = vpack.c.bf16 %v564, %v563
      %v593 = vpack.c.bf16 %v566, %v565
      %v594 = vpack.c.bf16 %v568, %v567
      %v595 = vpack.c.bf16 %v570, %v569
      %v596 = vpack.c.bf16 %v572, %v571
      %v597 = vpack.c.bf16 %v574, %v573
      %v598 = vpack.c.bf16 %v576, %v575
      %v599 = vpack.c.bf16 %v578, %v577
      %v600 = vpack.c.bf16 %v580, %v579
      %v601 = vpack.c.bf16 %v582, %v581
      %v602 = vpack.c.bf16 %v584, %v583
      %v603 = vpack.c.bf16 %v586, %v585
      %v604 = vpack.c.bf16 %v588, %v587
      %v621 = vunpack.c.l.b16 %v589
      %v622 = vunpack.c.h.b16 %v589
      %v623 = vunpack.c.l.b16 %v590
      %v624 = vunpack.c.h.b16 %v590
      %v625 = vunpack.c.l.b16 %v591
      %v626 = vunpack.c.h.b16 %v591
      %v627 = vunpack.c.l.b16 %v592
      %v628 = vunpack.c.h.b16 %v592
      %v629 = vunpack.c.l.b16 %v593
      %v630 = vunpack.c.h.b16 %v593
      %v631 = vunpack.c.l.b16 %v594
      %v632 = vunpack.c.h.b16 %v594
      %v633 = vunpack.c.l.b16 %v595
      %v634 = vunpack.c.h.b16 %v595
      %v635 = vunpack.c.l.b16 %v596
      %v636 = vunpack.c.h.b16 %v596
      %v637 = vunpack.c.l.b16 %v597
      %v638 = vunpack.c.h.b16 %v597
      %v639 = vunpack.c.l.b16 %v598
      %v640 = vunpack.c.h.b16 %v598
      %v641 = vunpack.c.l.b16 %v599
      %v642 = vunpack.c.h.b16 %v599
      %v643 = vunpack.c.l.b16 %v600
      %v644 = vunpack.c.h.b16 %v600
      %v645 = vunpack.c.l.b16 %v601
      %v646 = vunpack.c.h.b16 %v601
      %v647 = vunpack.c.l.b16 %v602
      %v648 = vunpack.c.h.b16 %v602
      %v649 = vunpack.c.l.b16 %v603
      %v650 = vunpack.c.h.b16 %v603
      %v651 = vunpack.c.l.b16 %v604
      %v652 = vunpack.c.h.b16 %v604
      %v653 = vpack.c.b16 %v621, %v621
      %v654 = vpack.c.b16 %v622, %v622
      %v655 = vpack.c.b16 %v623, %v623
      %v656 = vpack.c.b16 %v624, %v624
      %v657 = vpack.c.b16 %v625, %v625
      %v658 = vpack.c.b16 %v626, %v626
      %v659 = vpack.c.b16 %v627, %v627
      %v660 = vpack.c.b16 %v628, %v628
      %v661 = vpack.c.b16 %v629, %v629
      %v662 = vpack.c.b16 %v630, %v630
      %v663 = vpack.c.b16 %v631, %v631
      %v664 = vpack.c.b16 %v632, %v632
      %v665 = vpack.c.b16 %v633, %v633
      %v666 = vpack.c.b16 %v634, %v634
      %v667 = vpack.c.b16 %v635, %v635
      %v668 = vpack.c.b16 %v636, %v636
      %v669 = vpack.c.b16 %v637, %v637
      %v670 = vpack.c.b16 %v638, %v638
      %v671 = vpack.c.b16 %v639, %v639
      %v672 = vpack.c.b16 %v640, %v640
      %v673 = vpack.c.b16 %v641, %v641
      %v674 = vpack.c.b16 %v642, %v642
      %v675 = vpack.c.b16 %v643, %v643
      %v676 = vpack.c.b16 %v644, %v644
      %v677 = vpack.c.b16 %v645, %v645
      %v678 = vpack.c.b16 %v646, %v646
      %v679 = vpack.c.b16 %v647, %v647
      %v680 = vpack.c.b16 %v648, %v648
      %v681 = vpack.c.b16 %v649, %v649
      %v682 = vpack.c.b16 %v650, %v650
      %v683 = vpack.c.b16 %v651, %v651
      %v684 = vpack.c.b16 %v652, %v652
      %717 = vst [vmem:[%s221] sm:$0xf] %v653
      %718 = vst [vmem:[%s221 + $0x4] sm:$0xf] %v654
      %719 = vst [vmem:[%s221 + $0x8] sm:$0xf] %v655
      %720 = vst [vmem:[%s221 + $0xc] sm:$0xf] %v656
      %721 = vst [vmem:[%s221 + $0x10] sm:$0xf] %v657
      %722 = vst [vmem:[%s221 + $0x14] sm:$0xf] %v658
      %723 = vst [vmem:[%s221 + $0x18] sm:$0xf] %v659
      %724 = vst [vmem:[%s221 + $0x1c] sm:$0xf] %v660
      %725 = vst [vmem:[%s221 + $0x20] sm:$0xf] %v661
      %726 = vst [vmem:[%s221 + $0x24] sm:$0xf] %v662
      %727 = vst [vmem:[%s221 + $0x28] sm:$0xf] %v663
      %728 = vst [vmem:[%s221 + $0x2c] sm:$0xf] %v664
      %729 = vst [vmem:[%s221 + $0x30] sm:$0xf] %v665
      %730 = vst [vmem:[%s221 + $0x34] sm:$0xf] %v666
      %731 = vst [vmem:[%s221 + $0x38] sm:$0xf] %v667
      %732 = vst [vmem:[%s221 + $0x3c] sm:$0xf] %v668
      %733 = vst [vmem:[%s221 + $0x40] sm:$0xf] %v669
      %734 = vst [vmem:[%s221 + $0x44] sm:$0xf] %v670
      %735 = vst [vmem:[%s221 + $0x48] sm:$0xf] %v671
      %736 = vst [vmem:[%s221 + $0x4c] sm:$0xf] %v672
      %737 = vst [vmem:[%s221 + $0x50] sm:$0xf] %v673
      %738 = vst [vmem:[%s221 + $0x54] sm:$0xf] %v674
      %739 = vst [vmem:[%s221 + $0x58] sm:$0xf] %v675
      %740 = vst [vmem:[%s221 + $0x5c] sm:$0xf] %v676
      %741 = vst [vmem:[%s221 + $0x60] sm:$0xf] %v677
      %742 = vst [vmem:[%s221 + $0x64] sm:$0xf] %v678
      %743 = vst [vmem:[%s221 + $0x68] sm:$0xf] %v679
      %744 = vst [vmem:[%s221 + $0x6c] sm:$0xf] %v680
      %745 = vst [vmem:[%s221 + $0x70] sm:$0xf] %v681
      %746 = vst [vmem:[%s221 + $0x74] sm:$0xf] %v682
      %747 = vst [vmem:[%s221 + $0x78] sm:$0xf] %v683
      %748 = vst [vmem:[%s221 + $0x7c] sm:$0xf] %v684
      %s749 = smul.u32 32, %s15
      %p750 = scmp.lt.s32.totalorder %s749, 95
      %s751 = scalar_select %p750, %s749, 95
      %s752 = smul.addr %s751, 4
      %s753 = scalar_lea.vmem %s4, %s752
      // Predicated region
      $region37: #{bottleneck_forward.5} parent=35 // pred_check
        %p754 = pneg %p127
      $region38: #{bottleneck_forward.5} parent=35 // pred_check_branch
        %756 = sbr.rel (%p754) target = $region40
      $region39: #{bottleneck_forward.5} parent=35 // pred_region
        %s757 = smul.u32 32, %s15
      $region40: #{bottleneck_forward.5} parent=35 // pred_fallthru
        _
    $region36: #{bottleneck_forward.5} parent=5 // pred_fallthru
      _
    %p758 = scmp.le.s32.totalorder 2, %s10
    // Predicated region
    $region41: #{bottleneck_forward.5} parent=5 // pred_check
      %p759 = pneg %p758
    $region42: #{bottleneck_forward.5} parent=5 // pred_check_branch
      %761 = sbr.rel (%p759) target = $region44
    $region43: #{bottleneck_forward.5} parent=5 // pred_region
      %s762 = ssub.s32 %s10, 2
      // Predicated region
      $region45: #{bottleneck_forward.5} parent=43 // pred_check
        %p763 = pneg %p133
      $region46: #{bottleneck_forward.5} parent=43 // pred_check_branch
        %765 = sbr.rel (%p763) target = $region48
      $region47: #{bottleneck_forward.5} parent=43 // pred_region
        %s766 = smul.u32 32, %s16
        %p767 = scmp.lt.s32.totalorder %s766, 95
        %s768 = scalar_select %p767, %s766, 95
        %s769 = smul.addr %s768, 4
        %s770 = scalar_lea.vmem %s4, %s769
      $region48: #{bottleneck_forward.5} parent=43 // pred_fallthru
        _
    $region44: #{bottleneck_forward.5} parent=5 // pred_fallthru
      _
  $region6: #{bottleneck_forward.5} parent=0 // loop_footer
    %s14 = sadd.s32 1, %s10
  $region7: #{bottleneck_forward.5} parent=0 // loop_footer_branch
    %9 = sbr.rel target = $region3
  $region8: #{bottleneck_forward.5} parent=0 // loop_exit
    _

// kernel: bottleneck_forward.7
$region0: #{bottleneck_forward.7}
  #allocation0 [shape = 'u32[]', space=smem, size = 0x4, offset = 0x4, fixed_abs, tag = 'smem constant byte address 0x4 - core index']
  #allocation1 [shape = 'u32[144,128]{1,0:T(1,128)}', space=vmem, size = 0x12000, scoped, tag = 'internal scratch']
  %s0 = inlined_call_operand.vmem [shape: f32[768,128], index: 0, kind: input, shape index: {}]
  %s1 = inlined_call_operand.vmem [shape: f32[1,128], index: 1, kind: input, shape index: {}]
  %s2 = inlined_call_operand.vmem [shape: f32[1,128], index: 2, kind: input, shape index: {}]
  %s3 = inlined_call_operand.vmem [shape: f32[768,1], index: 3, kind: input, shape index: {}]
  %s4 = inlined_call_operand.vmem [shape: f32[768,128], index: 4, kind: input, shape index: {}]
  %s5 = inlined_call_operand.vmem [shape: f32[768,128], index: 5, kind: output, shape index: {}]
  %s6 = sld [smem:[#allocation0]]
  $region53: #{bottleneck_forward.7} parent=0
    _
  %s8 = ssub.s32 1, %s6
  %s9 = scalar_select 0, %s8, %s6
  loop: start=0, step=1, limit=5
  $region2: #{bottleneck_forward.7} parent=0 // loop_pre_header
    _
  $region3: #{bottleneck_forward.7} parent=0 // loop_header
    %s11 = sphi 0, %s15
    %p12 = scmp.ge.s32.totalorder %s11, 5
    %s21 = sphi 0, %s23
    %s24 = sphi 0, %s21
    %s25 = sphi 0, %s24
    %s41 = sphi 0, %s25
    %s45 = sphi 0, %s45
    %s47 = sphi 0, %s45
    %s48 = sphi 0, %s47
    %s62 = sphi 0, %s48
    %s66 = sphi 0, %s66
    %s68 = sphi 0, %s66
    %s69 = sphi 0, %s68
    %s83 = sphi 0, %s69
    %s89 = sphi 0, %s91
    %s92 = sphi 0, %s89
    %s93 = sphi 0, %s92
    %s109 = sphi 0, %s93
    %s115 = sphi 0, %s117
    %s118 = sphi 0, %s115
    %s119 = sphi 0, %s118
    %s135 = sphi 0, %s119
    %s141 = sphi 0, %s143
    %s144 = sphi 0, %s141
    %s145 = sphi 0, %s144
    %s161 = sphi 0, %s145
  $region4: #{bottleneck_forward.7} parent=0 // loop_header_branch
    %14 = sbr.rel (%p12) target = $region8
  $region5: #{bottleneck_forward.7} parent=0 // loop_body
    %s16 = ssub.s32 %s11, 1
    %s17 = ssub.s32 %s11, 2
    %s18 = sadd.s32 %s11, 1
    %s19 = ssub.s32 %s11, %s18
    %p20 = scmp.eq.s32.totalorder %s19, 0
    %s22 = sadd.s32 %s21, 1
    %s23 = scalar_select %p20, %s21, %s22
    %p26 = pneg %p20
    %p27 = scmp.eq.s32.totalorder %s11, 2
    %p28 = por %p26, %p27
    %p29 = scmp.ne.s32.totalorder %s21, %s24
    %p30 = scmp.eq.s32.totalorder %s11, 0
    %p31 = por %p29, %p30
    %p32 = scmp.ne.s32.totalorder %s21, %s24
    %p33 = scmp.eq.s32.totalorder %s16, 2
    %p34 = por %p32, %p33
    %p35 = scmp.ne.s32.totalorder %s24, %s25
    %p36 = scmp.eq.s32.totalorder %s16, 0
    %p37 = por %p35, %p36
    %p38 = scmp.ne.s32.totalorder %s24, %s25
    %p39 = scmp.eq.s32.totalorder %s17, 2
    %p40 = por %p38, %p39
    %p42 = scmp.ne.s32.totalorder %s25, %s41
    %p43 = scmp.eq.s32.totalorder %s17, 0
    %p44 = por %p42, %p43
    %s46 = sadd.s32 %s45, 1
    %p49 = scmp.eq.s32.totalorder %s11, 2
    %p50 = scmp.ne.s32.totalorder %s45, %s47
    %p51 = scmp.eq.s32.totalorder %s11, 0
    %p52 = por %p50, %p51
    %p53 = scmp.ne.s32.totalorder %s45, %s47
    %p54 = scmp.eq.s32.totalorder %s16, 2
    %p55 = por %p53, %p54
    %p56 = scmp.ne.s32.totalorder %s47, %s48
    %p57 = scmp.eq.s32.totalorder %s16, 0
    %p58 = por %p56, %p57
    %p59 = scmp.ne.s32.totalorder %s47, %s48
    %p60 = scmp.eq.s32.totalorder %s17, 2
    %p61 = por %p59, %p60
    %p63 = scmp.ne.s32.totalorder %s48, %s62
    %p64 = scmp.eq.s32.totalorder %s17, 0
    %p65 = por %p63, %p64
    %s67 = sadd.s32 %s66, 1
    %p70 = scmp.eq.s32.totalorder %s11, 2
    %p71 = scmp.ne.s32.totalorder %s66, %s68
    %p72 = scmp.eq.s32.totalorder %s11, 0
    %p73 = por %p71, %p72
    %p74 = scmp.ne.s32.totalorder %s66, %s68
    %p75 = scmp.eq.s32.totalorder %s16, 2
    %p76 = por %p74, %p75
    %p77 = scmp.ne.s32.totalorder %s68, %s69
    %p78 = scmp.eq.s32.totalorder %s16, 0
    %p79 = por %p77, %p78
    %p80 = scmp.ne.s32.totalorder %s68, %s69
    %p81 = scmp.eq.s32.totalorder %s17, 2
    %p82 = por %p80, %p81
    %p84 = scmp.ne.s32.totalorder %s69, %s83
    %p85 = scmp.eq.s32.totalorder %s17, 0
    %p86 = por %p84, %p85
    %s87 = ssub.s32 %s11, %s18
    %p88 = scmp.eq.s32.totalorder %s87, 0
    %s90 = sadd.s32 %s89, 1
    %s91 = scalar_select %p88, %s89, %s90
    %p94 = pneg %p88
    %p95 = scmp.eq.s32.totalorder %s11, 2
    %p96 = por %p94, %p95
    %p97 = scmp.ne.s32.totalorder %s89, %s92
    %p98 = scmp.eq.s32.totalorder %s11, 0
    %p99 = por %p97, %p98
    %p100 = scmp.ne.s32.totalorder %s89, %s92
    %p101 = scmp.eq.s32.totalorder %s16, 2
    %p102 = por %p100, %p101
    %p103 = scmp.ne.s32.totalorder %s92, %s93
    %p104 = scmp.eq.s32.totalorder %s16, 0
    %p105 = por %p103, %p104
    %p106 = scmp.ne.s32.totalorder %s92, %s93
    %p107 = scmp.eq.s32.totalorder %s17, 2
    %p108 = por %p106, %p107
    %p110 = scmp.ne.s32.totalorder %s93, %s109
    %p111 = scmp.eq.s32.totalorder %s17, 0
    %p112 = por %p110, %p111
    %s113 = ssub.s32 %s11, %s18
    %p114 = scmp.eq.s32.totalorder %s113, 0
    %s116 = sadd.s32 %s115, 1
    %s117 = scalar_select %p114, %s115, %s116
    %p120 = pneg %p114
    %p121 = scmp.eq.s32.totalorder %s11, 2
    %p122 = por %p120, %p121
    %p123 = scmp.ne.s32.totalorder %s115, %s118
    %p124 = scmp.eq.s32.totalorder %s11, 0
    %p125 = por %p123, %p124
    %p126 = scmp.ne.s32.totalorder %s115, %s118
    %p127 = scmp.eq.s32.totalorder %s16, 2
    %p128 = por %p126, %p127
    %p129 = scmp.ne.s32.totalorder %s118, %s119
    %p130 = scmp.eq.s32.totalorder %s16, 0
    %p131 = por %p129, %p130
    %p132 = scmp.ne.s32.totalorder %s118, %s119
    %p133 = scmp.eq.s32.totalorder %s17, 2
    %p134 = por %p132, %p133
    %p136 = scmp.ne.s32.totalorder %s119, %s135
    %p137 = scmp.eq.s32.totalorder %s17, 0
    %p138 = por %p136, %p137
    %s139 = ssub.s32 %s11, %s18
    %p140 = scmp.eq.s32.totalorder %s139, 0
    %s142 = sadd.s32 %s141, 1
    %s143 = scalar_select %p140, %s141, %s142
    %p146 = pneg %p140
    %p147 = scmp.eq.s32.totalorder %s11, 2
    %p148 = por %p146, %p147
    %p149 = scmp.ne.s32.totalorder %s141, %s144
    %p150 = scmp.eq.s32.totalorder %s11, 0
    %p151 = por %p149, %p150
    %p152 = scmp.ne.s32.totalorder %s141, %s144
    %p153 = scmp.eq.s32.totalorder %s16, 2
    %p154 = por %p152, %p153
    %p155 = scmp.ne.s32.totalorder %s144, %s145
    %p156 = scmp.eq.s32.totalorder %s16, 0
    %p157 = por %p155, %p156
    %p158 = scmp.ne.s32.totalorder %s144, %s145
    %p159 = scmp.eq.s32.totalorder %s17, 2
    %p160 = por %p158, %p159
    %p162 = scmp.ne.s32.totalorder %s145, %s161
    %p163 = scmp.eq.s32.totalorder %s17, 0
    %p164 = por %p162, %p163
    %p165 = scmp.le.s32.totalorder 1, %s11
    %p166 = scmp.lt.s32.totalorder %s11, 4
    %p167 = pnand %p165, %p166
    %p168 = pneg %p167
    // Predicated region
    $region9: #{bottleneck_forward.7} parent=5 // pred_check
      _
    $region10: #{bottleneck_forward.7} parent=5 // pred_check_branch
      %170 = sbr.rel (%p167) target = $region12
    $region11: #{bottleneck_forward.7} parent=5 // pred_region
      %s171 = ssub.s32 %s11, 1
      // Predicated region
      $region13: #{bottleneck_forward.7} parent=11 // pred_check
        %p172 = pneg %p58
      $region14: #{bottleneck_forward.7} parent=11 // pred_check_branch
        %174 = sbr.rel (%p172) target = $region16
      $region15: #{bottleneck_forward.7} parent=11 // pred_region
        _
      $region16: #{bottleneck_forward.7} parent=11 // pred_fallthru
        _
      // Predicated region
      $region17: #{bottleneck_forward.7} parent=11 // pred_check
        %p175 = pneg %p79
      $region18: #{bottleneck_forward.7} parent=11 // pred_check_branch
        %177 = sbr.rel (%p175) target = $region20
      $region19: #{bottleneck_forward.7} parent=11 // pred_region
        _
      $region20: #{bottleneck_forward.7} parent=11 // pred_fallthru
        _
    $region12: #{bottleneck_forward.7} parent=5 // pred_fallthru
      _
    %p178 = scmp.lt.s32.totalorder %s11, 3
    // Predicated region
    $region21: #{bottleneck_forward.7} parent=5 // pred_check
      %p179 = pneg %p178
    $region22: #{bottleneck_forward.7} parent=5 // pred_check_branch
      %181 = sbr.rel (%p179) target = $region24
    $region23: #{bottleneck_forward.7} parent=5 // pred_region
      // Predicated region
      $region25: #{bottleneck_forward.7} parent=23 // pred_check
        %p182 = pneg %p31
      $region26: #{bottleneck_forward.7} parent=23 // pred_check_branch
        %184 = sbr.rel (%p182) target = $region28
      $region27: #{bottleneck_forward.7} parent=23 // pred_region
        %s185 = smul.u32 32, %s11
        %p186 = scmp.lt.s32.totalorder %s185, 95
        %s187 = scalar_select %p186, %s185, 95
        %s188 = smul.addr %s187, 8
        %s189 = scalar_lea.vmem %s0, %s188
        %s190 = smul.u32 32, %s11
      $region28: #{bottleneck_forward.7} parent=23 // pred_fallthru
        _
      // Predicated region
      $region29: #{bottleneck_forward.7} parent=23 // pred_check
        %p191 = pneg %p99
      $region30: #{bottleneck_forward.7} parent=23 // pred_check_branch
        %193 = sbr.rel (%p191) target = $region32
      $region31: #{bottleneck_forward.7} parent=23 // pred_region
        %s194 = smul.u32 32, %s11
        %p195 = scmp.lt.s32.totalorder %s194, 95
        %s196 = scalar_select %p195, %s194, 95
        %s197 = smul.addr %s196, 8
        %s198 = scalar_lea.vmem %s3, %s197
        %s199 = smul.u32 32, %s11
      $region32: #{bottleneck_forward.7} parent=23 // pred_fallthru
        _
      // Predicated region
      $region33: #{bottleneck_forward.7} parent=23 // pred_check
        %p200 = pneg %p125
      $region34: #{bottleneck_forward.7} parent=23 // pred_check_branch
        %202 = sbr.rel (%p200) target = $region36
      $region35: #{bottleneck_forward.7} parent=23 // pred_region
        %s203 = smul.u32 32, %s11
        %p204 = scmp.lt.s32.totalorder %s203, 95
        %s205 = scalar_select %p204, %s203, 95
        %s206 = smul.addr %s205, 8
        %s207 = scalar_lea.vmem %s4, %s206
        %s208 = smul.u32 32, %s11
      $region36: #{bottleneck_forward.7} parent=23 // pred_fallthru
        _
    $region24: #{bottleneck_forward.7} parent=5 // pred_fallthru
      _
    %p209 = scmp.le.s32.totalorder 1, %s11
    %p210 = scmp.lt.s32.totalorder %s11, 4
    %p211 = pnand %p209, %p210
    %p212 = pneg %p211
    // Predicated region
    $region37: #{bottleneck_forward.7} parent=5 // pred_check
      _
    $region38: #{bottleneck_forward.7} parent=5 // pred_check_branch
      %214 = sbr.rel (%p211) target = $region40
    $region39: #{bottleneck_forward.7} parent=5 // pred_region
      %s215 = ssub.s32 %s11, 1
      %s216 = smul.u32 32, %s16
      %p217 = scmp.lt.s32.totalorder %s216, 95
      %s218 = scalar_select %p217, %s216, 95
      %s219 = smul.addr %s218, 8
      %s220 = scalar_lea.vmem %s0, %s219
      %p221 = pneg %p37
      %p222 = pneg %p34
      %p223 = pneg %p58
      %p224 = pneg %p55
      %p225 = pneg %p79
      %p226 = pneg %p76
      %s227 = smul.u32 32, %s16
      %p228 = scmp.lt.s32.totalorder %s227, 95
      %s229 = scalar_select %p228, %s227, 95
      %s230 = smul.addr %s229, 8
      %s231 = scalar_lea.vmem %s3, %s230
      %p232 = pneg %p105
      %p233 = pneg %p102
      %s234 = smul.u32 32, %s16
      %p235 = scmp.lt.s32.totalorder %s234, 95
      %s236 = scalar_select %p235, %s234, 95
      %s237 = smul.addr %s236, 8
      %s238 = scalar_lea.vmem %s4, %s237
      %p239 = pneg %p131
      %p240 = pneg %p128
      %p241 = pneg %p157
      %p242 = pneg %p154
      %s243 = smul.u32 32, %s16
      %p244 = scmp.lt.s32.totalorder %s243, 95
      %s245 = scalar_select %p244, %s243, 95
      %s246 = smul.addr %s245, 8
      %s247 = scalar_lea.vmem %s5, %s246
      %s248 = smul.u32 32, %s16
      %p249 = scmp.lt.s32.totalorder %s248, 95
      %s250 = scalar_select %p249, %s248, 95
      %s251 = smul.addr %s250, 8
      %s252 = scalar_lea.vmem %s0, %s251
      %s253 = smul.u32 32, %s16
      %s254 = smul.u32 32, %s16
      %p255 = scmp.lt.s32.totalorder %s254, 95
      %s256 = scalar_select %p255, %s254, 95
      %s257 = smul.addr %s256, 8
      %s258 = scalar_lea.vmem %s3, %s257
      %s259 = smul.u32 32, %s16
      %s260 = smul.u32 32, %s16
      %p261 = scmp.lt.s32.totalorder %s260, 95
      %s262 = scalar_select %p261, %s260, 95
      %s263 = smul.addr %s262, 8
      %s264 = scalar_lea.vmem %s4, %s263
      %s265 = smul.u32 32, %s16
      %s266 = smul.u32 32, %s16
      %p267 = scmp.lt.s32.totalorder %s266, 95
      %s268 = scalar_select %p267, %s266, 95
      %s269 = smul.addr %s268, 8
      %s270 = scalar_lea.vmem %s5, %s269
      %s271 = smul.u32 32, %s16
      %v272 = vld [vmem:[%s252] sm:$0xff]
      %v273 = vld [vmem:[%s252 + $0x8] sm:$0xff]
      %v274 = vld [vmem:[%s252 + $0x10] sm:$0xff]
      %v275 = vld [vmem:[%s252 + $0x18] sm:$0xff]
      %v276 = vld [vmem:[%s252 + $0x20] sm:$0xff]
      %v277 = vld [vmem:[%s252 + $0x28] sm:$0xff]
      %v278 = vld [vmem:[%s252 + $0x30] sm:$0xff]
      %v279 = vld [vmem:[%s252 + $0x38] sm:$0xff]
      %v280 = vld [vmem:[%s252 + $0x40] sm:$0xff]
      %v281 = vld [vmem:[%s252 + $0x48] sm:$0xff]
      %v282 = vld [vmem:[%s252 + $0x50] sm:$0xff]
      %v283 = vld [vmem:[%s252 + $0x58] sm:$0xff]
      %v284 = vld [vmem:[%s252 + $0x60] sm:$0xff]
      %v285 = vld [vmem:[%s252 + $0x68] sm:$0xff]
      %v286 = vld [vmem:[%s252 + $0x70] sm:$0xff]
      %v287 = vld [vmem:[%s252 + $0x78] sm:$0xff]
      %v288 = vld [vmem:[%s252 + $0x80] sm:$0xff]
      %v289 = vld [vmem:[%s252 + $0x88] sm:$0xff]
      %v290 = vld [vmem:[%s252 + $0x90] sm:$0xff]
      %v291 = vld [vmem:[%s252 + $0x98] sm:$0xff]
      %v292 = vld [vmem:[%s252 + $0xa0] sm:$0xff]
      %v293 = vld [vmem:[%s252 + $0xa8] sm:$0xff]
      %v294 = vld [vmem:[%s252 + $0xb0] sm:$0xff]
      %v295 = vld [vmem:[%s252 + $0xb8] sm:$0xff]
      %v296 = vld [vmem:[%s252 + $0xc0] sm:$0xff]
      %v297 = vld [vmem:[%s252 + $0xc8] sm:$0xff]
      %v298 = vld [vmem:[%s252 + $0xd0] sm:$0xff]
      %v299 = vld [vmem:[%s252 + $0xd8] sm:$0xff]
      %v300 = vld [vmem:[%s252 + $0xe0] sm:$0xff]
      %v301 = vld [vmem:[%s252 + $0xe8] sm:$0xff]
      %v302 = vld [vmem:[%s252 + $0xf0] sm:$0xff]
      %v303 = vld [vmem:[%s252 + $0xf8] sm:$0xff]
      %v304 = vld [vmem:[%s1] sm:$0x1]
      %v306 = vlaneseq
      %v307 = vshrl.u32 %v306, 7
      %v308 = vsub.s32 0, %v307
      %v309 = vrot.slane %v304, %v308
      %v311 = vmul.f32 %v272, %v309
      %v312 = vmul.f32 %v273, %v309
      %v313 = vmul.f32 %v274, %v309
      %v314 = vmul.f32 %v275, %v309
      %v315 = vmul.f32 %v276, %v309
      %v316 = vmul.f32 %v277, %v309
      %v317 = vmul.f32 %v278, %v309
      %v318 = vmul.f32 %v279, %v309
      %v319 = vmul.f32 %v280, %v309
      %v320 = vmul.f32 %v281, %v309
      %v321 = vmul.f32 %v282, %v309
      %v322 = vmul.f32 %v283, %v309
      %v323 = vmul.f32 %v284, %v309
      %v324 = vmul.f32 %v285, %v309
      %v325 = vmul.f32 %v286, %v309
      %v326 = vmul.f32 %v287, %v309
      %v327 = vmul.f32 %v288, %v309
      %v328 = vmul.f32 %v289, %v309
      %v329 = vmul.f32 %v290, %v309
      %v330 = vmul.f32 %v291, %v309
      %v331 = vmul.f32 %v292, %v309
      %v332 = vmul.f32 %v293, %v309
      %v333 = vmul.f32 %v294, %v309
      %v334 = vmul.f32 %v295, %v309
      %v335 = vmul.f32 %v296, %v309
      %v336 = vmul.f32 %v297, %v309
      %v337 = vmul.f32 %v298, %v309
      %v338 = vmul.f32 %v299, %v309
      %v339 = vmul.f32 %v300, %v309
      %v340 = vmul.f32 %v301, %v309
      %v341 = vmul.f32 %v302, %v309
      %v342 = vmul.f32 %v303, %v309
      %v343 = vld [vmem:[%s2] sm:$0x1]
      %v345 = vlaneseq
      %v346 = vshrl.u32 %v345, 7
      %v347 = vsub.s32 0, %v346
      %v348 = vrot.slane %v343, %v347
      %v350 = vadd.f32 %v311, %v348
      %v351 = vadd.f32 %v312, %v348
      %v352 = vadd.f32 %v313, %v348
      %v353 = vadd.f32 %v314, %v348
      %v354 = vadd.f32 %v315, %v348
      %v355 = vadd.f32 %v316, %v348
      %v356 = vadd.f32 %v317, %v348
      %v357 = vadd.f32 %v318, %v348
      %v358 = vadd.f32 %v319, %v348
      %v359 = vadd.f32 %v320, %v348
      %v360 = vadd.f32 %v321, %v348
      %v361 = vadd.f32 %v322, %v348
      %v362 = vadd.f32 %v323, %v348
      %v363 = vadd.f32 %v324, %v348
      %v364 = vadd.f32 %v325, %v348
      %v365 = vadd.f32 %v326, %v348
      %v366 = vadd.f32 %v327, %v348
      %v367 = vadd.f32 %v328, %v348
      %v368 = vadd.f32 %v329, %v348
      %v369 = vadd.f32 %v330, %v348
      %v370 = vadd.f32 %v331, %v348
      %v371 = vadd.f32 %v332, %v348
      %v372 = vadd.f32 %v333, %v348
      %v373 = vadd.f32 %v334, %v348
      %v374 = vadd.f32 %v335, %v348
      %v375 = vadd.f32 %v336, %v348
      %v376 = vadd.f32 %v337, %v348
      %v377 = vadd.f32 %v338, %v348
      %v378 = vadd.f32 %v339, %v348
      %v379 = vadd.f32 %v340, %v348
      %v380 = vadd.f32 %v341, %v348
      %v381 = vadd.f32 %v342, %v348
      %v382 = vld [vmem:[%s264] sm:$0xff]
      %v383 = vld [vmem:[%s264 + $0x8] sm:$0xff]
      %v384 = vld [vmem:[%s264 + $0x10] sm:$0xff]
      %v385 = vld [vmem:[%s264 + $0x18] sm:$0xff]
      %v386 = vld [vmem:[%s264 + $0x20] sm:$0xff]
      %v387 = vld [vmem:[%s264 + $0x28] sm:$0xff]
      %v388 = vld [vmem:[%s264 + $0x30] sm:$0xff]
      %v389 = vld [vmem:[%s264 + $0x38] sm:$0xff]
      %v390 = vld [vmem:[%s264 + $0x40] sm:$0xff]
      %v391 = vld [vmem:[%s264 + $0x48] sm:$0xff]
      %v392 = vld [vmem:[%s264 + $0x50] sm:$0xff]
      %v393 = vld [vmem:[%s264 + $0x58] sm:$0xff]
      %v394 = vld [vmem:[%s264 + $0x60] sm:$0xff]
      %v395 = vld [vmem:[%s264 + $0x68] sm:$0xff]
      %v396 = vld [vmem:[%s264 + $0x70] sm:$0xff]
      %v397 = vld [vmem:[%s264 + $0x78] sm:$0xff]
      %v398 = vld [vmem:[%s264 + $0x80] sm:$0xff]
      %v399 = vld [vmem:[%s264 + $0x88] sm:$0xff]
      %v400 = vld [vmem:[%s264 + $0x90] sm:$0xff]
      %v401 = vld [vmem:[%s264 + $0x98] sm:$0xff]
      %v402 = vld [vmem:[%s264 + $0xa0] sm:$0xff]
      %v403 = vld [vmem:[%s264 + $0xa8] sm:$0xff]
      %v404 = vld [vmem:[%s264 + $0xb0] sm:$0xff]
      %v405 = vld [vmem:[%s264 + $0xb8] sm:$0xff]
      %v406 = vld [vmem:[%s264 + $0xc0] sm:$0xff]
      %v407 = vld [vmem:[%s264 + $0xc8] sm:$0xff]
      %v408 = vld [vmem:[%s264 + $0xd0] sm:$0xff]
      %v409 = vld [vmem:[%s264 + $0xd8] sm:$0xff]
      %v410 = vld [vmem:[%s264 + $0xe0] sm:$0xff]
      %v411 = vld [vmem:[%s264 + $0xe8] sm:$0xff]
      %v412 = vld [vmem:[%s264 + $0xf0] sm:$0xff]
      %v413 = vld [vmem:[%s264 + $0xf8] sm:$0xff]
      %v414 = vadd.f32 %v350, %v382
      %v415 = vadd.f32 %v351, %v383
      %v416 = vadd.f32 %v352, %v384
      %v417 = vadd.f32 %v353, %v385
      %v418 = vadd.f32 %v354, %v386
      %v419 = vadd.f32 %v355, %v387
      %v420 = vadd.f32 %v356, %v388
      %v421 = vadd.f32 %v357, %v389
      %v422 = vadd.f32 %v358, %v390
      %v423 = vadd.f32 %v359, %v391
      %v424 = vadd.f32 %v360, %v392
      %v425 = vadd.f32 %v361, %v393
      %v426 = vadd.f32 %v362, %v394
      %v427 = vadd.f32 %v363, %v395
      %v428 = vadd.f32 %v364, %v396
      %v429 = vadd.f32 %v365, %v397
      %v430 = vadd.f32 %v366, %v398
      %v431 = vadd.f32 %v367, %v399
      %v432 = vadd.f32 %v368, %v400
      %v433 = vadd.f32 %v369, %v401
      %v434 = vadd.f32 %v370, %v402
      %v435 = vadd.f32 %v371, %v403
      %v436 = vadd.f32 %v372, %v404
      %v437 = vadd.f32 %v373, %v405
      %v438 = vadd.f32 %v374, %v406
      %v439 = vadd.f32 %v375, %v407
      %v440 = vadd.f32 %v376, %v408
      %v441 = vadd.f32 %v377, %v409
      %v442 = vadd.f32 %v378, %v410
      %v443 = vadd.f32 %v379, %v411
      %v444 = vadd.f32 %v380, %v412
      %v445 = vadd.f32 %v381, %v413
      %v446 = vmax.f32 %v414, 0.0
      %v447 = vmax.f32 %v415, 0.0
      %v448 = vmax.f32 %v416, 0.0
      %v449 = vmax.f32 %v417, 0.0
      %v450 = vmax.f32 %v418, 0.0
      %v451 = vmax.f32 %v419, 0.0
      %v452 = vmax.f32 %v420, 0.0
      %v453 = vmax.f32 %v421, 0.0
      %v454 = vmax.f32 %v422, 0.0
      %v455 = vmax.f32 %v423, 0.0
      %v456 = vmax.f32 %v424, 0.0
      %v457 = vmax.f32 %v425, 0.0
      %v458 = vmax.f32 %v426, 0.0
      %v459 = vmax.f32 %v427, 0.0
      %v460 = vmax.f32 %v428, 0.0
      %v461 = vmax.f32 %v429, 0.0
      %v462 = vmax.f32 %v430, 0.0
      %v463 = vmax.f32 %v431, 0.0
      %v464 = vmax.f32 %v432, 0.0
      %v465 = vmax.f32 %v433, 0.0
      %v466 = vmax.f32 %v434, 0.0
      %v467 = vmax.f32 %v435, 0.0
      %v468 = vmax.f32 %v436, 0.0
      %v469 = vmax.f32 %v437, 0.0
      %v470 = vmax.f32 %v438, 0.0
      %v471 = vmax.f32 %v439, 0.0
      %v472 = vmax.f32 %v440, 0.0
      %v473 = vmax.f32 %v441, 0.0
      %v474 = vmax.f32 %v442, 0.0
      %v475 = vmax.f32 %v443, 0.0
      %v476 = vmax.f32 %v444, 0.0
      %v477 = vmax.f32 %v445, 0.0
      %v478 = vld [vmem:[%s258] sm:$0xff]
      %v479 = vld [vmem:[%s258 + $0x8] sm:$0xff]
      %v480 = vld [vmem:[%s258 + $0x10] sm:$0xff]
      %v481 = vld [vmem:[%s258 + $0x18] sm:$0xff]
      %v482 = vld [vmem:[%s258 + $0x20] sm:$0xff]
      %v483 = vld [vmem:[%s258 + $0x28] sm:$0xff]
      %v484 = vld [vmem:[%s258 + $0x30] sm:$0xff]
      %v485 = vld [vmem:[%s258 + $0x38] sm:$0xff]
      %v486 = vld [vmem:[%s258 + $0x40] sm:$0xff]
      %v487 = vld [vmem:[%s258 + $0x48] sm:$0xff]
      %v488 = vld [vmem:[%s258 + $0x50] sm:$0xff]
      %v489 = vld [vmem:[%s258 + $0x58] sm:$0xff]
      %v490 = vld [vmem:[%s258 + $0x60] sm:$0xff]
      %v491 = vld [vmem:[%s258 + $0x68] sm:$0xff]
      %v492 = vld [vmem:[%s258 + $0x70] sm:$0xff]
      %v493 = vld [vmem:[%s258 + $0x78] sm:$0xff]
      %v494 = vld [vmem:[%s258 + $0x80] sm:$0xff]
      %v495 = vld [vmem:[%s258 + $0x88] sm:$0xff]
      %v496 = vld [vmem:[%s258 + $0x90] sm:$0xff]
      %v497 = vld [vmem:[%s258 + $0x98] sm:$0xff]
      %v498 = vld [vmem:[%s258 + $0xa0] sm:$0xff]
      %v499 = vld [vmem:[%s258 + $0xa8] sm:$0xff]
      %v500 = vld [vmem:[%s258 + $0xb0] sm:$0xff]
      %v501 = vld [vmem:[%s258 + $0xb8] sm:$0xff]
      %v502 = vld [vmem:[%s258 + $0xc0] sm:$0xff]
      %v503 = vld [vmem:[%s258 + $0xc8] sm:$0xff]
      %v504 = vld [vmem:[%s258 + $0xd0] sm:$0xff]
      %v505 = vld [vmem:[%s258 + $0xd8] sm:$0xff]
      %v506 = vld [vmem:[%s258 + $0xe0] sm:$0xff]
      %v507 = vld [vmem:[%s258 + $0xe8] sm:$0xff]
      %v508 = vld [vmem:[%s258 + $0xf0] sm:$0xff]
      %v509 = vld [vmem:[%s258 + $0xf8] sm:$0xff]
      %511 = vset.pattern.permute.xlu0 0
      %512 = vperm.xlu0 %511, %v478
      %v513 = vpop.permute.xlu0 %512
      %516 = vset.pattern.permute.xlu0 0
      %517 = vperm.xlu0 %516, %v479
      %v518 = vpop.permute.xlu0 %517
      %521 = vset.pattern.permute.xlu0 0
      %522 = vperm.xlu0 %521, %v480
      %v523 = vpop.permute.xlu0 %522
      %526 = vset.pattern.permute.xlu0 0
      %527 = vperm.xlu0 %526, %v481
      %v528 = vpop.permute.xlu0 %527
      %531 = vset.pattern.permute.xlu0 0
      %532 = vperm.xlu0 %531, %v482
      %v533 = vpop.permute.xlu0 %532
      %536 = vset.pattern.permute.xlu0 0
      %537 = vperm.xlu0 %536, %v483
      %v538 = vpop.permute.xlu0 %537
      %541 = vset.pattern.permute.xlu0 0
      %542 = vperm.xlu0 %541, %v484
      %v543 = vpop.permute.xlu0 %542
      %546 = vset.pattern.permute.xlu0 0
      %547 = vperm.xlu0 %546, %v485
      %v548 = vpop.permute.xlu0 %547
      %551 = vset.pattern.permute.xlu0 0
      %552 = vperm.xlu0 %551, %v486
      %v553 = vpop.permute.xlu0 %552
      %556 = vset.pattern.permute.xlu0 0
      %557 = vperm.xlu0 %556, %v487
      %v558 = vpop.permute.xlu0 %557
      %561 = vset.pattern.permute.xlu0 0
      %562 = vperm.xlu0 %561, %v488
      %v563 = vpop.permute.xlu0 %562
      %566 = vset.pattern.permute.xlu0 0
      %567 = vperm.xlu0 %566, %v489
      %v568 = vpop.permute.xlu0 %567
      %571 = vset.pattern.permute.xlu0 0
      %572 = vperm.xlu0 %571, %v490
      %v573 = vpop.permute.xlu0 %572
      %576 = vset.pattern.permute.xlu0 0
      %577 = vperm.xlu0 %576, %v491
      %v578 = vpop.permute.xlu0 %577
      %581 = vset.pattern.permute.xlu0 0
      %582 = vperm.xlu0 %581, %v492
      %v583 = vpop.permute.xlu0 %582
      %586 = vset.pattern.permute.xlu0 0
      %587 = vperm.xlu0 %586, %v493
      %v588 = vpop.permute.xlu0 %587
      %591 = vset.pattern.permute.xlu0 0
      %592 = vperm.xlu0 %591, %v494
      %v593 = vpop.permute.xlu0 %592
      %596 = vset.pattern.permute.xlu0 0
      %597 = vperm.xlu0 %596, %v495
      %v598 = vpop.permute.xlu0 %597
      %601 = vset.pattern.permute.xlu0 0
      %602 = vperm.xlu0 %601, %v496
      %v603 = vpop.permute.xlu0 %602
      %606 = vset.pattern.permute.xlu0 0
      %607 = vperm.xlu0 %606, %v497
      %v608 = vpop.permute.xlu0 %607
      %611 = vset.pattern.permute.xlu0 0
      %612 = vperm.xlu0 %611, %v498
      %v613 = vpop.permute.xlu0 %612
      %616 = vset.pattern.permute.xlu0 0
      %617 = vperm.xlu0 %616, %v499
      %v618 = vpop.permute.xlu0 %617
      %621 = vset.pattern.permute.xlu0 0
      %622 = vperm.xlu0 %621, %v500
      %v623 = vpop.permute.xlu0 %622
      %626 = vset.pattern.permute.xlu0 0
      %627 = vperm.xlu0 %626, %v501
      %v628 = vpop.permute.xlu0 %627
      %631 = vset.pattern.permute.xlu0 0
      %632 = vperm.xlu0 %631, %v502
      %v633 = vpop.permute.xlu0 %632
      %636 = vset.pattern.permute.xlu0 0
      %637 = vperm.xlu0 %636, %v503
      %v638 = vpop.permute.xlu0 %637
      %641 = vset.pattern.permute.xlu0 0
      %642 = vperm.xlu0 %641, %v504
      %v643 = vpop.permute.xlu0 %642
      %646 = vset.pattern.permute.xlu0 0
      %647 = vperm.xlu0 %646, %v505
      %v648 = vpop.permute.xlu0 %647
      %651 = vset.pattern.permute.xlu0 0
      %652 = vperm.xlu0 %651, %v506
      %v653 = vpop.permute.xlu0 %652
      %656 = vset.pattern.permute.xlu0 0
      %657 = vperm.xlu0 %656, %v507
      %v658 = vpop.permute.xlu0 %657
      %661 = vset.pattern.permute.xlu0 0
      %662 = vperm.xlu0 %661, %v508
      %v663 = vpop.permute.xlu0 %662
      %666 = vset.pattern.permute.xlu0 0
      %667 = vperm.xlu0 %666, %v509
      %v668 = vpop.permute.xlu0 %667
      %v670 = vmul.f32 %v446, %v513
      %v671 = vmul.f32 %v447, %v518
      %v672 = vmul.f32 %v448, %v523
      %v673 = vmul.f32 %v449, %v528
      %v674 = vmul.f32 %v450, %v533
      %v675 = vmul.f32 %v451, %v538
      %v676 = vmul.f32 %v452, %v543
      %v677 = vmul.f32 %v453, %v548
      %v678 = vmul.f32 %v454, %v553
      %v679 = vmul.f32 %v455, %v558
      %v680 = vmul.f32 %v456, %v563
      %v681 = vmul.f32 %v457, %v568
      %v682 = vmul.f32 %v458, %v573
      %v683 = vmul.f32 %v459, %v578
      %v684 = vmul.f32 %v460, %v583
      %v685 = vmul.f32 %v461, %v588
      %v686 = vmul.f32 %v462, %v593
      %v687 = vmul.f32 %v463, %v598
      %v688 = vmul.f32 %v464, %v603
      %v689 = vmul.f32 %v465, %v608
      %v690 = vmul.f32 %v466, %v613
      %v691 = vmul.f32 %v467, %v618
      %v692 = vmul.f32 %v468, %v623
      %v693 = vmul.f32 %v469, %v628
      %v694 = vmul.f32 %v470, %v633
      %v695 = vmul.f32 %v471, %v638
      %v696 = vmul.f32 %v472, %v643
      %v697 = vmul.f32 %v473, %v648
      %v698 = vmul.f32 %v474, %v653
      %v699 = vmul.f32 %v475, %v658
      %v700 = vmul.f32 %v476, %v663
      %v701 = vmul.f32 %v477, %v668
      %702 = vst [vmem:[%s270] sm:$0xff] %v670
      %703 = vst [vmem:[%s270 + $0x8] sm:$0xff] %v671
      %704 = vst [vmem:[%s270 + $0x10] sm:$0xff] %v672
      %705 = vst [vmem:[%s270 + $0x18] sm:$0xff] %v673
      %706 = vst [vmem:[%s270 + $0x20] sm:$0xff] %v674
      %707 = vst [vmem:[%s270 + $0x28] sm:$0xff] %v675
      %708 = vst [vmem:[%s270 + $0x30] sm:$0xff] %v676
      %709 = vst [vmem:[%s270 + $0x38] sm:$0xff] %v677
      %710 = vst [vmem:[%s270 + $0x40] sm:$0xff] %v678
      %711 = vst [vmem:[%s270 + $0x48] sm:$0xff] %v679
      %712 = vst [vmem:[%s270 + $0x50] sm:$0xff] %v680
      %713 = vst [vmem:[%s270 + $0x58] sm:$0xff] %v681
      %714 = vst [vmem:[%s270 + $0x60] sm:$0xff] %v682
      %715 = vst [vmem:[%s270 + $0x68] sm:$0xff] %v683
      %716 = vst [vmem:[%s270 + $0x70] sm:$0xff] %v684
      %717 = vst [vmem:[%s270 + $0x78] sm:$0xff] %v685
      %718 = vst [vmem:[%s270 + $0x80] sm:$0xff] %v686
      %719 = vst [vmem:[%s270 + $0x88] sm:$0xff] %v687
      %720 = vst [vmem:[%s270 + $0x90] sm:$0xff] %v688
      %721 = vst [vmem:[%s270 + $0x98] sm:$0xff] %v689
      %722 = vst [vmem:[%s270 + $0xa0] sm:$0xff] %v690
      %723 = vst [vmem:[%s270 + $0xa8] sm:$0xff] %v691
      %724 = vst [vmem:[%s270 + $0xb0] sm:$0xff] %v692
      %725 = vst [vmem:[%s270 + $0xb8] sm:$0xff] %v693
      %726 = vst [vmem:[%s270 + $0xc0] sm:$0xff] %v694
      %727 = vst [vmem:[%s270 + $0xc8] sm:$0xff] %v695
      %728 = vst [vmem:[%s270 + $0xd0] sm:$0xff] %v696
      %729 = vst [vmem:[%s270 + $0xd8] sm:$0xff] %v697
      %730 = vst [vmem:[%s270 + $0xe0] sm:$0xff] %v698
      %731 = vst [vmem:[%s270 + $0xe8] sm:$0xff] %v699
      %732 = vst [vmem:[%s270 + $0xf0] sm:$0xff] %v700
      %733 = vst [vmem:[%s270 + $0xf8] sm:$0xff] %v701
      %s734 = smul.u32 32, %s16
      %p735 = scmp.lt.s32.totalorder %s734, 95
      %s736 = scalar_select %p735, %s734, 95
      %s737 = smul.addr %s736, 8
      %s738 = scalar_lea.vmem %s5, %s737
      // Predicated region
      $region41: #{bottleneck_forward.7} parent=39 // pred_check
        %p739 = pneg %p154
      $region42: #{bottleneck_forward.7} parent=39 // pred_check_branch
        %741 = sbr.rel (%p739) target = $region44
      $region43: #{bottleneck_forward.7} parent=39 // pred_region
        %s742 = smul.u32 32, %s16
      $region44: #{bottleneck_forward.7} parent=39 // pred_fallthru
        _
    $region40: #{bottleneck_forward.7} parent=5 // pred_fallthru
      _
    %p743 = scmp.le.s32.totalorder 2, %s11
    // Predicated region
    $region45: #{bottleneck_forward.7} parent=5 // pred_check
      %p744 = pneg %p743
    $region46: #{bottleneck_forward.7} parent=5 // pred_check_branch
      %746 = sbr.rel (%p744) target = $region48
    $region47: #{bottleneck_forward.7} parent=5 // pred_region
      %s747 = ssub.s32 %s11, 2
      // Predicated region
      $region49: #{bottleneck_forward.7} parent=47 // pred_check
        %p748 = pneg %p160
      $region50: #{bottleneck_forward.7} parent=47 // pred_check_branch
        %750 = sbr.rel (%p748) target = $region52
      $region51: #{bottleneck_forward.7} parent=47 // pred_region
        %s751 = smul.u32 32, %s17
        %p752 = scmp.lt.s32.totalorder %s751, 95
        %s753 = scalar_select %p752, %s751, 95
        %s754 = smul.addr %s753, 8
        %s755 = scalar_lea.vmem %s5, %s754
      $region52: #{bottleneck_forward.7} parent=47 // pred_fallthru
        _
    $region48: #{bottleneck_forward.7} parent=5 // pred_fallthru
      _
  $region6: #{bottleneck_forward.7} parent=0 // loop_footer
    %s15 = sadd.s32 1, %s11
  $region7: #{bottleneck_forward.7} parent=0 // loop_footer_branch
    %10 = sbr.rel target = $region3
  $region8: #{bottleneck_forward.7} parent=0 // loop_exit
    _

// kernel: bottleneck_forward.4
$region0: #{bottleneck_forward.4}
  #allocation0 [shape = 'u32[]', space=smem, size = 0x4, offset = 0x4, fixed_abs, tag = 'smem constant byte address 0x4 - core index']
  #allocation1 [shape = 'u32[144,128]{1,0:T(1,128)}', space=vmem, size = 0x12000, scoped, tag = 'internal scratch']
  #allocation2 [shape = 'f32[304,128]{1,0:T(8,128)}', space=vmem, size = 0x26000, scoped, tag = 'scratch operand']
  %s0 = inlined_call_operand.vmem [shape: bf16[768,128], index: 0, kind: input, shape index: {}]
  %s1 = inlined_call_operand.vmem [shape: bf16[144,128], index: 1, kind: input, shape index: {}]
  %s2 = inlined_call_operand.vmem [shape: bf16[1152,128], index: 2, kind: input, shape index: {}]
  %s3 = inlined_call_operand.vmem [shape: f32[768,1], index: 3, kind: input, shape index: {}]
  %s4 = inlined_call_operand.vmem [shape: f32[768,128], index: 4, kind: output, shape index: {0}]
  %s5 = inlined_call_operand.vmem [shape: f32[24,128], index: 5, kind: output, shape index: {1}]
  %6 = xla_tuple %s4, %s5
  %s7 = sld [smem:[#allocation0]]
  $region57: #{bottleneck_forward.4} parent=0
    _
  %s9 = ssub.s32 1, %s7
  %s10 = scalar_select 0, %s9, %s7
  loop: start=0, step=1, limit=5
  $region2: #{bottleneck_forward.4} parent=0 // loop_pre_header
    _
  $region3: #{bottleneck_forward.4} parent=0 // loop_header
    %s12 = sphi 0, %s16
    %p13 = scmp.ge.s32.totalorder %s12, 5
    %s22 = sphi 0, %s24
    %s25 = sphi 0, %s22
    %s26 = sphi 0, %s25
    %s42 = sphi 0, %s26
    %s48 = sphi 0, %s50
    %s51 = sphi 0, %s48
    %s52 = sphi 0, %s51
    %s68 = sphi 0, %s52
    %s72 = sphi 0, %s72
    %s74 = sphi 0, %s72
    %s75 = sphi 0, %s74
    %s89 = sphi 0, %s75
    %s95 = sphi 0, %s97
    %s98 = sphi 0, %s95
    %s99 = sphi 0, %s98
    %s115 = sphi 0, %s99
    %s121 = sphi 0, %s123
    %s124 = sphi 0, %s121
    %s125 = sphi 0, %s124
    %s141 = sphi 0, %s125
    %s147 = sphi 0, %s149
    %s150 = sphi 0, %s147
    %s151 = sphi 0, %s150
    %s167 = sphi 0, %s151
  $region4: #{bottleneck_forward.4} parent=0 // loop_header_branch
    %15 = sbr.rel (%p13) target = $region8
  $region5: #{bottleneck_forward.4} parent=0 // loop_body
    %s17 = ssub.s32 %s12, 1
    %s18 = ssub.s32 %s12, 2
    %s19 = sadd.s32 %s12, 1
    %s20 = ssub.s32 %s12, %s19
    %p21 = scmp.eq.s32.totalorder %s20, 0
    %s23 = sadd.s32 %s22, 1
    %s24 = scalar_select %p21, %s22, %s23
    %p27 = pneg %p21
    %p28 = scmp.eq.s32.totalorder %s12, 2
    %p29 = por %p27, %p28
    %p30 = scmp.ne.s32.totalorder %s22, %s25
    %p31 = scmp.eq.s32.totalorder %s12, 0
    %p32 = por %p30, %p31
    %p33 = scmp.ne.s32.totalorder %s22, %s25
    %p34 = scmp.eq.s32.totalorder %s17, 2
    %p35 = por %p33, %p34
    %p36 = scmp.ne.s32.totalorder %s25, %s26
    %p37 = scmp.eq.s32.totalorder %s17, 0
    %p38 = por %p36, %p37
    %p39 = scmp.ne.s32.totalorder %s25, %s26
    %p40 = scmp.eq.s32.totalorder %s18, 2
    %p41 = por %p39, %p40
    %p43 = scmp.ne.s32.totalorder %s26, %s42
    %p44 = scmp.eq.s32.totalorder %s18, 0
    %p45 = por %p43, %p44
    %s46 = ssub.s32 %s12, %s19
    %p47 = scmp.eq.s32.totalorder %s46, 0
    %s49 = sadd.s32 %s48, 1
    %s50 = scalar_select %p47, %s48, %s49
    %p53 = pneg %p47
    %p54 = scmp.eq.s32.totalorder %s12, 2
    %p55 = por %p53, %p54
    %p56 = scmp.ne.s32.totalorder %s48, %s51
    %p57 = scmp.eq.s32.totalorder %s12, 0
    %p58 = por %p56, %p57
    %p59 = scmp.ne.s32.totalorder %s48, %s51
    %p60 = scmp.eq.s32.totalorder %s17, 2
    %p61 = por %p59, %p60
    %p62 = scmp.ne.s32.totalorder %s51, %s52
    %p63 = scmp.eq.s32.totalorder %s17, 0
    %p64 = por %p62, %p63
    %p65 = scmp.ne.s32.totalorder %s51, %s52
    %p66 = scmp.eq.s32.totalorder %s18, 2
    %p67 = por %p65, %p66
    %p69 = scmp.ne.s32.totalorder %s52, %s68
    %p70 = scmp.eq.s32.totalorder %s18, 0
    %p71 = por %p69, %p70
    %s73 = sadd.s32 %s72, 1
    %p76 = scmp.eq.s32.totalorder %s12, 2
    %p77 = scmp.ne.s32.totalorder %s72, %s74
    %p78 = scmp.eq.s32.totalorder %s12, 0
    %p79 = por %p77, %p78
    %p80 = scmp.ne.s32.totalorder %s72, %s74
    %p81 = scmp.eq.s32.totalorder %s17, 2
    %p82 = por %p80, %p81
    %p83 = scmp.ne.s32.totalorder %s74, %s75
    %p84 = scmp.eq.s32.totalorder %s17, 0
    %p85 = por %p83, %p84
    %p86 = scmp.ne.s32.totalorder %s74, %s75
    %p87 = scmp.eq.s32.totalorder %s18, 2
    %p88 = por %p86, %p87
    %p90 = scmp.ne.s32.totalorder %s75, %s89
    %p91 = scmp.eq.s32.totalorder %s18, 0
    %p92 = por %p90, %p91
    %s93 = ssub.s32 %s12, %s19
    %p94 = scmp.eq.s32.totalorder %s93, 0
    %s96 = sadd.s32 %s95, 1
    %s97 = scalar_select %p94, %s95, %s96
    %p100 = pneg %p94
    %p101 = scmp.eq.s32.totalorder %s12, 2
    %p102 = por %p100, %p101
    %p103 = scmp.ne.s32.totalorder %s95, %s98
    %p104 = scmp.eq.s32.totalorder %s12, 0
    %p105 = por %p103, %p104
    %p106 = scmp.ne.s32.totalorder %s95, %s98
    %p107 = scmp.eq.s32.totalorder %s17, 2
    %p108 = por %p106, %p107
    %p109 = scmp.ne.s32.totalorder %s98, %s99
    %p110 = scmp.eq.s32.totalorder %s17, 0
    %p111 = por %p109, %p110
    %p112 = scmp.ne.s32.totalorder %s98, %s99
    %p113 = scmp.eq.s32.totalorder %s18, 2
    %p114 = por %p112, %p113
    %p116 = scmp.ne.s32.totalorder %s99, %s115
    %p117 = scmp.eq.s32.totalorder %s18, 0
    %p118 = por %p116, %p117
    %s119 = ssub.s32 %s12, %s19
    %p120 = scmp.eq.s32.totalorder %s119, 0
    %s122 = sadd.s32 %s121, 1
    %s123 = scalar_select %p120, %s121, %s122
    %p126 = pneg %p120
    %p127 = scmp.eq.s32.totalorder %s12, 2
    %p128 = por %p126, %p127
    %p129 = scmp.ne.s32.totalorder %s121, %s124
    %p130 = scmp.eq.s32.totalorder %s12, 0
    %p131 = por %p129, %p130
    %p132 = scmp.ne.s32.totalorder %s121, %s124
    %p133 = scmp.eq.s32.totalorder %s17, 2
    %p134 = por %p132, %p133
    %p135 = scmp.ne.s32.totalorder %s124, %s125
    %p136 = scmp.eq.s32.totalorder %s17, 0
    %p137 = por %p135, %p136
    %p138 = scmp.ne.s32.totalorder %s124, %s125
    %p139 = scmp.eq.s32.totalorder %s18, 2
    %p140 = por %p138, %p139
    %p142 = scmp.ne.s32.totalorder %s125, %s141
    %p143 = scmp.eq.s32.totalorder %s18, 0
    %p144 = por %p142, %p143
    %s145 = ssub.s32 %s12, %s19
    %p146 = scmp.eq.s32.totalorder %s145, 0
    %s148 = sadd.s32 %s147, 1
    %s149 = scalar_select %p146, %s147, %s148
    %p152 = pneg %p146
    %p153 = scmp.eq.s32.totalorder %s12, 2
    %p154 = por %p152, %p153
    %p155 = scmp.ne.s32.totalorder %s147, %s150
    %p156 = scmp.eq.s32.totalorder %s12, 0
    %p157 = por %p155, %p156
    %p158 = scmp.ne.s32.totalorder %s147, %s150
    %p159 = scmp.eq.s32.totalorder %s17, 2
    %p160 = por %p158, %p159
    %p161 = scmp.ne.s32.totalorder %s150, %s151
    %p162 = scmp.eq.s32.totalorder %s17, 0
    %p163 = por %p161, %p162
    %p164 = scmp.ne.s32.totalorder %s150, %s151
    %p165 = scmp.eq.s32.totalorder %s18, 2
    %p166 = por %p164, %p165
    %p168 = scmp.ne.s32.totalorder %s151, %s167
    %p169 = scmp.eq.s32.totalorder %s18, 0
    %p170 = por %p168, %p169
    %p171 = scmp.le.s32.totalorder 1, %s12
    %p172 = scmp.lt.s32.totalorder %s12, 4
    %p173 = pnand %p171, %p172
    %p174 = pneg %p173
    // Predicated region
    $region9: #{bottleneck_forward.4} parent=5 // pred_check
      _
    $region10: #{bottleneck_forward.4} parent=5 // pred_check_branch
      %176 = sbr.rel (%p173) target = $region12
    $region11: #{bottleneck_forward.4} parent=5 // pred_region
      %s177 = ssub.s32 %s12, 1
      // Predicated region
      $region13: #{bottleneck_forward.4} parent=11 // pred_check
        %p178 = pneg %p85
      $region14: #{bottleneck_forward.4} parent=11 // pred_check_branch
        %180 = sbr.rel (%p178) target = $region16
      $region15: #{bottleneck_forward.4} parent=11 // pred_region
        _
      $region16: #{bottleneck_forward.4} parent=11 // pred_fallthru
        _
    $region12: #{bottleneck_forward.4} parent=5 // pred_fallthru
      _
    %p181 = scmp.lt.s32.totalorder %s12, 3
    // Predicated region
    $region17: #{bottleneck_forward.4} parent=5 // pred_check
      %p182 = pneg %p181
    $region18: #{bottleneck_forward.4} parent=5 // pred_check_branch
      %184 = sbr.rel (%p182) target = $region20
    $region19: #{bottleneck_forward.4} parent=5 // pred_region
      // Predicated region
      $region21: #{bottleneck_forward.4} parent=19 // pred_check
        %p185 = pneg %p32
      $region22: #{bottleneck_forward.4} parent=19 // pred_check_branch
        %187 = sbr.rel (%p185) target = $region24
      $region23: #{bottleneck_forward.4} parent=19 // pred_region
        %s188 = smul.u32 32, %s12
        %p189 = scmp.lt.s32.totalorder %s188, 95
        %s190 = scalar_select %p189, %s188, 95
        %s191 = smul.addr %s190, 4
        %s192 = scalar_lea.vmem %s0, %s191
        %s193 = smul.u32 32, %s12
      $region24: #{bottleneck_forward.4} parent=19 // pred_fallthru
        _
      // Predicated region
      $region25: #{bottleneck_forward.4} parent=19 // pred_check
        %p194 = pneg %p58
      $region26: #{bottleneck_forward.4} parent=19 // pred_check_branch
        %196 = sbr.rel (%p194) target = $region28
      $region27: #{bottleneck_forward.4} parent=19 // pred_region
        %s197 = smul.u32 6, %s12
        %p198 = scmp.lt.s32.totalorder %s197, 17
        %s199 = scalar_select %p198, %s197, 17
        %s200 = smul.addr %s199, 4
        %s201 = scalar_lea.vmem %s1, %s200
        %s202 = smul.u32 6, %s12
      $region28: #{bottleneck_forward.4} parent=19 // pred_fallthru
        _
      // Predicated region
      $region29: #{bottleneck_forward.4} parent=19 // pred_check
        %p203 = pneg %p105
      $region30: #{bottleneck_forward.4} parent=19 // pred_check_branch
        %205 = sbr.rel (%p203) target = $region32
      $region31: #{bottleneck_forward.4} parent=19 // pred_region
        %s206 = smul.u32 32, %s12
        %p207 = scmp.lt.s32.totalorder %s206, 95
        %s208 = scalar_select %p207, %s206, 95
        %s209 = smul.addr %s208, 8
        %s210 = scalar_lea.vmem %s3, %s209
        %s211 = smul.u32 32, %s12
      $region32: #{bottleneck_forward.4} parent=19 // pred_fallthru
        _
    $region20: #{bottleneck_forward.4} parent=5 // pred_fallthru
      _
    %p212 = scmp.le.s32.totalorder 1, %s12
    %p213 = scmp.lt.s32.totalorder %s12, 4
    %p214 = pnand %p212, %p213
    %p215 = pneg %p214
    // Predicated region
    $region33: #{bottleneck_forward.4} parent=5 // pred_check
      _
    $region34: #{bottleneck_forward.4} parent=5 // pred_check_branch
      %217 = sbr.rel (%p214) target = $region36
    $region35: #{bottleneck_forward.4} parent=5 // pred_region
      %s218 = ssub.s32 %s12, 1
      %s219 = smul.u32 32, %s17
      %p220 = scmp.lt.s32.totalorder %s219, 95
      %s221 = scalar_select %p220, %s219, 95
      %s222 = smul.addr %s221, 4
      %s223 = scalar_lea.vmem %s0, %s222
      %p224 = pneg %p38
      %p225 = pneg %p35
      %s226 = smul.u32 6, %s17
      %p227 = scmp.lt.s32.totalorder %s226, 17
      %s228 = scalar_select %p227, %s226, 17
      %s229 = smul.addr %s228, 4
      %s230 = scalar_lea.vmem %s1, %s229
      %p231 = pneg %p64
      %p232 = pneg %p61
      %p233 = pneg %p85
      %p234 = pneg %p82
      %s235 = smul.u32 32, %s17
      %p236 = scmp.lt.s32.totalorder %s235, 95
      %s237 = scalar_select %p236, %s235, 95
      %s238 = smul.addr %s237, 8
      %s239 = scalar_lea.vmem %s3, %s238
      %p240 = pneg %p111
      %p241 = pneg %p108
      %p242 = pneg %p137
      %p243 = pneg %p134
      %s244 = smul.u32 32, %s17
      %p245 = scmp.lt.s32.totalorder %s244, 95
      %s246 = scalar_select %p245, %s244, 95
      %s247 = smul.addr %s246, 8
      %s248 = scalar_lea.vmem %s4, %s247
      %p249 = pneg %p163
      %p250 = pneg %p160
      %p251 = scmp.lt.s32.totalorder %s17, 2
      %s252 = scalar_select %p251, %s17, 2
      %s253 = smul.addr %s252, 8
      %s254 = scalar_lea.vmem %s5, %s253
      %s255 = smul.u32 32, %s17
      %p256 = scmp.lt.s32.totalorder %s255, 95
      %s257 = scalar_select %p256, %s255, 95
      %s258 = smul.addr %s257, 4
      %s259 = scalar_lea.vmem %s0, %s258
      %s260 = smul.u32 32, %s17
      %s261 = smul.u32 6, %s17
      %p262 = scmp.lt.s32.totalorder %s261, 17
      %s263 = scalar_select %p262, %s261, 17
      %s264 = smul.addr %s263, 4
      %s265 = scalar_lea.vmem %s1, %s264
      %s266 = smul.u32 6, %s17
      %s267 = smul.u32 32, %s17
      %p268 = scmp.lt.s32.totalorder %s267, 95
      %s269 = scalar_select %p268, %s267, 95
      %s270 = smul.addr %s269, 8
      %s271 = scalar_lea.vmem %s3, %s270
      %s272 = smul.u32 32, %s17
      %s273 = smul.u32 32, %s17
      %p274 = scmp.lt.s32.totalorder %s273, 95
      %s275 = scalar_select %p274, %s273, 95
      %s276 = smul.addr %s275, 8
      %s277 = scalar_lea.vmem %s4, %s276
      %s278 = smul.u32 32, %s17
      %p279 = scmp.lt.s32.totalorder %s17, 2
      %s280 = scalar_select %p279, %s17, 2
      %s281 = smul.addr %s280, 8
      %s282 = scalar_lea.vmem %s5, %s281
      %v284 = vld [vmem:[%s259] sm:$0xf]
      %v285 = vld [vmem:[%s259 + $0x4] sm:$0xf]
      %v286 = vld [vmem:[%s259 + $0x8] sm:$0xf]
      %v287 = vld [vmem:[%s259 + $0xc] sm:$0xf]
      %v288 = vld [vmem:[%s259 + $0x10] sm:$0xf]
      %v289 = vld [vmem:[%s259 + $0x14] sm:$0xf]
      %v290 = vld [vmem:[%s259 + $0x18] sm:$0xf]
      %v291 = vld [vmem:[%s259 + $0x1c] sm:$0xf]
      %v292 = vld [vmem:[%s259 + $0x20] sm:$0xf]
      %v293 = vld [vmem:[%s259 + $0x24] sm:$0xf]
      %v294 = vld [vmem:[%s259 + $0x28] sm:$0xf]
      %v295 = vld [vmem:[%s259 + $0x2c] sm:$0xf]
      %v296 = vld [vmem:[%s259 + $0x30] sm:$0xf]
      %v297 = vld [vmem:[%s259 + $0x34] sm:$0xf]
      %v298 = vld [vmem:[%s259 + $0x38] sm:$0xf]
      %v299 = vld [vmem:[%s259 + $0x3c] sm:$0xf]
      %v300 = vld [vmem:[%s259 + $0x40] sm:$0xf]
      %v301 = vld [vmem:[%s259 + $0x44] sm:$0xf]
      %v302 = vld [vmem:[%s259 + $0x48] sm:$0xf]
      %v303 = vld [vmem:[%s259 + $0x4c] sm:$0xf]
      %v304 = vld [vmem:[%s259 + $0x50] sm:$0xf]
      %v305 = vld [vmem:[%s259 + $0x54] sm:$0xf]
      %v306 = vld [vmem:[%s259 + $0x58] sm:$0xf]
      %v307 = vld [vmem:[%s259 + $0x5c] sm:$0xf]
      %v308 = vld [vmem:[%s259 + $0x60] sm:$0xf]
      %v309 = vld [vmem:[%s259 + $0x64] sm:$0xf]
      %v310 = vld [vmem:[%s259 + $0x68] sm:$0xf]
      %v311 = vld [vmem:[%s259 + $0x6c] sm:$0xf]
      %v312 = vld [vmem:[%s259 + $0x70] sm:$0xf]
      %v313 = vld [vmem:[%s259 + $0x74] sm:$0xf]
      %v314 = vld [vmem:[%s259 + $0x78] sm:$0xf]
      %v315 = vld [vmem:[%s259 + $0x7c] sm:$0xf]
      %v316 = vunpack.c.l.bf16 %v284
      %v317 = vunpack.c.l.bf16 %v285
      %v318 = vunpack.c.l.bf16 %v286
      %v319 = vunpack.c.l.bf16 %v287
      %v320 = vunpack.c.l.bf16 %v288
      %v321 = vunpack.c.l.bf16 %v289
      %v322 = vunpack.c.l.bf16 %v290
      %v323 = vunpack.c.l.bf16 %v291
      %v324 = vunpack.c.l.bf16 %v292
      %v325 = vunpack.c.l.bf16 %v293
      %v326 = vunpack.c.l.bf16 %v294
      %v327 = vunpack.c.l.bf16 %v295
      %v328 = vunpack.c.l.bf16 %v296
      %v329 = vunpack.c.l.bf16 %v297
      %v330 = vunpack.c.l.bf16 %v298
      %v331 = vunpack.c.l.bf16 %v299
      %v332 = vunpack.c.l.bf16 %v300
      %v333 = vunpack.c.l.bf16 %v301
      %v334 = vunpack.c.l.bf16 %v302
      %v335 = vunpack.c.l.bf16 %v303
      %v336 = vunpack.c.l.bf16 %v304
      %v337 = vunpack.c.l.bf16 %v305
      %v338 = vunpack.c.l.bf16 %v306
      %v339 = vunpack.c.l.bf16 %v307
      %v340 = vunpack.c.l.bf16 %v308
      %v341 = vunpack.c.l.bf16 %v309
      %v342 = vunpack.c.l.bf16 %v310
      %v343 = vunpack.c.l.bf16 %v311
      %v344 = vunpack.c.l.bf16 %v312
      %v345 = vunpack.c.l.bf16 %v313
      %v346 = vunpack.c.l.bf16 %v314
      %v347 = vunpack.c.l.bf16 %v315
      %348 = vst [vmem:[#allocation2] sm:$0xff] %v316
      %349 = vst [vmem:[#allocation2 + $0x8] sm:$0xff] %v317
      %350 = vst [vmem:[#allocation2 + $0x10] sm:$0xff] %v318
      %351 = vst [vmem:[#allocation2 + $0x18] sm:$0xff] %v319
      %352 = vst [vmem:[#allocation2 + $0x20] sm:$0xff] %v320
      %353 = vst [vmem:[#allocation2 + $0x28] sm:$0xff] %v321
      %354 = vst [vmem:[#allocation2 + $0x30] sm:$0xff] %v322
      %355 = vst [vmem:[#allocation2 + $0x38] sm:$0xff] %v323
      %356 = vst [vmem:[#allocation2 + $0x40] sm:$0xff] %v324
      %357 = vst [vmem:[#allocation2 + $0x48] sm:$0xff] %v325
      %358 = vst [vmem:[#allocation2 + $0x50] sm:$0xff] %v326
      %359 = vst [vmem:[#allocation2 + $0x58] sm:$0xff] %v327
      %360 = vst [vmem:[#allocation2 + $0x60] sm:$0xff] %v328
      %361 = vst [vmem:[#allocation2 + $0x68] sm:$0xff] %v329
      %362 = vst [vmem:[#allocation2 + $0x70] sm:$0xff] %v330
      %363 = vst [vmem:[#allocation2 + $0x78] sm:$0xff] %v331
      %364 = vst [vmem:[#allocation2 + $0x80] sm:$0xff] %v332
      %365 = vst [vmem:[#allocation2 + $0x88] sm:$0xff] %v333
      %366 = vst [vmem:[#allocation2 + $0x90] sm:$0xff] %v334
      %367 = vst [vmem:[#allocation2 + $0x98] sm:$0xff] %v335
      %368 = vst [vmem:[#allocation2 + $0xa0] sm:$0xff] %v336
      %369 = vst [vmem:[#allocation2 + $0xa8] sm:$0xff] %v337
      %370 = vst [vmem:[#allocation2 + $0xb0] sm:$0xff] %v338
      %371 = vst [vmem:[#allocation2 + $0xb8] sm:$0xff] %v339
      %372 = vst [vmem:[#allocation2 + $0xc0] sm:$0xff] %v340
      %373 = vst [vmem:[#allocation2 + $0xc8] sm:$0xff] %v341
      %374 = vst [vmem:[#allocation2 + $0xd0] sm:$0xff] %v342
      %375 = vst [vmem:[#allocation2 + $0xd8] sm:$0xff] %v343
      %376 = vst [vmem:[#allocation2 + $0xe0] sm:$0xff] %v344
      %377 = vst [vmem:[#allocation2 + $0xe8] sm:$0xff] %v345
      %378 = vst [vmem:[#allocation2 + $0xf0] sm:$0xff] %v346
      %379 = vst [vmem:[#allocation2 + $0xf8] sm:$0xff] %v347
      %v380 = vld [vmem:[%s265] sm:$0xf]
      %v381 = vld [vmem:[%s265 + $0x4] sm:$0xf]
      %v382 = vld [vmem:[%s265 + $0x8] sm:$0xf]
      %v383 = vld [vmem:[%s265 + $0xc] sm:$0xf]
      %v384 = vld [vmem:[%s265 + $0x10] sm:$0xf]
      %v385 = vld [vmem:[%s265 + $0x14] sm:$0xf]
      %v386 = vunpack.c.l.bf16 %v380
      %v387 = vunpack.c.l.bf16 %v381
      %v388 = vunpack.c.l.bf16 %v382
      %v389 = vunpack.c.l.bf16 %v383
      %v390 = vunpack.c.l.bf16 %v384
      %v391 = vunpack.c.l.bf16 %v385
      %392 = vst [vmem:[#allocation2 + $0x100] sm:$0xff] %v386
      %393 = vst [vmem:[#allocation2 + $0x108] sm:$0xff] %v387
      %394 = vst [vmem:[#allocation2 + $0x110] sm:$0xff] %v388
      %395 = vst [vmem:[#allocation2 + $0x118] sm:$0xff] %v389
      %396 = vst [vmem:[#allocation2 + $0x120] sm:$0xff] %v390
      %397 = vst [vmem:[#allocation2 + $0x128] sm:$0xff] %v391
      %v398 = vld [vmem:[#allocation2] sm:$0xff]
      %v399 = vld [vmem:[#allocation2 + $0x8] sm:$0xff]
      %v400 = vld [vmem:[#allocation2 + $0x10] sm:$0xff]
      %v401 = vld [vmem:[#allocation2 + $0x18] sm:$0xff]
      %v402 = vld [vmem:[#allocation2 + $0x20] sm:$0xff]
      %v403 = vld [vmem:[#allocation2 + $0x28] sm:$0xff]
      %v404 = vld [vmem:[#allocation2 + $0x30] sm:$0xff]
      %v405 = vld [vmem:[#allocation2 + $0x38] sm:$0xff]
      %v406 = vld [vmem:[#allocation2 + $0x40] sm:$0xff]
      %v407 = vld [vmem:[#allocation2 + $0x48] sm:$0xff]
      %v408 = vld [vmem:[#allocation2 + $0x50] sm:$0xff]
      %v409 = vld [vmem:[#allocation2 + $0x58] sm:$0xff]
      %v410 = vld [vmem:[#allocation2 + $0x60] sm:$0xff]
      %v411 = vld [vmem:[#allocation2 + $0x68] sm:$0xff]
      %v412 = vld [vmem:[#allocation2 + $0x70] sm:$0xff]
      %v413 = vld [vmem:[#allocation2 + $0x78] sm:$0xff]
      %v414 = vld [vmem:[#allocation2 + $0x80] sm:$0xff]
      %v415 = vld [vmem:[#allocation2 + $0x88] sm:$0xff]
      %v416 = vld [vmem:[#allocation2 + $0x90] sm:$0xff]
      %v417 = vld [vmem:[#allocation2 + $0x98] sm:$0xff]
      %v418 = vld [vmem:[#allocation2 + $0xa0] sm:$0xff]
      %v419 = vld [vmem:[#allocation2 + $0xa8] sm:$0xff]
      %v420 = vld [vmem:[#allocation2 + $0xb0] sm:$0xff]
      %v421 = vld [vmem:[#allocation2 + $0xb8] sm:$0xff]
      %v422 = vld [vmem:[#allocation2 + $0xc0] sm:$0xff]
      %v423 = vld [vmem:[#allocation2 + $0xc8] sm:$0xff]
      %v424 = vld [vmem:[#allocation2 + $0xd0] sm:$0xff]
      %v425 = vld [vmem:[#allocation2 + $0xd8] sm:$0xff]
      %v426 = vld [vmem:[#allocation2 + $0xe0] sm:$0xff]
      %v427 = vld [vmem:[#allocation2 + $0xe8] sm:$0xff]
      %v428 = vld [vmem:[#allocation2 + $0xf0] sm:$0xff]
      %v429 = vld [vmem:[#allocation2 + $0xf8] sm:$0xff]
      %v430 = vpack.c.bf16 %v399, %v398
      %v431 = vpack.c.bf16 %v401, %v400
      %v432 = vpack.c.bf16 %v403, %v402
      %v433 = vpack.c.bf16 %v405, %v404
      %v434 = vpack.c.bf16 %v407, %v406
      %v435 = vpack.c.bf16 %v409, %v408
      %v436 = vpack.c.bf16 %v411, %v410
      %v437 = vpack.c.bf16 %v413, %v412
      %v438 = vpack.c.bf16 %v415, %v414
      %v439 = vpack.c.bf16 %v417, %v416
      %v440 = vpack.c.bf16 %v419, %v418
      %v441 = vpack.c.bf16 %v421, %v420
      %v442 = vpack.c.bf16 %v423, %v422
      %v443 = vpack.c.bf16 %v425, %v424
      %v444 = vpack.c.bf16 %v427, %v426
      %v445 = vpack.c.bf16 %v429, %v428
      %v446 = vld [vmem:[%s2] sm:$0xf]
      %v447 = vld [vmem:[%s2 + $0x4] sm:$0xf]
      %v448 = vld [vmem:[%s2 + $0x8] sm:$0xf]
      %v449 = vld [vmem:[%s2 + $0xc] sm:$0xf]
      %v450 = vld [vmem:[%s2 + $0x10] sm:$0xf]
      %v451 = vld [vmem:[%s2 + $0x14] sm:$0xf]
      %v452 = vld [vmem:[%s2 + $0x18] sm:$0xf]
      %v453 = vld [vmem:[%s2 + $0x1c] sm:$0xf]
      %v454 = vld [vmem:[%s2 + $0x20] sm:$0xf]
      %v455 = vld [vmem:[%s2 + $0x24] sm:$0xf]
      %v456 = vld [vmem:[%s2 + $0x28] sm:$0xf]
      %v457 = vld [vmem:[%s2 + $0x2c] sm:$0xf]
      %v458 = vld [vmem:[%s2 + $0x30] sm:$0xf]
      %v459 = vld [vmem:[%s2 + $0x34] sm:$0xf]
      %v460 = vld [vmem:[%s2 + $0x38] sm:$0xf]
      %v461 = vld [vmem:[%s2 + $0x3c] sm:$0xf]
      %v462 = vld [vmem:[#allocation2 + $0x1] sm:$0xff]
      %v463 = vld [vmem:[#allocation2 + $0x9] sm:$0xff]
      %v464 = vld [vmem:[#allocation2 + $0x11] sm:$0xff]
      %v465 = vld [vmem:[#allocation2 + $0x19] sm:$0xff]
      %v466 = vld [vmem:[#allocation2 + $0x21] sm:$0xff]
      %v467 = vld [vmem:[#allocation2 + $0x29] sm:$0xff]
      %v468 = vld [vmem:[#allocation2 + $0x31] sm:$0xff]
      %v469 = vld [vmem:[#allocation2 + $0x39] sm:$0xff]
      %v470 = vld [vmem:[#allocation2 + $0x41] sm:$0xff]
      %v471 = vld [vmem:[#allocation2 + $0x49] sm:$0xff]
      %v472 = vld [vmem:[#allocation2 + $0x51] sm:$0xff]
      %v473 = vld [vmem:[#allocation2 + $0x59] sm:$0xff]
      %v474 = vld [vmem:[#allocation2 + $0x61] sm:$0xff]
      %v475 = vld [vmem:[#allocation2 + $0x69] sm:$0xff]
      %v476 = vld [vmem:[#allocation2 + $0x71] sm:$0xff]
      %v477 = vld [vmem:[#allocation2 + $0x79] sm:$0xff]
      %v478 = vld [vmem:[#allocation2 + $0x81] sm:$0xff]
      %v479 = vld [vmem:[#allocation2 + $0x89] sm:$0xff]
      %v480 = vld [vmem:[#allocation2 + $0x91] sm:$0xff]
      %v481 = vld [vmem:[#allocation2 + $0x99] sm:$0xff]
      %v482 = vld [vmem:[#allocation2 + $0xa1] sm:$0xff]
      %v483 = vld [vmem:[#allocation2 + $0xa9] sm:$0xff]
      %v484 = vld [vmem:[#allocation2 + $0xb1] sm:$0xff]
      %v485 = vld [vmem:[#allocation2 + $0xb9] sm:$0xff]
      %v486 = vld [vmem:[#allocation2 + $0xc1] sm:$0xff]
      %v487 = vld [vmem:[#allocation2 + $0xc9] sm:$0xff]
      %v488 = vld [vmem:[#allocation2 + $0xd1] sm:$0xff]
      %v489 = vld [vmem:[#allocation2 + $0xd9] sm:$0xff]
      %v490 = vld [vmem:[#allocation2 + $0xe1] sm:$0xff]
      %v491 = vld [vmem:[#allocation2 + $0xe9] sm:$0xff]
      %v492 = vld [vmem:[#allocation2 + $0xf1] sm:$0xff]
      %v493 = vld [vmem:[#allocation2 + $0xf9] sm:$0xff]
      %v494 = vpack.c.bf16 %v463, %v462
      %v495 = vpack.c.bf16 %v465, %v464
      %v496 = vpack.c.bf16 %v467, %v466
      %v497 = vpack.c.bf16 %v469, %v468
      %v498 = vpack.c.bf16 %v471, %v470
      %v499 = vpack.c.bf16 %v473, %v472
      %v500 = vpack.c.bf16 %v475, %v474
      %v501 = vpack.c.bf16 %v477, %v476
      %v502 = vpack.c.bf16 %v479, %v478
      %v503 = vpack.c.bf16 %v481, %v480
      %v504 = vpack.c.bf16 %v483, %v482
      %v505 = vpack.c.bf16 %v485, %v484
      %v506 = vpack.c.bf16 %v487, %v486
      %v507 = vpack.c.bf16 %v489, %v488
      %v508 = vpack.c.bf16 %v491, %v490
      %v509 = vpack.c.bf16 %v493, %v492
      %v510 = vld [vmem:[%s2 + $0x40] sm:$0xf]
      %v511 = vld [vmem:[%s2 + $0x44] sm:$0xf]
      %v512 = vld [vmem:[%s2 + $0x48] sm:$0xf]
      %v513 = vld [vmem:[%s2 + $0x4c] sm:$0xf]
      %v514 = vld [vmem:[%s2 + $0x50] sm:$0xf]
      %v515 = vld [vmem:[%s2 + $0x54] sm:$0xf]
      %v516 = vld [vmem:[%s2 + $0x58] sm:$0xf]
      %v517 = vld [vmem:[%s2 + $0x5c] sm:$0xf]
      %v518 = vld [vmem:[%s2 + $0x60] sm:$0xf]
      %v519 = vld [vmem:[%s2 + $0x64] sm:$0xf]
      %v520 = vld [vmem:[%s2 + $0x68] sm:$0xf]
      %v521 = vld [vmem:[%s2 + $0x6c] sm:$0xf]
      %v522 = vld [vmem:[%s2 + $0x70] sm:$0xf]
      %v523 = vld [vmem:[%s2 + $0x74] sm:$0xf]
      %v524 = vld [vmem:[%s2 + $0x78] sm:$0xf]
      %v525 = vld [vmem:[%s2 + $0x7c] sm:$0xf]
      %v542 = vunpack.c.l.b16 %v510
      %v543 = vunpack.c.l.b16 %v511
      %v544 = vunpack.c.l.b16 %v512
      %v545 = vunpack.c.l.b16 %v513
      %v546 = vunpack.c.l.b16 %v514
      %v547 = vunpack.c.l.b16 %v515
      %v548 = vunpack.c.l.b16 %v516
      %v549 = vunpack.c.l.b16 %v517
      %v550 = vunpack.c.l.b16 %v518
      %v551 = vunpack.c.l.b16 %v519
      %v552 = vunpack.c.l.b16 %v520
      %v553 = vunpack.c.l.b16 %v521
      %v554 = vunpack.c.l.b16 %v522
      %v555 = vunpack.c.l.b16 %v523
      %v556 = vunpack.c.l.b16 %v524
      %v557 = vunpack.c.l.b16 %v525
      %v558 = vpack.c.b16 %v543, %v542
      %v559 = vpack.c.b16 %v545, %v544
      %v560 = vpack.c.b16 %v547, %v546
      %v561 = vpack.c.b16 %v549, %v548
      %v562 = vpack.c.b16 %v551, %v550
      %v563 = vpack.c.b16 %v553, %v552
      %v564 = vpack.c.b16 %v555, %v554
      %v565 = vpack.c.b16 %v557, %v556
      %574 = vmatprep.subr.bf16.mxu0 0
      %575 = vmatpush1.bf16.msra.mxu0 %v565
      %576 = vmatprep.subr.bf16.mxu0 0
      %577 = vmatpush1.bf16.msra.mxu0 %v564
      %578 = vmatprep.subr.bf16.mxu0 0
      %579 = vmatpush1.bf16.msra.mxu0 %v563
      %580 = vmatprep.subr.bf16.mxu0 0
      %581 = vmatpush1.bf16.msra.mxu0 %v562
      %582 = vmatprep.subr.bf16.mxu0 0
      %583 = vmatpush1.bf16.msra.mxu0 %v561
      %584 = vmatprep.subr.bf16.mxu0 0
      %585 = vmatpush1.bf16.msra.mxu0 %v560
      %586 = vmatprep.subr.bf16.mxu0 0
      %587 = vmatpush1.bf16.msra.mxu0 %v559
      %588 = vmatprep.subr.bf16.mxu0 0
      %589 = vmatpush1.bf16.msra.mxu0 %v558
      %590 = vmatprep.subr.bf16.mxu0 0
      %591 = vmatpush2.bf16.msra.mxu0 0
      %592 = vmatprep.subr.bf16.mxu0 0
      %593 = vmatpush2.bf16.msra.mxu0 0
      %594 = vmatprep.subr.bf16.mxu0 0
      %595 = vmatpush2.bf16.msra.mxu0 0
      %596 = vmatprep.subr.bf16.mxu0 0
      %597 = vmatpush2.bf16.msra.mxu0 0
      %598 = vmatprep.subr.bf16.mxu0 0
      %599 = vmatpush2.bf16.msra.mxu0 0
      %600 = vmatprep.subr.bf16.mxu0 0
      %601 = vmatpush2.bf16.msra.mxu0 0
      %602 = vmatprep.subr.bf16.mxu0 0
      %603 = vmatpush2.bf16.msra.mxu0 0
      %604 = vmatprep.subr.bf16.mxu0 0
      %605 = vmatpush2.bf16.msra.mxu0 0
      %606 = vmatprep.mubr.bf16.mxu0 0
      %607 = vmatmul.mubr.bf16.gmra.mxu0 %v494
      %v608 = vpop.f32.mrf.mxu0
      %v609 = vadd.f32 0.0, %v608
      %v610 = vpop.f32.mrf.mxu0
      %v611 = vpop.f32.mrf.mxu0
      %v612 = vadd.f32 0.0, %v611
      %v613 = vpop.f32.mrf.mxu0
      %614 = vmatprep.mubr.bf16.mxu0 0
      %615 = vmatmul.mubr.bf16.gmra.mxu0 %v495
      %v616 = vpop.f32.mrf.mxu0
      %v617 = vadd.f32 0.0, %v616
      %v618 = vpop.f32.mrf.mxu0
      %v619 = vpop.f32.mrf.mxu0
      %v620 = vadd.f32 0.0, %v619
      %v621 = vpop.f32.mrf.mxu0
      %622 = vmatprep.mubr.bf16.mxu0 0
      %623 = vmatmul.mubr.bf16.gmra.mxu0 %v496
      %v624 = vpop.f32.mrf.mxu0
      %v625 = vadd.f32 0.0, %v624
      %v626 = vpop.f32.mrf.mxu0
      %v627 = vpop.f32.mrf.mxu0
      %v628 = vadd.f32 0.0, %v627
      %v629 = vpop.f32.mrf.mxu0
      %630 = vmatprep.mubr.bf16.mxu0 0
      %631 = vmatmul.mubr.bf16.gmra.mxu0 %v497
      %v632 = vpop.f32.mrf.mxu0
      %v633 = vadd.f32 0.0, %v632
      %v634 = vpop.f32.mrf.mxu0
      %v635 = vpop.f32.mrf.mxu0
      %v636 = vadd.f32 0.0, %v635
      %v637 = vpop.f32.mrf.mxu0
      %638 = vmatprep.mubr.bf16.mxu0 0
      %639 = vmatmul.mubr.bf16.gmra.mxu0 %v498
      %v640 = vpop.f32.mrf.mxu0
      %v641 = vadd.f32 0.0, %v640
      %v642 = vpop.f32.mrf.mxu0
      %v643 = vpop.f32.mrf.mxu0
      %v644 = vadd.f32 0.0, %v643
      %v645 = vpop.f32.mrf.mxu0
      %646 = vmatprep.mubr.bf16.mxu0 0
      %647 = vmatmul.mubr.bf16.gmra.mxu0 %v499
      %v648 = vpop.f32.mrf.mxu0
      %v649 = vadd.f32 0.0, %v648
      %v650 = vpop.f32.mrf.mxu0
      %v651 = vpop.f32.mrf.mxu0
      %v652 = vadd.f32 0.0, %v651
      %v653 = vpop.f32.mrf.mxu0
      %654 = vmatprep.mubr.bf16.mxu0 0
      %655 = vmatmul.mubr.bf16.gmra.mxu0 %v500
      %v656 = vpop.f32.mrf.mxu0
      %v657 = vadd.f32 0.0, %v656
      %v658 = vpop.f32.mrf.mxu0
      %v659 = vpop.f32.mrf.mxu0
      %v660 = vadd.f32 0.0, %v659
      %v661 = vpop.f32.mrf.mxu0
      %662 = vmatprep.mubr.bf16.mxu0 0
      %663 = vmatmul.mubr.bf16.gmra.mxu0 %v501
      %v664 = vpop.f32.mrf.mxu0
      %v665 = vadd.f32 0.0, %v664
      %v666 = vpop.f32.mrf.mxu0
      %v667 = vpop.f32.mrf.mxu0
      %v668 = vadd.f32 0.0, %v667
      %v669 = vpop.f32.mrf.mxu0
      %670 = vmatprep.mubr.bf16.mxu0 0
      %671 = vmatmul.mubr.bf16.gmra.mxu0 %v502
      %v672 = vpop.f32.mrf.mxu0
      %v673 = vadd.f32 0.0, %v672
      %v674 = vpop.f32.mrf.mxu0
      %v675 = vpop.f32.mrf.mxu0
      %v676 = vadd.f32 0.0, %v675
      %v677 = vpop.f32.mrf.mxu0
      %678 = vmatprep.mubr.bf16.mxu0 0
      %679 = vmatmul.mubr.bf16.gmra.mxu0 %v503
      %v680 = vpop.f32.mrf.mxu0
      %v681 = vadd.f32 0.0, %v680
      %v682 = vpop.f32.mrf.mxu0
      %v683 = vpop.f32.mrf.mxu0
      %v684 = vadd.f32 0.0, %v683
      %v685 = vpop.f32.mrf.mxu0
      %686 = vmatprep.mubr.bf16.mxu0 0
      %687 = vmatmul.mubr.bf16.gmra.mxu0 %v504
      %v688 = vpop.f32.mrf.mxu0
      %v689 = vadd.f32 0.0, %v688
      %v690 = vpop.f32.mrf.mxu0
      %v691 = vpop.f32.mrf.mxu0
      %v692 = vadd.f32 0.0, %v691
      %v693 = vpop.f32.mrf.mxu0
      %694 = vmatprep.mubr.bf16.mxu0 0
      %695 = vmatmul.mubr.bf16.gmra.mxu0 %v505
      %v696 = vpop.f32.mrf.mxu0
      %v697 = vadd.f32 0.0, %v696
      %v698 = vpop.f32.mrf.mxu0
      %v699 = vpop.f32.mrf.mxu0
      %v700 = vadd.f32 0.0, %v699
      %v701 = vpop.f32.mrf.mxu0
      %702 = vmatprep.mubr.bf16.mxu0 0
      %703 = vmatmul.mubr.bf16.gmra.mxu0 %v506
      %v704 = vpop.f32.mrf.mxu0
      %v705 = vadd.f32 0.0, %v704
      %v706 = vpop.f32.mrf.mxu0
      %v707 = vpop.f32.mrf.mxu0
      %v708 = vadd.f32 0.0, %v707
      %v709 = vpop.f32.mrf.mxu0
      %710 = vmatprep.mubr.bf16.mxu0 0
      %711 = vmatmul.mubr.bf16.gmra.mxu0 %v507
      %v712 = vpop.f32.mrf.mxu0
      %v713 = vadd.f32 0.0, %v712
      %v714 = vpop.f32.mrf.mxu0
      %v715 = vpop.f32.mrf.mxu0
      %v716 = vadd.f32 0.0, %v715
      %v717 = vpop.f32.mrf.mxu0
      %718 = vmatprep.mubr.bf16.mxu0 0
      %719 = vmatmul.mubr.bf16.gmra.mxu0 %v508
      %v720 = vpop.f32.mrf.mxu0
      %v721 = vadd.f32 0.0, %v720
      %v722 = vpop.f32.mrf.mxu0
      %v723 = vpop.f32.mrf.mxu0
      %v724 = vadd.f32 0.0, %v723
      %v725 = vpop.f32.mrf.mxu0
      %726 = vmatprep.mubr.bf16.mxu0 0
      %727 = vmatmul.mubr.bf16.gmra.mxu0 %v509
      %v728 = vpop.f32.mrf.mxu0
      %v729 = vadd.f32 0.0, %v728
      %v730 = vpop.f32.mrf.mxu0
      %v731 = vpop.f32.mrf.mxu0
      %v732 = vadd.f32 0.0, %v731
      %v733 = vpop.f32.mrf.mxu0
      %734 = vdwg.mxu0
      %v751 = vunpack.c.l.b16 %v446
      %v752 = vunpack.c.l.b16 %v447
      %v753 = vunpack.c.l.b16 %v448
      %v754 = vunpack.c.l.b16 %v449
      %v755 = vunpack.c.l.b16 %v450
      %v756 = vunpack.c.l.b16 %v451
      %v757 = vunpack.c.l.b16 %v452
      %v758 = vunpack.c.l.b16 %v453
      %v759 = vunpack.c.l.b16 %v454
      %v760 = vunpack.c.l.b16 %v455
      %v761 = vunpack.c.l.b16 %v456
      %v762 = vunpack.c.l.b16 %v457
      %v763 = vunpack.c.l.b16 %v458
      %v764 = vunpack.c.l.b16 %v459
      %v765 = vunpack.c.l.b16 %v460
      %v766 = vunpack.c.l.b16 %v461
      %v767 = vpack.c.b16 %v752, %v751
      %v768 = vpack.c.b16 %v754, %v753
      %v769 = vpack.c.b16 %v756, %v755
      %v770 = vpack.c.b16 %v758, %v757
      %v771 = vpack.c.b16 %v760, %v759
      %v772 = vpack.c.b16 %v762, %v761
      %v773 = vpack.c.b16 %v764, %v763
      %v774 = vpack.c.b16 %v766, %v765
      %783 = vmatprep.subr.bf16.mxu0 0
      %784 = vmatpush1.bf16.msra.mxu0 %v774
      %785 = vmatprep.subr.bf16.mxu0 0
      %786 = vmatpush1.bf16.msra.mxu0 %v773
      %787 = vmatprep.subr.bf16.mxu0 0
      %788 = vmatpush1.bf16.msra.mxu0 %v772
      %789 = vmatprep.subr.bf16.mxu0 0
      %790 = vmatpush1.bf16.msra.mxu0 %v771
      %791 = vmatprep.subr.bf16.mxu0 0
      %792 = vmatpush1.bf16.msra.mxu0 %v770
      %793 = vmatprep.subr.bf16.mxu0 0
      %794 = vmatpush1.bf16.msra.mxu0 %v769
      %795 = vmatprep.subr.bf16.mxu0 0
      %796 = vmatpush1.bf16.msra.mxu0 %v768
      %797 = vmatprep.subr.bf16.mxu0 0
      %798 = vmatpush1.bf16.msra.mxu0 %v767
      %799 = vmatprep.subr.bf16.mxu0 0
      %800 = vmatpush2.bf16.msra.mxu0 0
      %801 = vmatprep.subr.bf16.mxu0 0
      %802 = vmatpush2.bf16.msra.mxu0 0
      %803 = vmatprep.subr.bf16.mxu0 0
      %804 = vmatpush2.bf16.msra.mxu0 0
      %805 = vmatprep.subr.bf16.mxu0 0
      %806 = vmatpush2.bf16.msra.mxu0 0
      %807 = vmatprep.subr.bf16.mxu0 0
      %808 = vmatpush2.bf16.msra.mxu0 0
      %809 = vmatprep.subr.bf16.mxu0 0
      %810 = vmatpush2.bf16.msra.mxu0 0
      %811 = vmatprep.subr.bf16.mxu0 0
      %812 = vmatpush2.bf16.msra.mxu0 0
      %813 = vmatprep.subr.bf16.mxu0 0
      %814 = vmatpush2.bf16.msra.mxu0 0
      %815 = vmatprep.mubr.bf16.mxu0 0
      %816 = vmatmul.mubr.bf16.gmra.mxu0 %v430
      %v817 = vpop.f32.mrf.mxu0
      %v818 = vadd.f32 %v609, %v817
      %v819 = vpop.f32.mrf.mxu0
      %v820 = vpop.f32.mrf.mxu0
      %v821 = vadd.f32 %v612, %v820
      %v822 = vpop.f32.mrf.mxu0
      %823 = vmatprep.mubr.bf16.mxu0 0
      %824 = vmatmul.mubr.bf16.gmra.mxu0 %v431
      %v825 = vpop.f32.mrf.mxu0
      %v826 = vadd.f32 %v617, %v825
      %v827 = vpop.f32.mrf.mxu0
      %v828 = vpop.f32.mrf.mxu0
      %v829 = vadd.f32 %v620, %v828
      %v830 = vpop.f32.mrf.mxu0
      %831 = vmatprep.mubr.bf16.mxu0 0
      %832 = vmatmul.mubr.bf16.gmra.mxu0 %v432
      %v833 = vpop.f32.mrf.mxu0
      %v834 = vadd.f32 %v625, %v833
      %v835 = vpop.f32.mrf.mxu0
      %v836 = vpop.f32.mrf.mxu0
      %v837 = vadd.f32 %v628, %v836
      %v838 = vpop.f32.mrf.mxu0
      %839 = vmatprep.mubr.bf16.mxu0 0
      %840 = vmatmul.mubr.bf16.gmra.mxu0 %v433
      %v841 = vpop.f32.mrf.mxu0
      %v842 = vadd.f32 %v633, %v841
      %v843 = vpop.f32.mrf.mxu0
      %v844 = vpop.f32.mrf.mxu0
      %v845 = vadd.f32 %v636, %v844
      %v846 = vpop.f32.mrf.mxu0
      %847 = vmatprep.mubr.bf16.mxu0 0
      %848 = vmatmul.mubr.bf16.gmra.mxu0 %v434
      %v849 = vpop.f32.mrf.mxu0
      %v850 = vadd.f32 %v641, %v849
      %v851 = vpop.f32.mrf.mxu0
      %v852 = vpop.f32.mrf.mxu0
      %v853 = vadd.f32 %v644, %v852
      %v854 = vpop.f32.mrf.mxu0
      %855 = vmatprep.mubr.bf16.mxu0 0
      %856 = vmatmul.mubr.bf16.gmra.mxu0 %v435
      %v857 = vpop.f32.mrf.mxu0
      %v858 = vadd.f32 %v649, %v857
      %v859 = vpop.f32.mrf.mxu0
      %v860 = vpop.f32.mrf.mxu0
      %v861 = vadd.f32 %v652, %v860
      %v862 = vpop.f32.mrf.mxu0
      %863 = vmatprep.mubr.bf16.mxu0 0
      %864 = vmatmul.mubr.bf16.gmra.mxu0 %v436
      %v865 = vpop.f32.mrf.mxu0
      %v866 = vadd.f32 %v657, %v865
      %v867 = vpop.f32.mrf.mxu0
      %v868 = vpop.f32.mrf.mxu0
      %v869 = vadd.f32 %v660, %v868
      %v870 = vpop.f32.mrf.mxu0
      %871 = vmatprep.mubr.bf16.mxu0 0
      %872 = vmatmul.mubr.bf16.gmra.mxu0 %v437
      %v873 = vpop.f32.mrf.mxu0
      %v874 = vadd.f32 %v665, %v873
      %v875 = vpop.f32.mrf.mxu0
      %v876 = vpop.f32.mrf.mxu0
      %v877 = vadd.f32 %v668, %v876
      %v878 = vpop.f32.mrf.mxu0
      %879 = vmatprep.mubr.bf16.mxu0 0
      %880 = vmatmul.mubr.bf16.gmra.mxu0 %v438
      %v881 = vpop.f32.mrf.mxu0
      %v882 = vadd.f32 %v673, %v881
      %v883 = vpop.f32.mrf.mxu0
      %v884 = vpop.f32.mrf.mxu0
      %v885 = vadd.f32 %v676, %v884
      %v886 = vpop.f32.mrf.mxu0
      %887 = vmatprep.mubr.bf16.mxu0 0
      %888 = vmatmul.mubr.bf16.gmra.mxu0 %v439
      %v889 = vpop.f32.mrf.mxu0
      %v890 = vadd.f32 %v681, %v889
      %v891 = vpop.f32.mrf.mxu0
      %v892 = vpop.f32.mrf.mxu0
      %v893 = vadd.f32 %v684, %v892
      %v894 = vpop.f32.mrf.mxu0
      %895 = vmatprep.mubr.bf16.mxu0 0
      %896 = vmatmul.mubr.bf16.gmra.mxu0 %v440
      %v897 = vpop.f32.mrf.mxu0
      %v898 = vadd.f32 %v689, %v897
      %v899 = vpop.f32.mrf.mxu0
      %v900 = vpop.f32.mrf.mxu0
      %v901 = vadd.f32 %v692, %v900
      %v902 = vpop.f32.mrf.mxu0
      %903 = vmatprep.mubr.bf16.mxu0 0
      %904 = vmatmul.mubr.bf16.gmra.mxu0 %v441
      %v905 = vpop.f32.mrf.mxu0
      %v906 = vadd.f32 %v697, %v905
      %v907 = vpop.f32.mrf.mxu0
      %v908 = vpop.f32.mrf.mxu0
      %v909 = vadd.f32 %v700, %v908
      %v910 = vpop.f32.mrf.mxu0
      %911 = vmatprep.mubr.bf16.mxu0 0
      %912 = vmatmul.mubr.bf16.gmra.mxu0 %v442
      %v913 = vpop.f32.mrf.mxu0
      %v914 = vadd.f32 %v705, %v913
      %v915 = vpop.f32.mrf.mxu0
      %v916 = vpop.f32.mrf.mxu0
      %v917 = vadd.f32 %v708, %v916
      %v918 = vpop.f32.mrf.mxu0
      %919 = vmatprep.mubr.bf16.mxu0 0
      %920 = vmatmul.mubr.bf16.gmra.mxu0 %v443
      %v921 = vpop.f32.mrf.mxu0
      %v922 = vadd.f32 %v713, %v921
      %v923 = vpop.f32.mrf.mxu0
      %v924 = vpop.f32.mrf.mxu0
      %v925 = vadd.f32 %v716, %v924
      %v926 = vpop.f32.mrf.mxu0
      %927 = vmatprep.mubr.bf16.mxu0 0
      %928 = vmatmul.mubr.bf16.gmra.mxu0 %v444
      %v929 = vpop.f32.mrf.mxu0
      %v930 = vadd.f32 %v721, %v929
      %v931 = vpop.f32.mrf.mxu0
      %v932 = vpop.f32.mrf.mxu0
      %v933 = vadd.f32 %v724, %v932
      %v934 = vpop.f32.mrf.mxu0
      %935 = vmatprep.mubr.bf16.mxu0 0
      %936 = vmatmul.mubr.bf16.gmra.mxu0 %v445
      %v937 = vpop.f32.mrf.mxu0
      %v938 = vadd.f32 %v729, %v937
      %v939 = vpop.f32.mrf.mxu0
      %v940 = vpop.f32.mrf.mxu0
      %v941 = vadd.f32 %v732, %v940
      %v942 = vpop.f32.mrf.mxu0
      %943 = vdwg.mxu0
      %v944 = vld [vmem:[#allocation2 + $0x2] sm:$0xff]
      %v945 = vld [vmem:[#allocation2 + $0xa] sm:$0xff]
      %v946 = vld [vmem:[#allocation2 + $0x12] sm:$0xff]
      %v947 = vld [vmem:[#allocation2 + $0x1a] sm:$0xff]
      %v948 = vld [vmem:[#allocation2 + $0x22] sm:$0xff]
      %v949 = vld [vmem:[#allocation2 + $0x2a] sm:$0xff]
      %v950 = vld [vmem:[#allocation2 + $0x32] sm:$0xff]
      %v951 = vld [vmem:[#allocation2 + $0x3a] sm:$0xff]
      %v952 = vld [vmem:[#allocation2 + $0x42] sm:$0xff]
      %v953 = vld [vmem:[#allocation2 + $0x4a] sm:$0xff]
      %v954 = vld [vmem:[#allocation2 + $0x52] sm:$0xff]
      %v955 = vld [vmem:[#allocation2 + $0x5a] sm:$0xff]
      %v956 = vld [vmem:[#allocation2 + $0x62] sm:$0xff]
      %v957 = vld [vmem:[#allocation2 + $0x6a] sm:$0xff]
      %v958 = vld [vmem:[#allocation2 + $0x72] sm:$0xff]
      %v959 = vld [vmem:[#allocation2 + $0x7a] sm:$0xff]
      %v960 = vld [vmem:[#allocation2 + $0x82] sm:$0xff]
      %v961 = vld [vmem:[#allocation2 + $0x8a] sm:$0xff]
      %v962 = vld [vmem:[#allocation2 + $0x92] sm:$0xff]
      %v963 = vld [vmem:[#allocation2 + $0x9a] sm:$0xff]
      %v964 = vld [vmem:[#allocation2 + $0xa2] sm:$0xff]
      %v965 = vld [vmem:[#allocation2 + $0xaa] sm:$0xff]
      %v966 = vld [vmem:[#allocation2 + $0xb2] sm:$0xff]
      %v967 = vld [vmem:[#allocation2 + $0xba] sm:$0xff]
      %v968 = vld [vmem:[#allocation2 + $0xc2] sm:$0xff]
      %v969 = vld [vmem:[#allocation2 + $0xca] sm:$0xff]
      %v970 = vld [vmem:[#allocation2 + $0xd2] sm:$0xff]
      %v971 = vld [vmem:[#allocation2 + $0xda] sm:$0xff]
      %v972 = vld [vmem:[#allocation2 + $0xe2] sm:$0xff]
      %v973 = vld [vmem:[#allocation2 + $0xea] sm:$0xff]
      %v974 = vld [vmem:[#allocation2 + $0xf2] sm:$0xff]
      %v975 = vld [vmem:[#allocation2 + $0xfa] sm:$0xff]
      %v976 = vpack.c.bf16 %v945, %v944
      %v977 = vpack.c.bf16 %v947, %v946
      %v978 = vpack.c.bf16 %v949, %v948
      %v979 = vpack.c.bf16 %v951, %v950
      %v980 = vpack.c.bf16 %v953, %v952
      %v981 = vpack.c.bf16 %v955, %v954
      %v982 = vpack.c.bf16 %v957, %v956
      %v983 = vpack.c.bf16 %v959, %v958
      %v984 = vpack.c.bf16 %v961, %v960
      %v985 = vpack.c.bf16 %v963, %v962
      %v986 = vpack.c.bf16 %v965, %v964
      %v987 = vpack.c.bf16 %v967, %v966
      %v988 = vpack.c.bf16 %v969, %v968
      %v989 = vpack.c.bf16 %v971, %v970
      %v990 = vpack.c.bf16 %v973, %v972
      %v991 = vpack.c.bf16 %v975, %v974
      %v992 = vld [vmem:[%s2 + $0x80] sm:$0xf]
      %v993 = vld [vmem:[%s2 + $0x84] sm:$0xf]
      %v994 = vld [vmem:[%s2 + $0x88] sm:$0xf]
      %v995 = vld [vmem:[%s2 + $0x8c] sm:$0xf]
      %v996 = vld [vmem:[%s2 + $0x90] sm:$0xf]
      %v997 = vld [vmem:[%s2 + $0x94] sm:$0xf]
      %v998 = vld [vmem:[%s2 + $0x98] sm:$0xf]
      %v999 = vld [vmem:[%s2 + $0x9c] sm:$0xf]
      %v1000 = vld [vmem:[%s2 + $0xa0] sm:$0xf]
      %v1001 = vld [vmem:[%s2 + $0xa4] sm:$0xf]
      %v1002 = vld [vmem:[%s2 + $0xa8] sm:$0xf]
      %v1003 = vld [vmem:[%s2 + $0xac] sm:$0xf]
      %v1004 = vld [vmem:[%s2 + $0xb0] sm:$0xf]
      %v1005 = vld [vmem:[%s2 + $0xb4] sm:$0xf]
      %v1006 = vld [vmem:[%s2 + $0xb8] sm:$0xf]
      %v1007 = vld [vmem:[%s2 + $0xbc] sm:$0xf]
      %v1024 = vunpack.c.l.b16 %v992
      %v1025 = vunpack.c.l.b16 %v993
      %v1026 = vunpack.c.l.b16 %v994
      %v1027 = vunpack.c.l.b16 %v995
      %v1028 = vunpack.c.l.b16 %v996
      %v1029 = vunpack.c.l.b16 %v997
      %v1030 = vunpack.c.l.b16 %v998
      %v1031 = vunpack.c.l.b16 %v999
      %v1032 = vunpack.c.l.b16 %v1000
      %v1033 = vunpack.c.l.b16 %v1001
      %v1034 = vunpack.c.l.b16 %v1002
      %v1035 = vunpack.c.l.b16 %v1003
      %v1036 = vunpack.c.l.b16 %v1004
      %v1037 = vunpack.c.l.b16 %v1005
      %v1038 = vunpack.c.l.b16 %v1006
      %v1039 = vunpack.c.l.b16 %v1007
      %v1040 = vpack.c.b16 %v1025, %v1024
      %v1041 = vpack.c.b16 %v1027, %v1026
      %v1042 = vpack.c.b16 %v1029, %v1028
      %v1043 = vpack.c.b16 %v1031, %v1030
      %v1044 = vpack.c.b16 %v1033, %v1032
      %v1045 = vpack.c.b16 %v1035, %v1034
      %v1046 = vpack.c.b16 %v1037, %v1036
      %v1047 = vpack.c.b16 %v1039, %v1038
      %1056 = vmatprep.subr.bf16.mxu0 0
      %1057 = vmatpush1.bf16.msra.mxu0 %v1047
      %1058 = vmatprep.subr.bf16.mxu0 0
      %1059 = vmatpush1.bf16.msra.mxu0 %v1046
      %1060 = vmatprep.subr.bf16.mxu0 0
      %1061 = vmatpush1.bf16.msra.mxu0 %v1045
      %1062 = vmatprep.subr.bf16.mxu0 0
      %1063 = vmatpush1.bf16.msra.mxu0 %v1044
      %1064 = vmatprep.subr.bf16.mxu0 0
      %1065 = vmatpush1.bf16.msra.mxu0 %v1043
      %1066 = vmatprep.subr.bf16.mxu0 0
      %1067 = vmatpush1.bf16.msra.mxu0 %v1042
      %1068 = vmatprep.subr.bf16.mxu0 0
      %1069 = vmatpush1.bf16.msra.mxu0 %v1041
      %1070 = vmatprep.subr.bf16.mxu0 0
      %1071 = vmatpush1.bf16.msra.mxu0 %v1040
      %1072 = vmatprep.subr.bf16.mxu0 0
      %1073 = vmatpush2.bf16.msra.mxu0 0
      %1074 = vmatprep.subr.bf16.mxu0 0
      %1075 = vmatpush2.bf16.msra.mxu0 0
      %1076 = vmatprep.subr.bf16.mxu0 0
      %1077 = vmatpush2.bf16.msra.mxu0 0
      %1078 = vmatprep.subr.bf16.mxu0 0
      %1079 = vmatpush2.bf16.msra.mxu0 0
      %1080 = vmatprep.subr.bf16.mxu0 0
      %1081 = vmatpush2.bf16.msra.mxu0 0
      %1082 = vmatprep.subr.bf16.mxu0 0
      %1083 = vmatpush2.bf16.msra.mxu0 0
      %1084 = vmatprep.subr.bf16.mxu0 0
      %1085 = vmatpush2.bf16.msra.mxu0 0
      %1086 = vmatprep.subr.bf16.mxu0 0
      %1087 = vmatpush2.bf16.msra.mxu0 0
      %1088 = vmatprep.mubr.bf16.mxu0 0
      %1089 = vmatmul.mubr.bf16.gmra.mxu0 %v976
      %v1090 = vpop.f32.mrf.mxu0
      %v1091 = vadd.f32 0.0, %v1090
      %v1092 = vpop.f32.mrf.mxu0
      %v1093 = vpop.f32.mrf.mxu0
      %v1094 = vadd.f32 0.0, %v1093
      %v1095 = vpop.f32.mrf.mxu0
      %1096 = vmatprep.mubr.bf16.mxu0 0
      %1097 = vmatmul.mubr.bf16.gmra.mxu0 %v977
      %v1098 = vpop.f32.mrf.mxu0
      %v1099 = vadd.f32 0.0, %v1098
      %v1100 = vpop.f32.mrf.mxu0
      %v1101 = vpop.f32.mrf.mxu0
      %v1102 = vadd.f32 0.0, %v1101
      %v1103 = vpop.f32.mrf.mxu0
      %1104 = vmatprep.mubr.bf16.mxu0 0
      %1105 = vmatmul.mubr.bf16.gmra.mxu0 %v978
      %v1106 = vpop.f32.mrf.mxu0
      %v1107 = vadd.f32 0.0, %v1106
      %v1108 = vpop.f32.mrf.mxu0
      %v1109 = vpop.f32.mrf.mxu0
      %v1110 = vadd.f32 0.0, %v1109
      %v1111 = vpop.f32.mrf.mxu0
      %1112 = vmatprep.mubr.bf16.mxu0 0
      %1113 = vmatmul.mubr.bf16.gmra.mxu0 %v979
      %v1114 = vpop.f32.mrf.mxu0
      %v1115 = vadd.f32 0.0, %v1114
      %v1116 = vpop.f32.mrf.mxu0
      %v1117 = vpop.f32.mrf.mxu0
      %v1118 = vadd.f32 0.0, %v1117
      %v1119 = vpop.f32.mrf.mxu0
      %1120 = vmatprep.mubr.bf16.mxu0 0
      %1121 = vmatmul.mubr.bf16.gmra.mxu0 %v980
      %v1122 = vpop.f32.mrf.mxu0
      %v1123 = vadd.f32 0.0, %v1122
      %v1124 = vpop.f32.mrf.mxu0
      %v1125 = vpop.f32.mrf.mxu0
      %v1126 = vadd.f32 0.0, %v1125
      %v1127 = vpop.f32.mrf.mxu0
      %1128 = vmatprep.mubr.bf16.mxu0 0
      %1129 = vmatmul.mubr.bf16.gmra.mxu0 %v981
      %v1130 = vpop.f32.mrf.mxu0
      %v1131 = vadd.f32 0.0, %v1130
      %v1132 = vpop.f32.mrf.mxu0
      %v1133 = vpop.f32.mrf.mxu0
      %v1134 = vadd.f32 0.0, %v1133
      %v1135 = vpop.f32.mrf.mxu0
      %1136 = vmatprep.mubr.bf16.mxu0 0
      %1137 = vmatmul.mubr.bf16.gmra.mxu0 %v982
      %v1138 = vpop.f32.mrf.mxu0
      %v1139 = vadd.f32 0.0, %v1138
      %v1140 = vpop.f32.mrf.mxu0
      %v1141 = vpop.f32.mrf.mxu0
      %v1142 = vadd.f32 0.0, %v1141
      %v1143 = vpop.f32.mrf.mxu0
      %1144 = vmatprep.mubr.bf16.mxu0 0
      %1145 = vmatmul.mubr.bf16.gmra.mxu0 %v983
      %v1146 = vpop.f32.mrf.mxu0
      %v1147 = vadd.f32 0.0, %v1146
      %v1148 = vpop.f32.mrf.mxu0
      %v1149 = vpop.f32.mrf.mxu0
      %v1150 = vadd.f32 0.0, %v1149
      %v1151 = vpop.f32.mrf.mxu0
      %1152 = vmatprep.mubr.bf16.mxu0 0
      %1153 = vmatmul.mubr.bf16.gmra.mxu0 %v984
      %v1154 = vpop.f32.mrf.mxu0
      %v1155 = vadd.f32 0.0, %v1154
      %v1156 = vpop.f32.mrf.mxu0
      %v1157 = vpop.f32.mrf.mxu0
      %v1158 = vadd.f32 0.0, %v1157
      %v1159 = vpop.f32.mrf.mxu0
      %1160 = vmatprep.mubr.bf16.mxu0 0
      %1161 = vmatmul.mubr.bf16.gmra.mxu0 %v985
      %v1162 = vpop.f32.mrf.mxu0
      %v1163 = vadd.f32 0.0, %v1162
      %v1164 = vpop.f32.mrf.mxu0
      %v1165 = vpop.f32.mrf.mxu0
      %v1166 = vadd.f32 0.0, %v1165
      %v1167 = vpop.f32.mrf.mxu0
      %1168 = vmatprep.mubr.bf16.mxu0 0
      %1169 = vmatmul.mubr.bf16.gmra.mxu0 %v986
      %v1170 = vpop.f32.mrf.mxu0
      %v1171 = vadd.f32 0.0, %v1170
      %v1172 = vpop.f32.mrf.mxu0
      %v1173 = vpop.f32.mrf.mxu0
      %v1174 = vadd.f32 0.0, %v1173
      %v1175 = vpop.f32.mrf.mxu0
      %1176 = vmatprep.mubr.bf16.mxu0 0
      %1177 = vmatmul.mubr.bf16.gmra.mxu0 %v987
      %v1178 = vpop.f32.mrf.mxu0
      %v1179 = vadd.f32 0.0, %v1178
      %v1180 = vpop.f32.mrf.mxu0
      %v1181 = vpop.f32.mrf.mxu0
      %v1182 = vadd.f32 0.0, %v1181
      %v1183 = vpop.f32.mrf.mxu0
      %1184 = vmatprep.mubr.bf16.mxu0 0
      %1185 = vmatmul.mubr.bf16.gmra.mxu0 %v988
      %v1186 = vpop.f32.mrf.mxu0
      %v1187 = vadd.f32 0.0, %v1186
      %v1188 = vpop.f32.mrf.mxu0
      %v1189 = vpop.f32.mrf.mxu0
      %v1190 = vadd.f32 0.0, %v1189
      %v1191 = vpop.f32.mrf.mxu0
      %1192 = vmatprep.mubr.bf16.mxu0 0
      %1193 = vmatmul.mubr.bf16.gmra.mxu0 %v989
      %v1194 = vpop.f32.mrf.mxu0
      %v1195 = vadd.f32 0.0, %v1194
      %v1196 = vpop.f32.mrf.mxu0
      %v1197 = vpop.f32.mrf.mxu0
      %v1198 = vadd.f32 0.0, %v1197
      %v1199 = vpop.f32.mrf.mxu0
      %1200 = vmatprep.mubr.bf16.mxu0 0
      %1201 = vmatmul.mubr.bf16.gmra.mxu0 %v990
      %v1202 = vpop.f32.mrf.mxu0
      %v1203 = vadd.f32 0.0, %v1202
      %v1204 = vpop.f32.mrf.mxu0
      %v1205 = vpop.f32.mrf.mxu0
      %v1206 = vadd.f32 0.0, %v1205
      %v1207 = vpop.f32.mrf.mxu0
      %1208 = vmatprep.mubr.bf16.mxu0 0
      %1209 = vmatmul.mubr.bf16.gmra.mxu0 %v991
      %v1210 = vpop.f32.mrf.mxu0
      %v1211 = vadd.f32 0.0, %v1210
      %v1212 = vpop.f32.mrf.mxu0
      %v1213 = vpop.f32.mrf.mxu0
      %v1214 = vadd.f32 0.0, %v1213
      %v1215 = vpop.f32.mrf.mxu0
      %1216 = vdwg.mxu0
      %v1217 = vadd.f32 %v818, %v1091
      %v1218 = vadd.f32 %v821, %v1094
      %v1219 = vadd.f32 %v826, %v1099
      %v1220 = vadd.f32 %v829, %v1102
      %v1221 = vadd.f32 %v834, %v1107
      %v1222 = vadd.f32 %v837, %v1110
      %v1223 = vadd.f32 %v842, %v1115
      %v1224 = vadd.f32 %v845, %v1118
      %v1225 = vadd.f32 %v850, %v1123
      %v1226 = vadd.f32 %v853, %v1126
      %v1227 = vadd.f32 %v858, %v1131
      %v1228 = vadd.f32 %v861, %v1134
      %v1229 = vadd.f32 %v866, %v1139
      %v1230 = vadd.f32 %v869, %v1142
      %v1231 = vadd.f32 %v874, %v1147
      %v1232 = vadd.f32 %v877, %v1150
      %v1233 = vadd.f32 %v882, %v1155
      %v1234 = vadd.f32 %v885, %v1158
      %v1235 = vadd.f32 %v890, %v1163
      %v1236 = vadd.f32 %v893, %v1166
      %v1237 = vadd.f32 %v898, %v1171
      %v1238 = vadd.f32 %v901, %v1174
      %v1239 = vadd.f32 %v906, %v1179
      %v1240 = vadd.f32 %v909, %v1182
      %v1241 = vadd.f32 %v914, %v1187
      %v1242 = vadd.f32 %v917, %v1190
      %v1243 = vadd.f32 %v922, %v1195
      %v1244 = vadd.f32 %v925, %v1198
      %v1245 = vadd.f32 %v930, %v1203
      %v1246 = vadd.f32 %v933, %v1206
      %v1247 = vadd.f32 %v938, %v1211
      %v1248 = vadd.f32 %v941, %v1214
      %v1249 = vld [vmem:[#allocation2 + $0x12] sm:$0xff]
      %v1250 = vld [vmem:[#allocation2 + $0x1a] sm:$0xff]
      %v1251 = vld [vmem:[#allocation2 + $0x22] sm:$0xff]
      %v1252 = vld [vmem:[#allocation2 + $0x2a] sm:$0xff]
      %v1253 = vld [vmem:[#allocation2 + $0x32] sm:$0xff]
      %v1254 = vld [vmem:[#allocation2 + $0x3a] sm:$0xff]
      %v1255 = vld [vmem:[#allocation2 + $0x42] sm:$0xff]
      %v1256 = vld [vmem:[#allocation2 + $0x4a] sm:$0xff]
      %v1257 = vld [vmem:[#allocation2 + $0x52] sm:$0xff]
      %v1258 = vld [vmem:[#allocation2 + $0x5a] sm:$0xff]
      %v1259 = vld [vmem:[#allocation2 + $0x62] sm:$0xff]
      %v1260 = vld [vmem:[#allocation2 + $0x6a] sm:$0xff]
      %v1261 = vld [vmem:[#allocation2 + $0x72] sm:$0xff]
      %v1262 = vld [vmem:[#allocation2 + $0x7a] sm:$0xff]
      %v1263 = vld [vmem:[#allocation2 + $0x82] sm:$0xff]
      %v1264 = vld [vmem:[#allocation2 + $0x8a] sm:$0xff]
      %v1265 = vld [vmem:[#allocation2 + $0x92] sm:$0xff]
      %v1266 = vld [vmem:[#allocation2 + $0x9a] sm:$0xff]
      %v1267 = vld [vmem:[#allocation2 + $0xa2] sm:$0xff]
      %v1268 = vld [vmem:[#allocation2 + $0xaa] sm:$0xff]
      %v1269 = vld [vmem:[#allocation2 + $0xb2] sm:$0xff]
      %v1270 = vld [vmem:[#allocation2 + $0xba] sm:$0xff]
      %v1271 = vld [vmem:[#allocation2 + $0xc2] sm:$0xff]
      %v1272 = vld [vmem:[#allocation2 + $0xca] sm:$0xff]
      %v1273 = vld [vmem:[#allocation2 + $0xd2] sm:$0xff]
      %v1274 = vld [vmem:[#allocation2 + $0xda] sm:$0xff]
      %v1275 = vld [vmem:[#allocation2 + $0xe2] sm:$0xff]
      %v1276 = vld [vmem:[#allocation2 + $0xea] sm:$0xff]
      %v1277 = vld [vmem:[#allocation2 + $0xf2] sm:$0xff]
      %v1278 = vld [vmem:[#allocation2 + $0xfa] sm:$0xff]
      %v1279 = vld [vmem:[#allocation2 + $0x102] sm:$0xff]
      %v1280 = vld [vmem:[#allocation2 + $0x10a] sm:$0xff]
      %v1281 = vpack.c.bf16 %v1250, %v1249
      %v1282 = vpack.c.bf16 %v1252, %v1251
      %v1283 = vpack.c.bf16 %v1254, %v1253
      %v1284 = vpack.c.bf16 %v1256, %v1255
      %v1285 = vpack.c.bf16 %v1258, %v1257
      %v1286 = vpack.c.bf16 %v1260, %v1259
      %v1287 = vpack.c.bf16 %v1262, %v1261
      %v1288 = vpack.c.bf16 %v1264, %v1263
      %v1289 = vpack.c.bf16 %v1266, %v1265
      %v1290 = vpack.c.bf16 %v1268, %v1267
      %v1291 = vpack.c.bf16 %v1270, %v1269
      %v1292 = vpack.c.bf16 %v1272, %v1271
      %v1293 = vpack.c.bf16 %v1274, %v1273
      %v1294 = vpack.c.bf16 %v1276, %v1275
      %v1295 = vpack.c.bf16 %v1278, %v1277
      %v1296 = vpack.c.bf16 %v1280, %v1279
      %v1297 = vld [vmem:[%s2 + $0xc0] sm:$0xf]
      %v1298 = vld [vmem:[%s2 + $0xc4] sm:$0xf]
      %v1299 = vld [vmem:[%s2 + $0xc8] sm:$0xf]
      %v1300 = vld [vmem:[%s2 + $0xcc] sm:$0xf]
      %v1301 = vld [vmem:[%s2 + $0xd0] sm:$0xf]
      %v1302 = vld [vmem:[%s2 + $0xd4] sm:$0xf]
      %v1303 = vld [vmem:[%s2 + $0xd8] sm:$0xf]
      %v1304 = vld [vmem:[%s2 + $0xdc] sm:$0xf]
      %v1305 = vld [vmem:[%s2 + $0xe0] sm:$0xf]
      %v1306 = vld [vmem:[%s2 + $0xe4] sm:$0xf]
      %v1307 = vld [vmem:[%s2 + $0xe8] sm:$0xf]
      %v1308 = vld [vmem:[%s2 + $0xec] sm:$0xf]
      %v1309 = vld [vmem:[%s2 + $0xf0] sm:$0xf]
      %v1310 = vld [vmem:[%s2 + $0xf4] sm:$0xf]
      %v1311 = vld [vmem:[%s2 + $0xf8] sm:$0xf]
      %v1312 = vld [vmem:[%s2 + $0xfc] sm:$0xf]
      %v1329 = vunpack.c.l.b16 %v1297
      %v1330 = vunpack.c.l.b16 %v1298
      %v1331 = vunpack.c.l.b16 %v1299
      %v1332 = vunpack.c.l.b16 %v1300
      %v1333 = vunpack.c.l.b16 %v1301
      %v1334 = vunpack.c.l.b16 %v1302
      %v1335 = vunpack.c.l.b16 %v1303
      %v1336 = vunpack.c.l.b16 %v1304
      %v1337 = vunpack.c.l.b16 %v1305
      %v1338 = vunpack.c.l.b16 %v1306
      %v1339 = vunpack.c.l.b16 %v1307
      %v1340 = vunpack.c.l.b16 %v1308
      %v1341 = vunpack.c.l.b16 %v1309
      %v1342 = vunpack.c.l.b16 %v1310
      %v1343 = vunpack.c.l.b16 %v1311
      %v1344 = vunpack.c.l.b16 %v1312
      %v1345 = vpack.c.b16 %v1330, %v1329
      %v1346 = vpack.c.b16 %v1332, %v1331
      %v1347 = vpack.c.b16 %v1334, %v1333
      %v1348 = vpack.c.b16 %v1336, %v1335
      %v1349 = vpack.c.b16 %v1338, %v1337
      %v1350 = vpack.c.b16 %v1340, %v1339
      %v1351 = vpack.c.b16 %v1342, %v1341
      %v1352 = vpack.c.b16 %v1344, %v1343
      %1361 = vmatprep.subr.bf16.mxu0 0
      %1362 = vmatpush1.bf16.msra.mxu0 %v1352
      %1363 = vmatprep.subr.bf16.mxu0 0
      %1364 = vmatpush1.bf16.msra.mxu0 %v1351
      %1365 = vmatprep.subr.bf16.mxu0 0
      %1366 = vmatpush1.bf16.msra.mxu0 %v1350
      %1367 = vmatprep.subr.bf16.mxu0 0
      %1368 = vmatpush1.bf16.msra.mxu0 %v1349
      %1369 = vmatprep.subr.bf16.mxu0 0
      %1370 = vmatpush1.bf16.msra.mxu0 %v1348
      %1371 = vmatprep.subr.bf16.mxu0 0
      %1372 = vmatpush1.bf16.msra.mxu0 %v1347
      %1373 = vmatprep.subr.bf16.mxu0 0
      %1374 = vmatpush1.bf16.msra.mxu0 %v1346
      %1375 = vmatprep.subr.bf16.mxu0 0
      %1376 = vmatpush1.bf16.msra.mxu0 %v1345
      %1377 = vmatprep.subr.bf16.mxu0 0
      %1378 = vmatpush2.bf16.msra.mxu0 0
      %1379 = vmatprep.subr.bf16.mxu0 0
      %1380 = vmatpush2.bf16.msra.mxu0 0
      %1381 = vmatprep.subr.bf16.mxu0 0
      %1382 = vmatpush2.bf16.msra.mxu0 0
      %1383 = vmatprep.subr.bf16.mxu0 0
      %1384 = vmatpush2.bf16.msra.mxu0 0
      %1385 = vmatprep.subr.bf16.mxu0 0
      %1386 = vmatpush2.bf16.msra.mxu0 0
      %1387 = vmatprep.subr.bf16.mxu0 0
      %1388 = vmatpush2.bf16.msra.mxu0 0
      %1389 = vmatprep.subr.bf16.mxu0 0
      %1390 = vmatpush2.bf16.msra.mxu0 0
      %1391 = vmatprep.subr.bf16.mxu0 0
      %1392 = vmatpush2.bf16.msra.mxu0 0
      %1393 = vmatprep.mubr.bf16.mxu0 0
      %1394 = vmatmul.mubr.bf16.gmra.mxu0 %v1281
      %v1395 = vpop.f32.mrf.mxu0
      %v1396 = vadd.f32 0.0, %v1395
      %v1397 = vpop.f32.mrf.mxu0
      %v1398 = vpop.f32.mrf.mxu0
      %v1399 = vadd.f32 0.0, %v1398
      %v1400 = vpop.f32.mrf.mxu0
      %1401 = vmatprep.mubr.bf16.mxu0 0
      %1402 = vmatmul.mubr.bf16.gmra.mxu0 %v1282
      %v1403 = vpop.f32.mrf.mxu0
      %v1404 = vadd.f32 0.0, %v1403
      %v1405 = vpop.f32.mrf.mxu0
      %v1406 = vpop.f32.mrf.mxu0
      %v1407 = vadd.f32 0.0, %v1406
      %v1408 = vpop.f32.mrf.mxu0
      %1409 = vmatprep.mubr.bf16.mxu0 0
      %1410 = vmatmul.mubr.bf16.gmra.mxu0 %v1283
      %v1411 = vpop.f32.mrf.mxu0
      %v1412 = vadd.f32 0.0, %v1411
      %v1413 = vpop.f32.mrf.mxu0
      %v1414 = vpop.f32.mrf.mxu0
      %v1415 = vadd.f32 0.0, %v1414
      %v1416 = vpop.f32.mrf.mxu0
      %1417 = vmatprep.mubr.bf16.mxu0 0
      %1418 = vmatmul.mubr.bf16.gmra.mxu0 %v1284
      %v1419 = vpop.f32.mrf.mxu0
      %v1420 = vadd.f32 0.0, %v1419
      %v1421 = vpop.f32.mrf.mxu0
      %v1422 = vpop.f32.mrf.mxu0
      %v1423 = vadd.f32 0.0, %v1422
      %v1424 = vpop.f32.mrf.mxu0
      %1425 = vmatprep.mubr.bf16.mxu0 0
      %1426 = vmatmul.mubr.bf16.gmra.mxu0 %v1285
      %v1427 = vpop.f32.mrf.mxu0
      %v1428 = vadd.f32 0.0, %v1427
      %v1429 = vpop.f32.mrf.mxu0
      %v1430 = vpop.f32.mrf.mxu0
      %v1431 = vadd.f32 0.0, %v1430
      %v1432 = vpop.f32.mrf.mxu0
      %1433 = vmatprep.mubr.bf16.mxu0 0
      %1434 = vmatmul.mubr.bf16.gmra.mxu0 %v1286
      %v1435 = vpop.f32.mrf.mxu0
      %v1436 = vadd.f32 0.0, %v1435
      %v1437 = vpop.f32.mrf.mxu0
      %v1438 = vpop.f32.mrf.mxu0
      %v1439 = vadd.f32 0.0, %v1438
      %v1440 = vpop.f32.mrf.mxu0
      %1441 = vmatprep.mubr.bf16.mxu0 0
      %1442 = vmatmul.mubr.bf16.gmra.mxu0 %v1287
      %v1443 = vpop.f32.mrf.mxu0
      %v1444 = vadd.f32 0.0, %v1443
      %v1445 = vpop.f32.mrf.mxu0
      %v1446 = vpop.f32.mrf.mxu0
      %v1447 = vadd.f32 0.0, %v1446
      %v1448 = vpop.f32.mrf.mxu0
      %1449 = vmatprep.mubr.bf16.mxu0 0
      %1450 = vmatmul.mubr.bf16.gmra.mxu0 %v1288
      %v1451 = vpop.f32.mrf.mxu0
      %v1452 = vadd.f32 0.0, %v1451
      %v1453 = vpop.f32.mrf.mxu0
      %v1454 = vpop.f32.mrf.mxu0
      %v1455 = vadd.f32 0.0, %v1454
      %v1456 = vpop.f32.mrf.mxu0
      %1457 = vmatprep.mubr.bf16.mxu0 0
      %1458 = vmatmul.mubr.bf16.gmra.mxu0 %v1289
      %v1459 = vpop.f32.mrf.mxu0
      %v1460 = vadd.f32 0.0, %v1459
      %v1461 = vpop.f32.mrf.mxu0
      %v1462 = vpop.f32.mrf.mxu0
      %v1463 = vadd.f32 0.0, %v1462
      %v1464 = vpop.f32.mrf.mxu0
      %1465 = vmatprep.mubr.bf16.mxu0 0
      %1466 = vmatmul.mubr.bf16.gmra.mxu0 %v1290
      %v1467 = vpop.f32.mrf.mxu0
      %v1468 = vadd.f32 0.0, %v1467
      %v1469 = vpop.f32.mrf.mxu0
      %v1470 = vpop.f32.mrf.mxu0
      %v1471 = vadd.f32 0.0, %v1470
      %v1472 = vpop.f32.mrf.mxu0
      %1473 = vmatprep.mubr.bf16.mxu0 0
      %1474 = vmatmul.mubr.bf16.gmra.mxu0 %v1291
      %v1475 = vpop.f32.mrf.mxu0
      %v1476 = vadd.f32 0.0, %v1475
      %v1477 = vpop.f32.mrf.mxu0
      %v1478 = vpop.f32.mrf.mxu0
      %v1479 = vadd.f32 0.0, %v1478
      %v1480 = vpop.f32.mrf.mxu0
      %1481 = vmatprep.mubr.bf16.mxu0 0
      %1482 = vmatmul.mubr.bf16.gmra.mxu0 %v1292
      %v1483 = vpop.f32.mrf.mxu0
      %v1484 = vadd.f32 0.0, %v1483
      %v1485 = vpop.f32.mrf.mxu0
      %v1486 = vpop.f32.mrf.mxu0
      %v1487 = vadd.f32 0.0, %v1486
      %v1488 = vpop.f32.mrf.mxu0
      %1489 = vmatprep.mubr.bf16.mxu0 0
      %1490 = vmatmul.mubr.bf16.gmra.mxu0 %v1293
      %v1491 = vpop.f32.mrf.mxu0
      %v1492 = vadd.f32 0.0, %v1491
      %v1493 = vpop.f32.mrf.mxu0
      %v1494 = vpop.f32.mrf.mxu0
      %v1495 = vadd.f32 0.0, %v1494
      %v1496 = vpop.f32.mrf.mxu0
      %1497 = vmatprep.mubr.bf16.mxu0 0
      %1498 = vmatmul.mubr.bf16.gmra.mxu0 %v1294
      %v1499 = vpop.f32.mrf.mxu0
      %v1500 = vadd.f32 0.0, %v1499
      %v1501 = vpop.f32.mrf.mxu0
      %v1502 = vpop.f32.mrf.mxu0
      %v1503 = vadd.f32 0.0, %v1502
      %v1504 = vpop.f32.mrf.mxu0
      %1505 = vmatprep.mubr.bf16.mxu0 0
      %1506 = vmatmul.mubr.bf16.gmra.mxu0 %v1295
      %v1507 = vpop.f32.mrf.mxu0
      %v1508 = vadd.f32 0.0, %v1507
      %v1509 = vpop.f32.mrf.mxu0
      %v1510 = vpop.f32.mrf.mxu0
      %v1511 = vadd.f32 0.0, %v1510
      %v1512 = vpop.f32.mrf.mxu0
      %1513 = vmatprep.mubr.bf16.mxu0 0
      %1514 = vmatmul.mubr.bf16.gmra.mxu0 %v1296
      %v1515 = vpop.f32.mrf.mxu0
      %v1516 = vadd.f32 0.0, %v1515
      %v1517 = vpop.f32.mrf.mxu0
      %v1518 = vpop.f32.mrf.mxu0
      %v1519 = vadd.f32 0.0, %v1518
      %v1520 = vpop.f32.mrf.mxu0
      %1521 = vdwg.mxu0
      %v1522 = vadd.f32 %v1217, %v1396
      %v1523 = vadd.f32 %v1218, %v1399
      %v1524 = vadd.f32 %v1219, %v1404
      %v1525 = vadd.f32 %v1220, %v1407
      %v1526 = vadd.f32 %v1221, %v1412
      %v1527 = vadd.f32 %v1222, %v1415
      %v1528 = vadd.f32 %v1223, %v1420
      %v1529 = vadd.f32 %v1224, %v1423
      %v1530 = vadd.f32 %v1225, %v1428
      %v1531 = vadd.f32 %v1226, %v1431
      %v1532 = vadd.f32 %v1227, %v1436
      %v1533 = vadd.f32 %v1228, %v1439
      %v1534 = vadd.f32 %v1229, %v1444
      %v1535 = vadd.f32 %v1230, %v1447
      %v1536 = vadd.f32 %v1231, %v1452
      %v1537 = vadd.f32 %v1232, %v1455
      %v1538 = vadd.f32 %v1233, %v1460
      %v1539 = vadd.f32 %v1234, %v1463
      %v1540 = vadd.f32 %v1235, %v1468
      %v1541 = vadd.f32 %v1236, %v1471
      %v1542 = vadd.f32 %v1237, %v1476
      %v1543 = vadd.f32 %v1238, %v1479
      %v1544 = vadd.f32 %v1239, %v1484
      %v1545 = vadd.f32 %v1240, %v1487
      %v1546 = vadd.f32 %v1241, %v1492
      %v1547 = vadd.f32 %v1242, %v1495
      %v1548 = vadd.f32 %v1243, %v1500
      %v1549 = vadd.f32 %v1244, %v1503
      %v1550 = vadd.f32 %v1245, %v1508
      %v1551 = vadd.f32 %v1246, %v1511
      %v1552 = vadd.f32 %v1247, %v1516
      %v1553 = vadd.f32 %v1248, %v1519
      %v1554 = vld [vmem:[#allocation2 + $0x13] sm:$0xff]
      %v1555 = vld [vmem:[#allocation2 + $0x1b] sm:$0xff]
      %v1556 = vld [vmem:[#allocation2 + $0x23] sm:$0xff]
      %v1557 = vld [vmem:[#allocation2 + $0x2b] sm:$0xff]
      %v1558 = vld [vmem:[#allocation2 + $0x33] sm:$0xff]
      %v1559 = vld [vmem:[#allocation2 + $0x3b] sm:$0xff]
      %v1560 = vld [vmem:[#allocation2 + $0x43] sm:$0xff]
      %v1561 = vld [vmem:[#allocation2 + $0x4b] sm:$0xff]
      %v1562 = vld [vmem:[#allocation2 + $0x53] sm:$0xff]
      %v1563 = vld [vmem:[#allocation2 + $0x5b] sm:$0xff]
      %v1564 = vld [vmem:[#allocation2 + $0x63] sm:$0xff]
      %v1565 = vld [vmem:[#allocation2 + $0x6b] sm:$0xff]
      %v1566 = vld [vmem:[#allocation2 + $0x73] sm:$0xff]
      %v1567 = vld [vmem:[#allocation2 + $0x7b] sm:$0xff]
      %v1568 = vld [vmem:[#allocation2 + $0x83] sm:$0xff]
      %v1569 = vld [vmem:[#allocation2 + $0x8b] sm:$0xff]
      %v1570 = vld [vmem:[#allocation2 + $0x93] sm:$0xff]
      %v1571 = vld [vmem:[#allocation2 + $0x9b] sm:$0xff]
      %v1572 = vld [vmem:[#allocation2 + $0xa3] sm:$0xff]
      %v1573 = vld [vmem:[#allocation2 + $0xab] sm:$0xff]
      %v1574 = vld [vmem:[#allocation2 + $0xb3] sm:$0xff]
      %v1575 = vld [vmem:[#allocation2 + $0xbb] sm:$0xff]
      %v1576 = vld [vmem:[#allocation2 + $0xc3] sm:$0xff]
      %v1577 = vld [vmem:[#allocation2 + $0xcb] sm:$0xff]
      %v1578 = vld [vmem:[#allocation2 + $0xd3] sm:$0xff]
      %v1579 = vld [vmem:[#allocation2 + $0xdb] sm:$0xff]
      %v1580 = vld [vmem:[#allocation2 + $0xe3] sm:$0xff]
      %v1581 = vld [vmem:[#allocation2 + $0xeb] sm:$0xff]
      %v1582 = vld [vmem:[#allocation2 + $0xf3] sm:$0xff]
      %v1583 = vld [vmem:[#allocation2 + $0xfb] sm:$0xff]
      %v1584 = vld [vmem:[#allocation2 + $0x103] sm:$0xff]
      %v1585 = vld [vmem:[#allocation2 + $0x10b] sm:$0xff]
      %v1586 = vpack.c.bf16 %v1555, %v1554
      %v1587 = vpack.c.bf16 %v1557, %v1556
      %v1588 = vpack.c.bf16 %v1559, %v1558
      %v1589 = vpack.c.bf16 %v1561, %v1560
      %v1590 = vpack.c.bf16 %v1563, %v1562
      %v1591 = vpack.c.bf16 %v1565, %v1564
      %v1592 = vpack.c.bf16 %v1567, %v1566
      %v1593 = vpack.c.bf16 %v1569, %v1568
      %v1594 = vpack.c.bf16 %v1571, %v1570
      %v1595 = vpack.c.bf16 %v1573, %v1572
      %v1596 = vpack.c.bf16 %v1575, %v1574
      %v1597 = vpack.c.bf16 %v1577, %v1576
      %v1598 = vpack.c.bf16 %v1579, %v1578
      %v1599 = vpack.c.bf16 %v1581, %v1580
      %v1600 = vpack.c.bf16 %v1583, %v1582
      %v1601 = vpack.c.bf16 %v1585, %v1584
      %v1602 = vld [vmem:[%s2 + $0x100] sm:$0xf]
      %v1603 = vld [vmem:[%s2 + $0x104] sm:$0xf]
      %v1604 = vld [vmem:[%s2 + $0x108] sm:$0xf]
      %v1605 = vld [vmem:[%s2 + $0x10c] sm:$0xf]
      %v1606 = vld [vmem:[%s2 + $0x110] sm:$0xf]
      %v1607 = vld [vmem:[%s2 + $0x114] sm:$0xf]
      %v1608 = vld [vmem:[%s2 + $0x118] sm:$0xf]
      %v1609 = vld [vmem:[%s2 + $0x11c] sm:$0xf]
      %v1610 = vld [vmem:[%s2 + $0x120] sm:$0xf]
      %v1611 = vld [vmem:[%s2 + $0x124] sm:$0xf]
      %v1612 = vld [vmem:[%s2 + $0x128] sm:$0xf]
      %v1613 = vld [vmem:[%s2 + $0x12c] sm:$0xf]
      %v1614 = vld [vmem:[%s2 + $0x130] sm:$0xf]
      %v1615 = vld [vmem:[%s2 + $0x134] sm:$0xf]
      %v1616 = vld [vmem:[%s2 + $0x138] sm:$0xf]
      %v1617 = vld [vmem:[%s2 + $0x13c] sm:$0xf]
      %v1634 = vunpack.c.l.b16 %v1602
      %v1635 = vunpack.c.l.b16 %v1603
      %v1636 = vunpack.c.l.b16 %v1604
      %v1637 = vunpack.c.l.b16 %v1605
      %v1638 = vunpack.c.l.b16 %v1606
      %v1639 = vunpack.c.l.b16 %v1607
      %v1640 = vunpack.c.l.b16 %v1608
      %v1641 = vunpack.c.l.b16 %v1609
      %v1642 = vunpack.c.l.b16 %v1610
      %v1643 = vunpack.c.l.b16 %v1611
      %v1644 = vunpack.c.l.b16 %v1612
      %v1645 = vunpack.c.l.b16 %v1613
      %v1646 = vunpack.c.l.b16 %v1614
      %v1647 = vunpack.c.l.b16 %v1615
      %v1648 = vunpack.c.l.b16 %v1616
      %v1649 = vunpack.c.l.b16 %v1617
      %v1650 = vpack.c.b16 %v1635, %v1634
      %v1651 = vpack.c.b16 %v1637, %v1636
      %v1652 = vpack.c.b16 %v1639, %v1638
      %v1653 = vpack.c.b16 %v1641, %v1640
      %v1654 = vpack.c.b16 %v1643, %v1642
      %v1655 = vpack.c.b16 %v1645, %v1644
      %v1656 = vpack.c.b16 %v1647, %v1646
      %v1657 = vpack.c.b16 %v1649, %v1648
      %1666 = vmatprep.subr.bf16.mxu0 0
      %1667 = vmatpush1.bf16.msra.mxu0 %v1657
      %1668 = vmatprep.subr.bf16.mxu0 0
      %1669 = vmatpush1.bf16.msra.mxu0 %v1656
      %1670 = vmatprep.subr.bf16.mxu0 0
      %1671 = vmatpush1.bf16.msra.mxu0 %v1655
      %1672 = vmatprep.subr.bf16.mxu0 0
      %1673 = vmatpush1.bf16.msra.mxu0 %v1654
      %1674 = vmatprep.subr.bf16.mxu0 0
      %1675 = vmatpush1.bf16.msra.mxu0 %v1653
      %1676 = vmatprep.subr.bf16.mxu0 0
      %1677 = vmatpush1.bf16.msra.mxu0 %v1652
      %1678 = vmatprep.subr.bf16.mxu0 0
      %1679 = vmatpush1.bf16.msra.mxu0 %v1651
      %1680 = vmatprep.subr.bf16.mxu0 0
      %1681 = vmatpush1.bf16.msra.mxu0 %v1650
      %1682 = vmatprep.subr.bf16.mxu0 0
      %1683 = vmatpush2.bf16.msra.mxu0 0
      %1684 = vmatprep.subr.bf16.mxu0 0
      %1685 = vmatpush2.bf16.msra.mxu0 0
      %1686 = vmatprep.subr.bf16.mxu0 0
      %1687 = vmatpush2.bf16.msra.mxu0 0
      %1688 = vmatprep.subr.bf16.mxu0 0
      %1689 = vmatpush2.bf16.msra.mxu0 0
      %1690 = vmatprep.subr.bf16.mxu0 0
      %1691 = vmatpush2.bf16.msra.mxu0 0
      %1692 = vmatprep.subr.bf16.mxu0 0
      %1693 = vmatpush2.bf16.msra.mxu0 0
      %1694 = vmatprep.subr.bf16.mxu0 0
      %1695 = vmatpush2.bf16.msra.mxu0 0
      %1696 = vmatprep.subr.bf16.mxu0 0
      %1697 = vmatpush2.bf16.msra.mxu0 0
      %1698 = vmatprep.mubr.bf16.mxu0 0
      %1699 = vmatmul.mubr.bf16.gmra.mxu0 %v1586
      %v1700 = vpop.f32.mrf.mxu0
      %v1701 = vadd.f32 0.0, %v1700
      %v1702 = vpop.f32.mrf.mxu0
      %v1703 = vpop.f32.mrf.mxu0
      %v1704 = vadd.f32 0.0, %v1703
      %v1705 = vpop.f32.mrf.mxu0
      %1706 = vmatprep.mubr.bf16.mxu0 0
      %1707 = vmatmul.mubr.bf16.gmra.mxu0 %v1587
      %v1708 = vpop.f32.mrf.mxu0
      %v1709 = vadd.f32 0.0, %v1708
      %v1710 = vpop.f32.mrf.mxu0
      %v1711 = vpop.f32.mrf.mxu0
      %v1712 = vadd.f32 0.0, %v1711
      %v1713 = vpop.f32.mrf.mxu0
      %1714 = vmatprep.mubr.bf16.mxu0 0
      %1715 = vmatmul.mubr.bf16.gmra.mxu0 %v1588
      %v1716 = vpop.f32.mrf.mxu0
      %v1717 = vadd.f32 0.0, %v1716
      %v1718 = vpop.f32.mrf.mxu0
      %v1719 = vpop.f32.mrf.mxu0
      %v1720 = vadd.f32 0.0, %v1719
      %v1721 = vpop.f32.mrf.mxu0
      %1722 = vmatprep.mubr.bf16.mxu0 0
      %1723 = vmatmul.mubr.bf16.gmra.mxu0 %v1589
      %v1724 = vpop.f32.mrf.mxu0
      %v1725 = vadd.f32 0.0, %v1724
      %v1726 = vpop.f32.mrf.mxu0
      %v1727 = vpop.f32.mrf.mxu0
      %v1728 = vadd.f32 0.0, %v1727
      %v1729 = vpop.f32.mrf.mxu0
      %1730 = vmatprep.mubr.bf16.mxu0 0
      %1731 = vmatmul.mubr.bf16.gmra.mxu0 %v1590
      %v1732 = vpop.f32.mrf.mxu0
      %v1733 = vadd.f32 0.0, %v1732
      %v1734 = vpop.f32.mrf.mxu0
      %v1735 = vpop.f32.mrf.mxu0
      %v1736 = vadd.f32 0.0, %v1735
      %v1737 = vpop.f32.mrf.mxu0
      %1738 = vmatprep.mubr.bf16.mxu0 0
      %1739 = vmatmul.mubr.bf16.gmra.mxu0 %v1591
      %v1740 = vpop.f32.mrf.mxu0
      %v1741 = vadd.f32 0.0, %v1740
      %v1742 = vpop.f32.mrf.mxu0
      %v1743 = vpop.f32.mrf.mxu0
      %v1744 = vadd.f32 0.0, %v1743
      %v1745 = vpop.f32.mrf.mxu0
      %1746 = vmatprep.mubr.bf16.mxu0 0
      %1747 = vmatmul.mubr.bf16.gmra.mxu0 %v1592
      %v1748 = vpop.f32.mrf.mxu0
      %v1749 = vadd.f32 0.0, %v1748
      %v1750 = vpop.f32.mrf.mxu0
      %v1751 = vpop.f32.mrf.mxu0
      %v1752 = vadd.f32 0.0, %v1751
      %v1753 = vpop.f32.mrf.mxu0
      %1754 = vmatprep.mubr.bf16.mxu0 0
      %1755 = vmatmul.mubr.bf16.gmra.mxu0 %v1593
      %v1756 = vpop.f32.mrf.mxu0
      %v1757 = vadd.f32 0.0, %v1756
      %v1758 = vpop.f32.mrf.mxu0
      %v1759 = vpop.f32.mrf.mxu0
      %v1760 = vadd.f32 0.0, %v1759
      %v1761 = vpop.f32.mrf.mxu0
      %1762 = vmatprep.mubr.bf16.mxu0 0
      %1763 = vmatmul.mubr.bf16.gmra.mxu0 %v1594
      %v1764 = vpop.f32.mrf.mxu0
      %v1765 = vadd.f32 0.0, %v1764
      %v1766 = vpop.f32.mrf.mxu0
      %v1767 = vpop.f32.mrf.mxu0
      %v1768 = vadd.f32 0.0, %v1767
      %v1769 = vpop.f32.mrf.mxu0
      %1770 = vmatprep.mubr.bf16.mxu0 0
      %1771 = vmatmul.mubr.bf16.gmra.mxu0 %v1595
      %v1772 = vpop.f32.mrf.mxu0
      %v1773 = vadd.f32 0.0, %v1772
      %v1774 = vpop.f32.mrf.mxu0
      %v1775 = vpop.f32.mrf.mxu0
      %v1776 = vadd.f32 0.0, %v1775
      %v1777 = vpop.f32.mrf.mxu0
      %1778 = vmatprep.mubr.bf16.mxu0 0
      %1779 = vmatmul.mubr.bf16.gmra.mxu0 %v1596
      %v1780 = vpop.f32.mrf.mxu0
      %v1781 = vadd.f32 0.0, %v1780
      %v1782 = vpop.f32.mrf.mxu0
      %v1783 = vpop.f32.mrf.mxu0
      %v1784 = vadd.f32 0.0, %v1783
      %v1785 = vpop.f32.mrf.mxu0
      %1786 = vmatprep.mubr.bf16.mxu0 0
      %1787 = vmatmul.mubr.bf16.gmra.mxu0 %v1597
      %v1788 = vpop.f32.mrf.mxu0
      %v1789 = vadd.f32 0.0, %v1788
      %v1790 = vpop.f32.mrf.mxu0
      %v1791 = vpop.f32.mrf.mxu0
      %v1792 = vadd.f32 0.0, %v1791
      %v1793 = vpop.f32.mrf.mxu0
      %1794 = vmatprep.mubr.bf16.mxu0 0
      %1795 = vmatmul.mubr.bf16.gmra.mxu0 %v1598
      %v1796 = vpop.f32.mrf.mxu0
      %v1797 = vadd.f32 0.0, %v1796
      %v1798 = vpop.f32.mrf.mxu0
      %v1799 = vpop.f32.mrf.mxu0
      %v1800 = vadd.f32 0.0, %v1799
      %v1801 = vpop.f32.mrf.mxu0
      %1802 = vmatprep.mubr.bf16.mxu0 0
      %1803 = vmatmul.mubr.bf16.gmra.mxu0 %v1599
      %v1804 = vpop.f32.mrf.mxu0
      %v1805 = vadd.f32 0.0, %v1804
      %v1806 = vpop.f32.mrf.mxu0
      %v1807 = vpop.f32.mrf.mxu0
      %v1808 = vadd.f32 0.0, %v1807
      %v1809 = vpop.f32.mrf.mxu0
      %1810 = vmatprep.mubr.bf16.mxu0 0
      %1811 = vmatmul.mubr.bf16.gmra.mxu0 %v1600
      %v1812 = vpop.f32.mrf.mxu0
      %v1813 = vadd.f32 0.0, %v1812
      %v1814 = vpop.f32.mrf.mxu0
      %v1815 = vpop.f32.mrf.mxu0
      %v1816 = vadd.f32 0.0, %v1815
      %v1817 = vpop.f32.mrf.mxu0
      %1818 = vmatprep.mubr.bf16.mxu0 0
      %1819 = vmatmul.mubr.bf16.gmra.mxu0 %v1601
      %v1820 = vpop.f32.mrf.mxu0
      %v1821 = vadd.f32 0.0, %v1820
      %v1822 = vpop.f32.mrf.mxu0
      %v1823 = vpop.f32.mrf.mxu0
      %v1824 = vadd.f32 0.0, %v1823
      %v1825 = vpop.f32.mrf.mxu0
      %1826 = vdwg.mxu0
      %v1827 = vadd.f32 %v1522, %v1701
      %v1828 = vadd.f32 %v1523, %v1704
      %v1829 = vadd.f32 %v1524, %v1709
      %v1830 = vadd.f32 %v1525, %v1712
      %v1831 = vadd.f32 %v1526, %v1717
      %v1832 = vadd.f32 %v1527, %v1720
      %v1833 = vadd.f32 %v1528, %v1725
      %v1834 = vadd.f32 %v1529, %v1728
      %v1835 = vadd.f32 %v1530, %v1733
      %v1836 = vadd.f32 %v1531, %v1736
      %v1837 = vadd.f32 %v1532, %v1741
      %v1838 = vadd.f32 %v1533, %v1744
      %v1839 = vadd.f32 %v1534, %v1749
      %v1840 = vadd.f32 %v1535, %v1752
      %v1841 = vadd.f32 %v1536, %v1757
      %v1842 = vadd.f32 %v1537, %v1760
      %v1843 = vadd.f32 %v1538, %v1765
      %v1844 = vadd.f32 %v1539, %v1768
      %v1845 = vadd.f32 %v1540, %v1773
      %v1846 = vadd.f32 %v1541, %v1776
      %v1847 = vadd.f32 %v1542, %v1781
      %v1848 = vadd.f32 %v1543, %v1784
      %v1849 = vadd.f32 %v1544, %v1789
      %v1850 = vadd.f32 %v1545, %v1792
      %v1851 = vadd.f32 %v1546, %v1797
      %v1852 = vadd.f32 %v1547, %v1800
      %v1853 = vadd.f32 %v1548, %v1805
      %v1854 = vadd.f32 %v1549, %v1808
      %v1855 = vadd.f32 %v1550, %v1813
      %v1856 = vadd.f32 %v1551, %v1816
      %v1857 = vadd.f32 %v1552, %v1821
      %v1858 = vadd.f32 %v1553, %v1824
      %v1859 = vld [vmem:[#allocation2 + $0x14] sm:$0xff]
      %v1860 = vld [vmem:[#allocation2 + $0x1c] sm:$0xff]
      %v1861 = vld [vmem:[#allocation2 + $0x24] sm:$0xff]
      %v1862 = vld [vmem:[#allocation2 + $0x2c] sm:$0xff]
      %v1863 = vld [vmem:[#allocation2 + $0x34] sm:$0xff]
      %v1864 = vld [vmem:[#allocation2 + $0x3c] sm:$0xff]
      %v1865 = vld [vmem:[#allocation2 + $0x44] sm:$0xff]
      %v1866 = vld [vmem:[#allocation2 + $0x4c] sm:$0xff]
      %v1867 = vld [vmem:[#allocation2 + $0x54] sm:$0xff]
      %v1868 = vld [vmem:[#allocation2 + $0x5c] sm:$0xff]
      %v1869 = vld [vmem:[#allocation2 + $0x64] sm:$0xff]
      %v1870 = vld [vmem:[#allocation2 + $0x6c] sm:$0xff]
      %v1871 = vld [vmem:[#allocation2 + $0x74] sm:$0xff]
      %v1872 = vld [vmem:[#allocation2 + $0x7c] sm:$0xff]
      %v1873 = vld [vmem:[#allocation2 + $0x84] sm:$0xff]
      %v1874 = vld [vmem:[#allocation2 + $0x8c] sm:$0xff]
      %v1875 = vld [vmem:[#allocation2 + $0x94] sm:$0xff]
      %v1876 = vld [vmem:[#allocation2 + $0x9c] sm:$0xff]
      %v1877 = vld [vmem:[#allocation2 + $0xa4] sm:$0xff]
      %v1878 = vld [vmem:[#allocation2 + $0xac] sm:$0xff]
      %v1879 = vld [vmem:[#allocation2 + $0xb4] sm:$0xff]
      %v1880 = vld [vmem:[#allocation2 + $0xbc] sm:$0xff]
      %v1881 = vld [vmem:[#allocation2 + $0xc4] sm:$0xff]
      %v1882 = vld [vmem:[#allocation2 + $0xcc] sm:$0xff]
      %v1883 = vld [vmem:[#allocation2 + $0xd4] sm:$0xff]
      %v1884 = vld [vmem:[#allocation2 + $0xdc] sm:$0xff]
      %v1885 = vld [vmem:[#allocation2 + $0xe4] sm:$0xff]
      %v1886 = vld [vmem:[#allocation2 + $0xec] sm:$0xff]
      %v1887 = vld [vmem:[#allocation2 + $0xf4] sm:$0xff]
      %v1888 = vld [vmem:[#allocation2 + $0xfc] sm:$0xff]
      %v1889 = vld [vmem:[#allocation2 + $0x104] sm:$0xff]
      %v1890 = vld [vmem:[#allocation2 + $0x10c] sm:$0xff]
      %v1891 = vpack.c.bf16 %v1860, %v1859
      %v1892 = vpack.c.bf16 %v1862, %v1861
      %v1893 = vpack.c.bf16 %v1864, %v1863
      %v1894 = vpack.c.bf16 %v1866, %v1865
      %v1895 = vpack.c.bf16 %v1868, %v1867
      %v1896 = vpack.c.bf16 %v1870, %v1869
      %v1897 = vpack.c.bf16 %v1872, %v1871
      %v1898 = vpack.c.bf16 %v1874, %v1873
      %v1899 = vpack.c.bf16 %v1876, %v1875
      %v1900 = vpack.c.bf16 %v1878, %v1877
      %v1901 = vpack.c.bf16 %v1880, %v1879
      %v1902 = vpack.c.bf16 %v1882, %v1881
      %v1903 = vpack.c.bf16 %v1884, %v1883
      %v1904 = vpack.c.bf16 %v1886, %v1885
      %v1905 = vpack.c.bf16 %v1888, %v1887
      %v1906 = vpack.c.bf16 %v1890, %v1889
      %v1907 = vld [vmem:[%s2 + $0x140] sm:$0xf]
      %v1908 = vld [vmem:[%s2 + $0x144] sm:$0xf]
      %v1909 = vld [vmem:[%s2 + $0x148] sm:$0xf]
      %v1910 = vld [vmem:[%s2 + $0x14c] sm:$0xf]
      %v1911 = vld [vmem:[%s2 + $0x150] sm:$0xf]
      %v1912 = vld [vmem:[%s2 + $0x154] sm:$0xf]
      %v1913 = vld [vmem:[%s2 + $0x158] sm:$0xf]
      %v1914 = vld [vmem:[%s2 + $0x15c] sm:$0xf]
      %v1915 = vld [vmem:[%s2 + $0x160] sm:$0xf]
      %v1916 = vld [vmem:[%s2 + $0x164] sm:$0xf]
      %v1917 = vld [vmem:[%s2 + $0x168] sm:$0xf]
      %v1918 = vld [vmem:[%s2 + $0x16c] sm:$0xf]
      %v1919 = vld [vmem:[%s2 + $0x170] sm:$0xf]
      %v1920 = vld [vmem:[%s2 + $0x174] sm:$0xf]
      %v1921 = vld [vmem:[%s2 + $0x178] sm:$0xf]
      %v1922 = vld [vmem:[%s2 + $0x17c] sm:$0xf]
      %v1939 = vunpack.c.l.b16 %v1907
      %v1940 = vunpack.c.l.b16 %v1908
      %v1941 = vunpack.c.l.b16 %v1909
      %v1942 = vunpack.c.l.b16 %v1910
      %v1943 = vunpack.c.l.b16 %v1911
      %v1944 = vunpack.c.l.b16 %v1912
      %v1945 = vunpack.c.l.b16 %v1913
      %v1946 = vunpack.c.l.b16 %v1914
      %v1947 = vunpack.c.l.b16 %v1915
      %v1948 = vunpack.c.l.b16 %v1916
      %v1949 = vunpack.c.l.b16 %v1917
      %v1950 = vunpack.c.l.b16 %v1918
      %v1951 = vunpack.c.l.b16 %v1919
      %v1952 = vunpack.c.l.b16 %v1920
      %v1953 = vunpack.c.l.b16 %v1921
      %v1954 = vunpack.c.l.b16 %v1922
      %v1955 = vpack.c.b16 %v1940, %v1939
      %v1956 = vpack.c.b16 %v1942, %v1941
      %v1957 = vpack.c.b16 %v1944, %v1943
      %v1958 = vpack.c.b16 %v1946, %v1945
      %v1959 = vpack.c.b16 %v1948, %v1947
      %v1960 = vpack.c.b16 %v1950, %v1949
      %v1961 = vpack.c.b16 %v1952, %v1951
      %v1962 = vpack.c.b16 %v1954, %v1953
      %1971 = vmatprep.subr.bf16.mxu0 0
      %1972 = vmatpush1.bf16.msra.mxu0 %v1962
      %1973 = vmatprep.subr.bf16.mxu0 0
      %1974 = vmatpush1.bf16.msra.mxu0 %v1961
      %1975 = vmatprep.subr.bf16.mxu0 0
      %1976 = vmatpush1.bf16.msra.mxu0 %v1960
      %1977 = vmatprep.subr.bf16.mxu0 0
      %1978 = vmatpush1.bf16.msra.mxu0 %v1959
      %1979 = vmatprep.subr.bf16.mxu0 0
      %1980 = vmatpush1.bf16.msra.mxu0 %v1958
      %1981 = vmatprep.subr.bf16.mxu0 0
      %1982 = vmatpush1.bf16.msra.mxu0 %v1957
      %1983 = vmatprep.subr.bf16.mxu0 0
      %1984 = vmatpush1.bf16.msra.mxu0 %v1956
      %1985 = vmatprep.subr.bf16.mxu0 0
      %1986 = vmatpush1.bf16.msra.mxu0 %v1955
      %1987 = vmatprep.subr.bf16.mxu0 0
      %1988 = vmatpush2.bf16.msra.mxu0 0
      %1989 = vmatprep.subr.bf16.mxu0 0
      %1990 = vmatpush2.bf16.msra.mxu0 0
      %1991 = vmatprep.subr.bf16.mxu0 0
      %1992 = vmatpush2.bf16.msra.mxu0 0
      %1993 = vmatprep.subr.bf16.mxu0 0
      %1994 = vmatpush2.bf16.msra.mxu0 0
      %1995 = vmatprep.subr.bf16.mxu0 0
      %1996 = vmatpush2.bf16.msra.mxu0 0
      %1997 = vmatprep.subr.bf16.mxu0 0
      %1998 = vmatpush2.bf16.msra.mxu0 0
      %1999 = vmatprep.subr.bf16.mxu0 0
      %2000 = vmatpush2.bf16.msra.mxu0 0
      %2001 = vmatprep.subr.bf16.mxu0 0
      %2002 = vmatpush2.bf16.msra.mxu0 0
      %2003 = vmatprep.mubr.bf16.mxu0 0
      %2004 = vmatmul.mubr.bf16.gmra.mxu0 %v1891
      %v2005 = vpop.f32.mrf.mxu0
      %v2006 = vadd.f32 0.0, %v2005
      %v2007 = vpop.f32.mrf.mxu0
      %v2008 = vpop.f32.mrf.mxu0
      %v2009 = vadd.f32 0.0, %v2008
      %v2010 = vpop.f32.mrf.mxu0
      %2011 = vmatprep.mubr.bf16.mxu0 0
      %2012 = vmatmul.mubr.bf16.gmra.mxu0 %v1892
      %v2013 = vpop.f32.mrf.mxu0
      %v2014 = vadd.f32 0.0, %v2013
      %v2015 = vpop.f32.mrf.mxu0
      %v2016 = vpop.f32.mrf.mxu0
      %v2017 = vadd.f32 0.0, %v2016
      %v2018 = vpop.f32.mrf.mxu0
      %2019 = vmatprep.mubr.bf16.mxu0 0
      %2020 = vmatmul.mubr.bf16.gmra.mxu0 %v1893
      %v2021 = vpop.f32.mrf.mxu0
      %v2022 = vadd.f32 0.0, %v2021
      %v2023 = vpop.f32.mrf.mxu0
      %v2024 = vpop.f32.mrf.mxu0
      %v2025 = vadd.f32 0.0, %v2024
      %v2026 = vpop.f32.mrf.mxu0
      %2027 = vmatprep.mubr.bf16.mxu0 0
      %2028 = vmatmul.mubr.bf16.gmra.mxu0 %v1894
      %v2029 = vpop.f32.mrf.mxu0
      %v2030 = vadd.f32 0.0, %v2029
      %v2031 = vpop.f32.mrf.mxu0
      %v2032 = vpop.f32.mrf.mxu0
      %v2033 = vadd.f32 0.0, %v2032
      %v2034 = vpop.f32.mrf.mxu0
      %2035 = vmatprep.mubr.bf16.mxu0 0
      %2036 = vmatmul.mubr.bf16.gmra.mxu0 %v1895
      %v2037 = vpop.f32.mrf.mxu0
      %v2038 = vadd.f32 0.0, %v2037
      %v2039 = vpop.f32.mrf.mxu0
      %v2040 = vpop.f32.mrf.mxu0
      %v2041 = vadd.f32 0.0, %v2040
      %v2042 = vpop.f32.mrf.mxu0
      %2043 = vmatprep.mubr.bf16.mxu0 0
      %2044 = vmatmul.mubr.bf16.gmra.mxu0 %v1896
      %v2045 = vpop.f32.mrf.mxu0
      %v2046 = vadd.f32 0.0, %v2045
      %v2047 = vpop.f32.mrf.mxu0
      %v2048 = vpop.f32.mrf.mxu0
      %v2049 = vadd.f32 0.0, %v2048
      %v2050 = vpop.f32.mrf.mxu0
      %2051 = vmatprep.mubr.bf16.mxu0 0
      %2052 = vmatmul.mubr.bf16.gmra.mxu0 %v1897
      %v2053 = vpop.f32.mrf.mxu0
      %v2054 = vadd.f32 0.0, %v2053
      %v2055 = vpop.f32.mrf.mxu0
      %v2056 = vpop.f32.mrf.mxu0
      %v2057 = vadd.f32 0.0, %v2056
      %v2058 = vpop.f32.mrf.mxu0
      %2059 = vmatprep.mubr.bf16.mxu0 0
      %2060 = vmatmul.mubr.bf16.gmra.mxu0 %v1898
      %v2061 = vpop.f32.mrf.mxu0
      %v2062 = vadd.f32 0.0, %v2061
      %v2063 = vpop.f32.mrf.mxu0
      %v2064 = vpop.f32.mrf.mxu0
      %v2065 = vadd.f32 0.0, %v2064
      %v2066 = vpop.f32.mrf.mxu0
      %2067 = vmatprep.mubr.bf16.mxu0 0
      %2068 = vmatmul.mubr.bf16.gmra.mxu0 %v1899
      %v2069 = vpop.f32.mrf.mxu0
      %v2070 = vadd.f32 0.0, %v2069
      %v2071 = vpop.f32.mrf.mxu0
      %v2072 = vpop.f32.mrf.mxu0
      %v2073 = vadd.f32 0.0, %v2072
      %v2074 = vpop.f32.mrf.mxu0
      %2075 = vmatprep.mubr.bf16.mxu0 0
      %2076 = vmatmul.mubr.bf16.gmra.mxu0 %v1900
      %v2077 = vpop.f32.mrf.mxu0
      %v2078 = vadd.f32 0.0, %v2077
      %v2079 = vpop.f32.mrf.mxu0
      %v2080 = vpop.f32.mrf.mxu0
      %v2081 = vadd.f32 0.0, %v2080
      %v2082 = vpop.f32.mrf.mxu0
      %2083 = vmatprep.mubr.bf16.mxu0 0
      %2084 = vmatmul.mubr.bf16.gmra.mxu0 %v1901
      %v2085 = vpop.f32.mrf.mxu0
      %v2086 = vadd.f32 0.0, %v2085
      %v2087 = vpop.f32.mrf.mxu0
      %v2088 = vpop.f32.mrf.mxu0
      %v2089 = vadd.f32 0.0, %v2088
      %v2090 = vpop.f32.mrf.mxu0
      %2091 = vmatprep.mubr.bf16.mxu0 0
      %2092 = vmatmul.mubr.bf16.gmra.mxu0 %v1902
      %v2093 = vpop.f32.mrf.mxu0
      %v2094 = vadd.f32 0.0, %v2093
      %v2095 = vpop.f32.mrf.mxu0
      %v2096 = vpop.f32.mrf.mxu0
      %v2097 = vadd.f32 0.0, %v2096
      %v2098 = vpop.f32.mrf.mxu0
      %2099 = vmatprep.mubr.bf16.mxu0 0
      %2100 = vmatmul.mubr.bf16.gmra.mxu0 %v1903
      %v2101 = vpop.f32.mrf.mxu0
      %v2102 = vadd.f32 0.0, %v2101
      %v2103 = vpop.f32.mrf.mxu0
      %v2104 = vpop.f32.mrf.mxu0
      %v2105 = vadd.f32 0.0, %v2104
      %v2106 = vpop.f32.mrf.mxu0
      %2107 = vmatprep.mubr.bf16.mxu0 0
      %2108 = vmatmul.mubr.bf16.gmra.mxu0 %v1904
      %v2109 = vpop.f32.mrf.mxu0
      %v2110 = vadd.f32 0.0, %v2109
      %v2111 = vpop.f32.mrf.mxu0
      %v2112 = vpop.f32.mrf.mxu0
      %v2113 = vadd.f32 0.0, %v2112
      %v2114 = vpop.f32.mrf.mxu0
      %2115 = vmatprep.mubr.bf16.mxu0 0
      %2116 = vmatmul.mubr.bf16.gmra.mxu0 %v1905
      %v2117 = vpop.f32.mrf.mxu0
      %v2118 = vadd.f32 0.0, %v2117
      %v2119 = vpop.f32.mrf.mxu0
      %v2120 = vpop.f32.mrf.mxu0
      %v2121 = vadd.f32 0.0, %v2120
      %v2122 = vpop.f32.mrf.mxu0
      %2123 = vmatprep.mubr.bf16.mxu0 0
      %2124 = vmatmul.mubr.bf16.gmra.mxu0 %v1906
      %v2125 = vpop.f32.mrf.mxu0
      %v2126 = vadd.f32 0.0, %v2125
      %v2127 = vpop.f32.mrf.mxu0
      %v2128 = vpop.f32.mrf.mxu0
      %v2129 = vadd.f32 0.0, %v2128
      %v2130 = vpop.f32.mrf.mxu0
      %2131 = vdwg.mxu0
      %v2132 = vadd.f32 %v1827, %v2006
      %v2133 = vadd.f32 %v1828, %v2009
      %v2134 = vadd.f32 %v1829, %v2014
      %v2135 = vadd.f32 %v1830, %v2017
      %v2136 = vadd.f32 %v1831, %v2022
      %v2137 = vadd.f32 %v1832, %v2025
      %v2138 = vadd.f32 %v1833, %v2030
      %v2139 = vadd.f32 %v1834, %v2033
      %v2140 = vadd.f32 %v1835, %v2038
      %v2141 = vadd.f32 %v1836, %v2041
      %v2142 = vadd.f32 %v1837, %v2046
      %v2143 = vadd.f32 %v1838, %v2049
      %v2144 = vadd.f32 %v1839, %v2054
      %v2145 = vadd.f32 %v1840, %v2057
      %v2146 = vadd.f32 %v1841, %v2062
      %v2147 = vadd.f32 %v1842, %v2065
      %v2148 = vadd.f32 %v1843, %v2070
      %v2149 = vadd.f32 %v1844, %v2073
      %v2150 = vadd.f32 %v1845, %v2078
      %v2151 = vadd.f32 %v1846, %v2081
      %v2152 = vadd.f32 %v1847, %v2086
      %v2153 = vadd.f32 %v1848, %v2089
      %v2154 = vadd.f32 %v1849, %v2094
      %v2155 = vadd.f32 %v1850, %v2097
      %v2156 = vadd.f32 %v1851, %v2102
      %v2157 = vadd.f32 %v1852, %v2105
      %v2158 = vadd.f32 %v1853, %v2110
      %v2159 = vadd.f32 %v1854, %v2113
      %v2160 = vadd.f32 %v1855, %v2118
      %v2161 = vadd.f32 %v1856, %v2121
      %v2162 = vadd.f32 %v1857, %v2126
      %v2163 = vadd.f32 %v1858, %v2129
      %v2164 = vld [vmem:[#allocation2 + $0x24] sm:$0xff]
      %v2165 = vld [vmem:[#allocation2 + $0x2c] sm:$0xff]
      %v2166 = vld [vmem:[#allocation2 + $0x34] sm:$0xff]
      %v2167 = vld [vmem:[#allocation2 + $0x3c] sm:$0xff]
      %v2168 = vld [vmem:[#allocation2 + $0x44] sm:$0xff]
      %v2169 = vld [vmem:[#allocation2 + $0x4c] sm:$0xff]
      %v2170 = vld [vmem:[#allocation2 + $0x54] sm:$0xff]
      %v2171 = vld [vmem:[#allocation2 + $0x5c] sm:$0xff]
      %v2172 = vld [vmem:[#allocation2 + $0x64] sm:$0xff]
      %v2173 = vld [vmem:[#allocation2 + $0x6c] sm:$0xff]
      %v2174 = vld [vmem:[#allocation2 + $0x74] sm:$0xff]
      %v2175 = vld [vmem:[#allocation2 + $0x7c] sm:$0xff]
      %v2176 = vld [vmem:[#allocation2 + $0x84] sm:$0xff]
      %v2177 = vld [vmem:[#allocation2 + $0x8c] sm:$0xff]
      %v2178 = vld [vmem:[#allocation2 + $0x94] sm:$0xff]
      %v2179 = vld [vmem:[#allocation2 + $0x9c] sm:$0xff]
      %v2180 = vld [vmem:[#allocation2 + $0xa4] sm:$0xff]
      %v2181 = vld [vmem:[#allocation2 + $0xac] sm:$0xff]
      %v2182 = vld [vmem:[#allocation2 + $0xb4] sm:$0xff]
      %v2183 = vld [vmem:[#allocation2 + $0xbc] sm:$0xff]
      %v2184 = vld [vmem:[#allocation2 + $0xc4] sm:$0xff]
      %v2185 = vld [vmem:[#allocation2 + $0xcc] sm:$0xff]
      %v2186 = vld [vmem:[#allocation2 + $0xd4] sm:$0xff]
      %v2187 = vld [vmem:[#allocation2 + $0xdc] sm:$0xff]
      %v2188 = vld [vmem:[#allocation2 + $0xe4] sm:$0xff]
      %v2189 = vld [vmem:[#allocation2 + $0xec] sm:$0xff]
      %v2190 = vld [vmem:[#allocation2 + $0xf4] sm:$0xff]
      %v2191 = vld [vmem:[#allocation2 + $0xfc] sm:$0xff]
      %v2192 = vld [vmem:[#allocation2 + $0x104] sm:$0xff]
      %v2193 = vld [vmem:[#allocation2 + $0x10c] sm:$0xff]
      %v2194 = vld [vmem:[#allocation2 + $0x114] sm:$0xff]
      %v2195 = vld [vmem:[#allocation2 + $0x11c] sm:$0xff]
      %v2196 = vpack.c.bf16 %v2165, %v2164
      %v2197 = vpack.c.bf16 %v2167, %v2166
      %v2198 = vpack.c.bf16 %v2169, %v2168
      %v2199 = vpack.c.bf16 %v2171, %v2170
      %v2200 = vpack.c.bf16 %v2173, %v2172
      %v2201 = vpack.c.bf16 %v2175, %v2174
      %v2202 = vpack.c.bf16 %v2177, %v2176
      %v2203 = vpack.c.bf16 %v2179, %v2178
      %v2204 = vpack.c.bf16 %v2181, %v2180
      %v2205 = vpack.c.bf16 %v2183, %v2182
      %v2206 = vpack.c.bf16 %v2185, %v2184
      %v2207 = vpack.c.bf16 %v2187, %v2186
      %v2208 = vpack.c.bf16 %v2189, %v2188
      %v2209 = vpack.c.bf16 %v2191, %v2190
      %v2210 = vpack.c.bf16 %v2193, %v2192
      %v2211 = vpack.c.bf16 %v2195, %v2194
      %v2212 = vld [vmem:[%s2 + $0x180] sm:$0xf]
      %v2213 = vld [vmem:[%s2 + $0x184] sm:$0xf]
      %v2214 = vld [vmem:[%s2 + $0x188] sm:$0xf]
      %v2215 = vld [vmem:[%s2 + $0x18c] sm:$0xf]
      %v2216 = vld [vmem:[%s2 + $0x190] sm:$0xf]
      %v2217 = vld [vmem:[%s2 + $0x194] sm:$0xf]
      %v2218 = vld [vmem:[%s2 + $0x198] sm:$0xf]
      %v2219 = vld [vmem:[%s2 + $0x19c] sm:$0xf]
      %v2220 = vld [vmem:[%s2 + $0x1a0] sm:$0xf]
      %v2221 = vld [vmem:[%s2 + $0x1a4] sm:$0xf]
      %v2222 = vld [vmem:[%s2 + $0x1a8] sm:$0xf]
      %v2223 = vld [vmem:[%s2 + $0x1ac] sm:$0xf]
      %v2224 = vld [vmem:[%s2 + $0x1b0] sm:$0xf]
      %v2225 = vld [vmem:[%s2 + $0x1b4] sm:$0xf]
      %v2226 = vld [vmem:[%s2 + $0x1b8] sm:$0xf]
      %v2227 = vld [vmem:[%s2 + $0x1bc] sm:$0xf]
      %v2244 = vunpack.c.l.b16 %v2212
      %v2245 = vunpack.c.l.b16 %v2213
      %v2246 = vunpack.c.l.b16 %v2214
      %v2247 = vunpack.c.l.b16 %v2215
      %v2248 = vunpack.c.l.b16 %v2216
      %v2249 = vunpack.c.l.b16 %v2217
      %v2250 = vunpack.c.l.b16 %v2218
      %v2251 = vunpack.c.l.b16 %v2219
      %v2252 = vunpack.c.l.b16 %v2220
      %v2253 = vunpack.c.l.b16 %v2221
      %v2254 = vunpack.c.l.b16 %v2222
      %v2255 = vunpack.c.l.b16 %v2223
      %v2256 = vunpack.c.l.b16 %v2224
      %v2257 = vunpack.c.l.b16 %v2225
      %v2258 = vunpack.c.l.b16 %v2226
      %v2259 = vunpack.c.l.b16 %v2227
      %v2260 = vpack.c.b16 %v2245, %v2244
      %v2261 = vpack.c.b16 %v2247, %v2246
      %v2262 = vpack.c.b16 %v2249, %v2248
      %v2263 = vpack.c.b16 %v2251, %v2250
      %v2264 = vpack.c.b16 %v2253, %v2252
      %v2265 = vpack.c.b16 %v2255, %v2254
      %v2266 = vpack.c.b16 %v2257, %v2256
      %v2267 = vpack.c.b16 %v2259, %v2258
      %2276 = vmatprep.subr.bf16.mxu0 0
      %2277 = vmatpush1.bf16.msra.mxu0 %v2267
      %2278 = vmatprep.subr.bf16.mxu0 0
      %2279 = vmatpush1.bf16.msra.mxu0 %v2266
      %2280 = vmatprep.subr.bf16.mxu0 0
      %2281 = vmatpush1.bf16.msra.mxu0 %v2265
      %2282 = vmatprep.subr.bf16.mxu0 0
      %2283 = vmatpush1.bf16.msra.mxu0 %v2264
      %2284 = vmatprep.subr.bf16.mxu0 0
      %2285 = vmatpush1.bf16.msra.mxu0 %v2263
      %2286 = vmatprep.subr.bf16.mxu0 0
      %2287 = vmatpush1.bf16.msra.mxu0 %v2262
      %2288 = vmatprep.subr.bf16.mxu0 0
      %2289 = vmatpush1.bf16.msra.mxu0 %v2261
      %2290 = vmatprep.subr.bf16.mxu0 0
      %2291 = vmatpush1.bf16.msra.mxu0 %v2260
      %2292 = vmatprep.subr.bf16.mxu0 0
      %2293 = vmatpush2.bf16.msra.mxu0 0
      %2294 = vmatprep.subr.bf16.mxu0 0
      %2295 = vmatpush2.bf16.msra.mxu0 0
      %2296 = vmatprep.subr.bf16.mxu0 0
      %2297 = vmatpush2.bf16.msra.mxu0 0
      %2298 = vmatprep.subr.bf16.mxu0 0
      %2299 = vmatpush2.bf16.msra.mxu0 0
      %2300 = vmatprep.subr.bf16.mxu0 0
      %2301 = vmatpush2.bf16.msra.mxu0 0
      %2302 = vmatprep.subr.bf16.mxu0 0
      %2303 = vmatpush2.bf16.msra.mxu0 0
      %2304 = vmatprep.subr.bf16.mxu0 0
      %2305 = vmatpush2.bf16.msra.mxu0 0
      %2306 = vmatprep.subr.bf16.mxu0 0
      %2307 = vmatpush2.bf16.msra.mxu0 0
      %2308 = vmatprep.mubr.bf16.mxu0 0
      %2309 = vmatmul.mubr.bf16.gmra.mxu0 %v2196
      %v2310 = vpop.f32.mrf.mxu0
      %v2311 = vadd.f32 0.0, %v2310
      %v2312 = vpop.f32.mrf.mxu0
      %v2313 = vpop.f32.mrf.mxu0
      %v2314 = vadd.f32 0.0, %v2313
      %v2315 = vpop.f32.mrf.mxu0
      %2316 = vmatprep.mubr.bf16.mxu0 0
      %2317 = vmatmul.mubr.bf16.gmra.mxu0 %v2197
      %v2318 = vpop.f32.mrf.mxu0
      %v2319 = vadd.f32 0.0, %v2318
      %v2320 = vpop.f32.mrf.mxu0
      %v2321 = vpop.f32.mrf.mxu0
      %v2322 = vadd.f32 0.0, %v2321
      %v2323 = vpop.f32.mrf.mxu0
      %2324 = vmatprep.mubr.bf16.mxu0 0
      %2325 = vmatmul.mubr.bf16.gmra.mxu0 %v2198
      %v2326 = vpop.f32.mrf.mxu0
      %v2327 = vadd.f32 0.0, %v2326
      %v2328 = vpop.f32.mrf.mxu0
      %v2329 = vpop.f32.mrf.mxu0
      %v2330 = vadd.f32 0.0, %v2329
      %v2331 = vpop.f32.mrf.mxu0
      %2332 = vmatprep.mubr.bf16.mxu0 0
      %2333 = vmatmul.mubr.bf16.gmra.mxu0 %v2199
      %v2334 = vpop.f32.mrf.mxu0
      %v2335 = vadd.f32 0.0, %v2334
      %v2336 = vpop.f32.mrf.mxu0
      %v2337 = vpop.f32.mrf.mxu0
      %v2338 = vadd.f32 0.0, %v2337
      %v2339 = vpop.f32.mrf.mxu0
      %2340 = vmatprep.mubr.bf16.mxu0 0
      %2341 = vmatmul.mubr.bf16.gmra.mxu0 %v2200
      %v2342 = vpop.f32.mrf.mxu0
      %v2343 = vadd.f32 0.0, %v2342
      %v2344 = vpop.f32.mrf.mxu0
      %v2345 = vpop.f32.mrf.mxu0
      %v2346 = vadd.f32 0.0, %v2345
      %v2347 = vpop.f32.mrf.mxu0
      %2348 = vmatprep.mubr.bf16.mxu0 0
      %2349 = vmatmul.mubr.bf16.gmra.mxu0 %v2201
      %v2350 = vpop.f32.mrf.mxu0
      %v2351 = vadd.f32 0.0, %v2350
      %v2352 = vpop.f32.mrf.mxu0
      %v2353 = vpop.f32.mrf.mxu0
      %v2354 = vadd.f32 0.0, %v2353
      %v2355 = vpop.f32.mrf.mxu0
      %2356 = vmatprep.mubr.bf16.mxu0 0
      %2357 = vmatmul.mubr.bf16.gmra.mxu0 %v2202
      %v2358 = vpop.f32.mrf.mxu0
      %v2359 = vadd.f32 0.0, %v2358
      %v2360 = vpop.f32.mrf.mxu0
      %v2361 = vpop.f32.mrf.mxu0
      %v2362 = vadd.f32 0.0, %v2361
      %v2363 = vpop.f32.mrf.mxu0
      %2364 = vmatprep.mubr.bf16.mxu0 0
      %2365 = vmatmul.mubr.bf16.gmra.mxu0 %v2203
      %v2366 = vpop.f32.mrf.mxu0
      %v2367 = vadd.f32 0.0, %v2366
      %v2368 = vpop.f32.mrf.mxu0
      %v2369 = vpop.f32.mrf.mxu0
      %v2370 = vadd.f32 0.0, %v2369
      %v2371 = vpop.f32.mrf.mxu0
      %2372 = vmatprep.mubr.bf16.mxu0 0
      %2373 = vmatmul.mubr.bf16.gmra.mxu0 %v2204
      %v2374 = vpop.f32.mrf.mxu0
      %v2375 = vadd.f32 0.0, %v2374
      %v2376 = vpop.f32.mrf.mxu0
      %v2377 = vpop.f32.mrf.mxu0
      %v2378 = vadd.f32 0.0, %v2377
      %v2379 = vpop.f32.mrf.mxu0
      %2380 = vmatprep.mubr.bf16.mxu0 0
      %2381 = vmatmul.mubr.bf16.gmra.mxu0 %v2205
      %v2382 = vpop.f32.mrf.mxu0
      %v2383 = vadd.f32 0.0, %v2382
      %v2384 = vpop.f32.mrf.mxu0
      %v2385 = vpop.f32.mrf.mxu0
      %v2386 = vadd.f32 0.0, %v2385
      %v2387 = vpop.f32.mrf.mxu0
      %2388 = vmatprep.mubr.bf16.mxu0 0
      %2389 = vmatmul.mubr.bf16.gmra.mxu0 %v2206
      %v2390 = vpop.f32.mrf.mxu0
      %v2391 = vadd.f32 0.0, %v2390
      %v2392 = vpop.f32.mrf.mxu0
      %v2393 = vpop.f32.mrf.mxu0
      %v2394 = vadd.f32 0.0, %v2393
      %v2395 = vpop.f32.mrf.mxu0
      %2396 = vmatprep.mubr.bf16.mxu0 0
      %2397 = vmatmul.mubr.bf16.gmra.mxu0 %v2207
      %v2398 = vpop.f32.mrf.mxu0
      %v2399 = vadd.f32 0.0, %v2398
      %v2400 = vpop.f32.mrf.mxu0
      %v2401 = vpop.f32.mrf.mxu0
      %v2402 = vadd.f32 0.0, %v2401
      %v2403 = vpop.f32.mrf.mxu0
      %2404 = vmatprep.mubr.bf16.mxu0 0
      %2405 = vmatmul.mubr.bf16.gmra.mxu0 %v2208
      %v2406 = vpop.f32.mrf.mxu0
      %v2407 = vadd.f32 0.0, %v2406
      %v2408 = vpop.f32.mrf.mxu0
      %v2409 = vpop.f32.mrf.mxu0
      %v2410 = vadd.f32 0.0, %v2409
      %v2411 = vpop.f32.mrf.mxu0
      %2412 = vmatprep.mubr.bf16.mxu0 0
      %2413 = vmatmul.mubr.bf16.gmra.mxu0 %v2209
      %v2414 = vpop.f32.mrf.mxu0
      %v2415 = vadd.f32 0.0, %v2414
      %v2416 = vpop.f32.mrf.mxu0
      %v2417 = vpop.f32.mrf.mxu0
      %v2418 = vadd.f32 0.0, %v2417
      %v2419 = vpop.f32.mrf.mxu0
      %2420 = vmatprep.mubr.bf16.mxu0 0
      %2421 = vmatmul.mubr.bf16.gmra.mxu0 %v2210
      %v2422 = vpop.f32.mrf.mxu0
      %v2423 = vadd.f32 0.0, %v2422
      %v2424 = vpop.f32.mrf.mxu0
      %v2425 = vpop.f32.mrf.mxu0
      %v2426 = vadd.f32 0.0, %v2425
      %v2427 = vpop.f32.mrf.mxu0
      %2428 = vmatprep.mubr.bf16.mxu0 0
      %2429 = vmatmul.mubr.bf16.gmra.mxu0 %v2211
      %v2430 = vpop.f32.mrf.mxu0
      %v2431 = vadd.f32 0.0, %v2430
      %v2432 = vpop.f32.mrf.mxu0
      %v2433 = vpop.f32.mrf.mxu0
      %v2434 = vadd.f32 0.0, %v2433
      %v2435 = vpop.f32.mrf.mxu0
      %2436 = vdwg.mxu0
      %v2437 = vadd.f32 %v2132, %v2311
      %v2438 = vadd.f32 %v2133, %v2314
      %v2439 = vadd.f32 %v2134, %v2319
      %v2440 = vadd.f32 %v2135, %v2322
      %v2441 = vadd.f32 %v2136, %v2327
      %v2442 = vadd.f32 %v2137, %v2330
      %v2443 = vadd.f32 %v2138, %v2335
      %v2444 = vadd.f32 %v2139, %v2338
      %v2445 = vadd.f32 %v2140, %v2343
      %v2446 = vadd.f32 %v2141, %v2346
      %v2447 = vadd.f32 %v2142, %v2351
      %v2448 = vadd.f32 %v2143, %v2354
      %v2449 = vadd.f32 %v2144, %v2359
      %v2450 = vadd.f32 %v2145, %v2362
      %v2451 = vadd.f32 %v2146, %v2367
      %v2452 = vadd.f32 %v2147, %v2370
      %v2453 = vadd.f32 %v2148, %v2375
      %v2454 = vadd.f32 %v2149, %v2378
      %v2455 = vadd.f32 %v2150, %v2383
      %v2456 = vadd.f32 %v2151, %v2386
      %v2457 = vadd.f32 %v2152, %v2391
      %v2458 = vadd.f32 %v2153, %v2394
      %v2459 = vadd.f32 %v2154, %v2399
      %v2460 = vadd.f32 %v2155, %v2402
      %v2461 = vadd.f32 %v2156, %v2407
      %v2462 = vadd.f32 %v2157, %v2410
      %v2463 = vadd.f32 %v2158, %v2415
      %v2464 = vadd.f32 %v2159, %v2418
      %v2465 = vadd.f32 %v2160, %v2423
      %v2466 = vadd.f32 %v2161, %v2426
      %v2467 = vadd.f32 %v2162, %v2431
      %v2468 = vadd.f32 %v2163, %v2434
      %v2469 = vld [vmem:[#allocation2 + $0x25] sm:$0xff]
      %v2470 = vld [vmem:[#allocation2 + $0x2d] sm:$0xff]
      %v2471 = vld [vmem:[#allocation2 + $0x35] sm:$0xff]
      %v2472 = vld [vmem:[#allocation2 + $0x3d] sm:$0xff]
      %v2473 = vld [vmem:[#allocation2 + $0x45] sm:$0xff]
      %v2474 = vld [vmem:[#allocation2 + $0x4d] sm:$0xff]
      %v2475 = vld [vmem:[#allocation2 + $0x55] sm:$0xff]
      %v2476 = vld [vmem:[#allocation2 + $0x5d] sm:$0xff]
      %v2477 = vld [vmem:[#allocation2 + $0x65] sm:$0xff]
      %v2478 = vld [vmem:[#allocation2 + $0x6d] sm:$0xff]
      %v2479 = vld [vmem:[#allocation2 + $0x75] sm:$0xff]
      %v2480 = vld [vmem:[#allocation2 + $0x7d] sm:$0xff]
      %v2481 = vld [vmem:[#allocation2 + $0x85] sm:$0xff]
      %v2482 = vld [vmem:[#allocation2 + $0x8d] sm:$0xff]
      %v2483 = vld [vmem:[#allocation2 + $0x95] sm:$0xff]
      %v2484 = vld [vmem:[#allocation2 + $0x9d] sm:$0xff]
      %v2485 = vld [vmem:[#allocation2 + $0xa5] sm:$0xff]
      %v2486 = vld [vmem:[#allocation2 + $0xad] sm:$0xff]
      %v2487 = vld [vmem:[#allocation2 + $0xb5] sm:$0xff]
      %v2488 = vld [vmem:[#allocation2 + $0xbd] sm:$0xff]
      %v2489 = vld [vmem:[#allocation2 + $0xc5] sm:$0xff]
      %v2490 = vld [vmem:[#allocation2 + $0xcd] sm:$0xff]
      %v2491 = vld [vmem:[#allocation2 + $0xd5] sm:$0xff]
      %v2492 = vld [vmem:[#allocation2 + $0xdd] sm:$0xff]
      %v2493 = vld [vmem:[#allocation2 + $0xe5] sm:$0xff]
      %v2494 = vld [vmem:[#allocation2 + $0xed] sm:$0xff]
      %v2495 = vld [vmem:[#allocation2 + $0xf5] sm:$0xff]
      %v2496 = vld [vmem:[#allocation2 + $0xfd] sm:$0xff]
      %v2497 = vld [vmem:[#allocation2 + $0x105] sm:$0xff]
      %v2498 = vld [vmem:[#allocation2 + $0x10d] sm:$0xff]
      %v2499 = vld [vmem:[#allocation2 + $0x115] sm:$0xff]
      %v2500 = vld [vmem:[#allocation2 + $0x11d] sm:$0xff]
      %v2501 = vpack.c.bf16 %v2470, %v2469
      %v2502 = vpack.c.bf16 %v2472, %v2471
      %v2503 = vpack.c.bf16 %v2474, %v2473
      %v2504 = vpack.c.bf16 %v2476, %v2475
      %v2505 = vpack.c.bf16 %v2478, %v2477
      %v2506 = vpack.c.bf16 %v2480, %v2479
      %v2507 = vpack.c.bf16 %v2482, %v2481
      %v2508 = vpack.c.bf16 %v2484, %v2483
      %v2509 = vpack.c.bf16 %v2486, %v2485
      %v2510 = vpack.c.bf16 %v2488, %v2487
      %v2511 = vpack.c.bf16 %v2490, %v2489
      %v2512 = vpack.c.bf16 %v2492, %v2491
      %v2513 = vpack.c.bf16 %v2494, %v2493
      %v2514 = vpack.c.bf16 %v2496, %v2495
      %v2515 = vpack.c.bf16 %v2498, %v2497
      %v2516 = vpack.c.bf16 %v2500, %v2499
      %v2517 = vld [vmem:[%s2 + $0x1c0] sm:$0xf]
      %v2518 = vld [vmem:[%s2 + $0x1c4] sm:$0xf]
      %v2519 = vld [vmem:[%s2 + $0x1c8] sm:$0xf]
      %v2520 = vld [vmem:[%s2 + $0x1cc] sm:$0xf]
      %v2521 = vld [vmem:[%s2 + $0x1d0] sm:$0xf]
      %v2522 = vld [vmem:[%s2 + $0x1d4] sm:$0xf]
      %v2523 = vld [vmem:[%s2 + $0x1d8] sm:$0xf]
      %v2524 = vld [vmem:[%s2 + $0x1dc] sm:$0xf]
      %v2525 = vld [vmem:[%s2 + $0x1e0] sm:$0xf]
      %v2526 = vld [vmem:[%s2 + $0x1e4] sm:$0xf]
      %v2527 = vld [vmem:[%s2 + $0x1e8] sm:$0xf]
      %v2528 = vld [vmem:[%s2 + $0x1ec] sm:$0xf]
      %v2529 = vld [vmem:[%s2 + $0x1f0] sm:$0xf]
      %v2530 = vld [vmem:[%s2 + $0x1f4] sm:$0xf]
      %v2531 = vld [vmem:[%s2 + $0x1f8] sm:$0xf]
      %v2532 = vld [vmem:[%s2 + $0x1fc] sm:$0xf]
      %v2549 = vunpack.c.l.b16 %v2517
      %v2550 = vunpack.c.l.b16 %v2518
      %v2551 = vunpack.c.l.b16 %v2519
      %v2552 = vunpack.c.l.b16 %v2520
      %v2553 = vunpack.c.l.b16 %v2521
      %v2554 = vunpack.c.l.b16 %v2522
      %v2555 = vunpack.c.l.b16 %v2523
      %v2556 = vunpack.c.l.b16 %v2524
      %v2557 = vunpack.c.l.b16 %v2525
      %v2558 = vunpack.c.l.b16 %v2526
      %v2559 = vunpack.c.l.b16 %v2527
      %v2560 = vunpack.c.l.b16 %v2528
      %v2561 = vunpack.c.l.b16 %v2529
      %v2562 = vunpack.c.l.b16 %v2530
      %v2563 = vunpack.c.l.b16 %v2531
      %v2564 = vunpack.c.l.b16 %v2532
      %v2565 = vpack.c.b16 %v2550, %v2549
      %v2566 = vpack.c.b16 %v2552, %v2551
      %v2567 = vpack.c.b16 %v2554, %v2553
      %v2568 = vpack.c.b16 %v2556, %v2555
      %v2569 = vpack.c.b16 %v2558, %v2557
      %v2570 = vpack.c.b16 %v2560, %v2559
      %v2571 = vpack.c.b16 %v2562, %v2561
      %v2572 = vpack.c.b16 %v2564, %v2563
      %2581 = vmatprep.subr.bf16.mxu0 0
      %2582 = vmatpush1.bf16.msra.mxu0 %v2572
      %2583 = vmatprep.subr.bf16.mxu0 0
      %2584 = vmatpush1.bf16.msra.mxu0 %v2571
      %2585 = vmatprep.subr.bf16.mxu0 0
      %2586 = vmatpush1.bf16.msra.mxu0 %v2570
      %2587 = vmatprep.subr.bf16.mxu0 0
      %2588 = vmatpush1.bf16.msra.mxu0 %v2569
      %2589 = vmatprep.subr.bf16.mxu0 0
      %2590 = vmatpush1.bf16.msra.mxu0 %v2568
      %2591 = vmatprep.subr.bf16.mxu0 0
      %2592 = vmatpush1.bf16.msra.mxu0 %v2567
      %2593 = vmatprep.subr.bf16.mxu0 0
      %2594 = vmatpush1.bf16.msra.mxu0 %v2566
      %2595 = vmatprep.subr.bf16.mxu0 0
      %2596 = vmatpush1.bf16.msra.mxu0 %v2565
      %2597 = vmatprep.subr.bf16.mxu0 0
      %2598 = vmatpush2.bf16.msra.mxu0 0
      %2599 = vmatprep.subr.bf16.mxu0 0
      %2600 = vmatpush2.bf16.msra.mxu0 0
      %2601 = vmatprep.subr.bf16.mxu0 0
      %2602 = vmatpush2.bf16.msra.mxu0 0
      %2603 = vmatprep.subr.bf16.mxu0 0
      %2604 = vmatpush2.bf16.msra.mxu0 0
      %2605 = vmatprep.subr.bf16.mxu0 0
      %2606 = vmatpush2.bf16.msra.mxu0 0
      %2607 = vmatprep.subr.bf16.mxu0 0
      %2608 = vmatpush2.bf16.msra.mxu0 0
      %2609 = vmatprep.subr.bf16.mxu0 0
      %2610 = vmatpush2.bf16.msra.mxu0 0
      %2611 = vmatprep.subr.bf16.mxu0 0
      %2612 = vmatpush2.bf16.msra.mxu0 0
      %2613 = vmatprep.mubr.bf16.mxu0 0
      %2614 = vmatmul.mubr.bf16.gmra.mxu0 %v2501
      %v2615 = vpop.f32.mrf.mxu0
      %v2616 = vadd.f32 0.0, %v2615
      %v2617 = vpop.f32.mrf.mxu0
      %v2618 = vpop.f32.mrf.mxu0
      %v2619 = vadd.f32 0.0, %v2618
      %v2620 = vpop.f32.mrf.mxu0
      %2621 = vmatprep.mubr.bf16.mxu0 0
      %2622 = vmatmul.mubr.bf16.gmra.mxu0 %v2502
      %v2623 = vpop.f32.mrf.mxu0
      %v2624 = vadd.f32 0.0, %v2623
      %v2625 = vpop.f32.mrf.mxu0
      %v2626 = vpop.f32.mrf.mxu0
      %v2627 = vadd.f32 0.0, %v2626
      %v2628 = vpop.f32.mrf.mxu0
      %2629 = vmatprep.mubr.bf16.mxu0 0
      %2630 = vmatmul.mubr.bf16.gmra.mxu0 %v2503
      %v2631 = vpop.f32.mrf.mxu0
      %v2632 = vadd.f32 0.0, %v2631
      %v2633 = vpop.f32.mrf.mxu0
      %v2634 = vpop.f32.mrf.mxu0
      %v2635 = vadd.f32 0.0, %v2634
      %v2636 = vpop.f32.mrf.mxu0
      %2637 = vmatprep.mubr.bf16.mxu0 0
      %2638 = vmatmul.mubr.bf16.gmra.mxu0 %v2504
      %v2639 = vpop.f32.mrf.mxu0
      %v2640 = vadd.f32 0.0, %v2639
      %v2641 = vpop.f32.mrf.mxu0
      %v2642 = vpop.f32.mrf.mxu0
      %v2643 = vadd.f32 0.0, %v2642
      %v2644 = vpop.f32.mrf.mxu0
      %2645 = vmatprep.mubr.bf16.mxu0 0
      %2646 = vmatmul.mubr.bf16.gmra.mxu0 %v2505
      %v2647 = vpop.f32.mrf.mxu0
      %v2648 = vadd.f32 0.0, %v2647
      %v2649 = vpop.f32.mrf.mxu0
      %v2650 = vpop.f32.mrf.mxu0
      %v2651 = vadd.f32 0.0, %v2650
      %v2652 = vpop.f32.mrf.mxu0
      %2653 = vmatprep.mubr.bf16.mxu0 0
      %2654 = vmatmul.mubr.bf16.gmra.mxu0 %v2506
      %v2655 = vpop.f32.mrf.mxu0
      %v2656 = vadd.f32 0.0, %v2655
      %v2657 = vpop.f32.mrf.mxu0
      %v2658 = vpop.f32.mrf.mxu0
      %v2659 = vadd.f32 0.0, %v2658
      %v2660 = vpop.f32.mrf.mxu0
      %2661 = vmatprep.mubr.bf16.mxu0 0
      %2662 = vmatmul.mubr.bf16.gmra.mxu0 %v2507
      %v2663 = vpop.f32.mrf.mxu0
      %v2664 = vadd.f32 0.0, %v2663
      %v2665 = vpop.f32.mrf.mxu0
      %v2666 = vpop.f32.mrf.mxu0
      %v2667 = vadd.f32 0.0, %v2666
      %v2668 = vpop.f32.mrf.mxu0
      %2669 = vmatprep.mubr.bf16.mxu0 0
      %2670 = vmatmul.mubr.bf16.gmra.mxu0 %v2508
      %v2671 = vpop.f32.mrf.mxu0
      %v2672 = vadd.f32 0.0, %v2671
      %v2673 = vpop.f32.mrf.mxu0
      %v2674 = vpop.f32.mrf.mxu0
      %v2675 = vadd.f32 0.0, %v2674
      %v2676 = vpop.f32.mrf.mxu0
      %2677 = vmatprep.mubr.bf16.mxu0 0
      %2678 = vmatmul.mubr.bf16.gmra.mxu0 %v2509
      %v2679 = vpop.f32.mrf.mxu0
      %v2680 = vadd.f32 0.0, %v2679
      %v2681 = vpop.f32.mrf.mxu0
      %v2682 = vpop.f32.mrf.mxu0
      %v2683 = vadd.f32 0.0, %v2682
      %v2684 = vpop.f32.mrf.mxu0
      %2685 = vmatprep.mubr.bf16.mxu0 0
      %2686 = vmatmul.mubr.bf16.gmra.mxu0 %v2510
      %v2687 = vpop.f32.mrf.mxu0
      %v2688 = vadd.f32 0.0, %v2687
      %v2689 = vpop.f32.mrf.mxu0
      %v2690 = vpop.f32.mrf.mxu0
      %v2691 = vadd.f32 0.0, %v2690
      %v2692 = vpop.f32.mrf.mxu0
      %2693 = vmatprep.mubr.bf16.mxu0 0
      %2694 = vmatmul.mubr.bf16.gmra.mxu0 %v2511
      %v2695 = vpop.f32.mrf.mxu0
      %v2696 = vadd.f32 0.0, %v2695
      %v2697 = vpop.f32.mrf.mxu0
      %v2698 = vpop.f32.mrf.mxu0
      %v2699 = vadd.f32 0.0, %v2698
      %v2700 = vpop.f32.mrf.mxu0
      %2701 = vmatprep.mubr.bf16.mxu0 0
      %2702 = vmatmul.mubr.bf16.gmra.mxu0 %v2512
      %v2703 = vpop.f32.mrf.mxu0
      %v2704 = vadd.f32 0.0, %v2703
      %v2705 = vpop.f32.mrf.mxu0
      %v2706 = vpop.f32.mrf.mxu0
      %v2707 = vadd.f32 0.0, %v2706
      %v2708 = vpop.f32.mrf.mxu0
      %2709 = vmatprep.mubr.bf16.mxu0 0
      %2710 = vmatmul.mubr.bf16.gmra.mxu0 %v2513
      %v2711 = vpop.f32.mrf.mxu0
      %v2712 = vadd.f32 0.0, %v2711
      %v2713 = vpop.f32.mrf.mxu0
      %v2714 = vpop.f32.mrf.mxu0
      %v2715 = vadd.f32 0.0, %v2714
      %v2716 = vpop.f32.mrf.mxu0
      %2717 = vmatprep.mubr.bf16.mxu0 0
      %2718 = vmatmul.mubr.bf16.gmra.mxu0 %v2514
      %v2719 = vpop.f32.mrf.mxu0
      %v2720 = vadd.f32 0.0, %v2719
      %v2721 = vpop.f32.mrf.mxu0
      %v2722 = vpop.f32.mrf.mxu0
      %v2723 = vadd.f32 0.0, %v2722
      %v2724 = vpop.f32.mrf.mxu0
      %2725 = vmatprep.mubr.bf16.mxu0 0
      %2726 = vmatmul.mubr.bf16.gmra.mxu0 %v2515
      %v2727 = vpop.f32.mrf.mxu0
      %v2728 = vadd.f32 0.0, %v2727
      %v2729 = vpop.f32.mrf.mxu0
      %v2730 = vpop.f32.mrf.mxu0
      %v2731 = vadd.f32 0.0, %v2730
      %v2732 = vpop.f32.mrf.mxu0
      %2733 = vmatprep.mubr.bf16.mxu0 0
      %2734 = vmatmul.mubr.bf16.gmra.mxu0 %v2516
      %v2735 = vpop.f32.mrf.mxu0
      %v2736 = vadd.f32 0.0, %v2735
      %v2737 = vpop.f32.mrf.mxu0
      %v2738 = vpop.f32.mrf.mxu0
      %v2739 = vadd.f32 0.0, %v2738
      %v2740 = vpop.f32.mrf.mxu0
      %2741 = vdwg.mxu0
      %v2742 = vadd.f32 %v2437, %v2616
      %v2743 = vadd.f32 %v2438, %v2619
      %v2744 = vadd.f32 %v2439, %v2624
      %v2745 = vadd.f32 %v2440, %v2627
      %v2746 = vadd.f32 %v2441, %v2632
      %v2747 = vadd.f32 %v2442, %v2635
      %v2748 = vadd.f32 %v2443, %v2640
      %v2749 = vadd.f32 %v2444, %v2643
      %v2750 = vadd.f32 %v2445, %v2648
      %v2751 = vadd.f32 %v2446, %v2651
      %v2752 = vadd.f32 %v2447, %v2656
      %v2753 = vadd.f32 %v2448, %v2659
      %v2754 = vadd.f32 %v2449, %v2664
      %v2755 = vadd.f32 %v2450, %v2667
      %v2756 = vadd.f32 %v2451, %v2672
      %v2757 = vadd.f32 %v2452, %v2675
      %v2758 = vadd.f32 %v2453, %v2680
      %v2759 = vadd.f32 %v2454, %v2683
      %v2760 = vadd.f32 %v2455, %v2688
      %v2761 = vadd.f32 %v2456, %v2691
      %v2762 = vadd.f32 %v2457, %v2696
      %v2763 = vadd.f32 %v2458, %v2699
      %v2764 = vadd.f32 %v2459, %v2704
      %v2765 = vadd.f32 %v2460, %v2707
      %v2766 = vadd.f32 %v2461, %v2712
      %v2767 = vadd.f32 %v2462, %v2715
      %v2768 = vadd.f32 %v2463, %v2720
      %v2769 = vadd.f32 %v2464, %v2723
      %v2770 = vadd.f32 %v2465, %v2728
      %v2771 = vadd.f32 %v2466, %v2731
      %v2772 = vadd.f32 %v2467, %v2736
      %v2773 = vadd.f32 %v2468, %v2739
      %v2774 = vld [vmem:[#allocation2 + $0x26] sm:$0xff]
      %v2775 = vld [vmem:[#allocation2 + $0x2e] sm:$0xff]
      %v2776 = vld [vmem:[#allocation2 + $0x36] sm:$0xff]
      %v2777 = vld [vmem:[#allocation2 + $0x3e] sm:$0xff]
      %v2778 = vld [vmem:[#allocation2 + $0x46] sm:$0xff]
      %v2779 = vld [vmem:[#allocation2 + $0x4e] sm:$0xff]
      %v2780 = vld [vmem:[#allocation2 + $0x56] sm:$0xff]
      %v2781 = vld [vmem:[#allocation2 + $0x5e] sm:$0xff]
      %v2782 = vld [vmem:[#allocation2 + $0x66] sm:$0xff]
      %v2783 = vld [vmem:[#allocation2 + $0x6e] sm:$0xff]
      %v2784 = vld [vmem:[#allocation2 + $0x76] sm:$0xff]
      %v2785 = vld [vmem:[#allocation2 + $0x7e] sm:$0xff]
      %v2786 = vld [vmem:[#allocation2 + $0x86] sm:$0xff]
      %v2787 = vld [vmem:[#allocation2 + $0x8e] sm:$0xff]
      %v2788 = vld [vmem:[#allocation2 + $0x96] sm:$0xff]
      %v2789 = vld [vmem:[#allocation2 + $0x9e] sm:$0xff]
      %v2790 = vld [vmem:[#allocation2 + $0xa6] sm:$0xff]
      %v2791 = vld [vmem:[#allocation2 + $0xae] sm:$0xff]
      %v2792 = vld [vmem:[#allocation2 + $0xb6] sm:$0xff]
      %v2793 = vld [vmem:[#allocation2 + $0xbe] sm:$0xff]
      %v2794 = vld [vmem:[#allocation2 + $0xc6] sm:$0xff]
      %v2795 = vld [vmem:[#allocation2 + $0xce] sm:$0xff]
      %v2796 = vld [vmem:[#allocation2 + $0xd6] sm:$0xff]
      %v2797 = vld [vmem:[#allocation2 + $0xde] sm:$0xff]
      %v2798 = vld [vmem:[#allocation2 + $0xe6] sm:$0xff]
      %v2799 = vld [vmem:[#allocation2 + $0xee] sm:$0xff]
      %v2800 = vld [vmem:[#allocation2 + $0xf6] sm:$0xff]
      %v2801 = vld [vmem:[#allocation2 + $0xfe] sm:$0xff]
      %v2802 = vld [vmem:[#allocation2 + $0x106] sm:$0xff]
      %v2803 = vld [vmem:[#allocation2 + $0x10e] sm:$0xff]
      %v2804 = vld [vmem:[#allocation2 + $0x116] sm:$0xff]
      %v2805 = vld [vmem:[#allocation2 + $0x11e] sm:$0xff]
      %v2806 = vpack.c.bf16 %v2775, %v2774
      %v2807 = vpack.c.bf16 %v2777, %v2776
      %v2808 = vpack.c.bf16 %v2779, %v2778
      %v2809 = vpack.c.bf16 %v2781, %v2780
      %v2810 = vpack.c.bf16 %v2783, %v2782
      %v2811 = vpack.c.bf16 %v2785, %v2784
      %v2812 = vpack.c.bf16 %v2787, %v2786
      %v2813 = vpack.c.bf16 %v2789, %v2788
      %v2814 = vpack.c.bf16 %v2791, %v2790
      %v2815 = vpack.c.bf16 %v2793, %v2792
      %v2816 = vpack.c.bf16 %v2795, %v2794
      %v2817 = vpack.c.bf16 %v2797, %v2796
      %v2818 = vpack.c.bf16 %v2799, %v2798
      %v2819 = vpack.c.bf16 %v2801, %v2800
      %v2820 = vpack.c.bf16 %v2803, %v2802
      %v2821 = vpack.c.bf16 %v2805, %v2804
      %v2822 = vld [vmem:[%s2 + $0x200] sm:$0xf]
      %v2823 = vld [vmem:[%s2 + $0x204] sm:$0xf]
      %v2824 = vld [vmem:[%s2 + $0x208] sm:$0xf]
      %v2825 = vld [vmem:[%s2 + $0x20c] sm:$0xf]
      %v2826 = vld [vmem:[%s2 + $0x210] sm:$0xf]
      %v2827 = vld [vmem:[%s2 + $0x214] sm:$0xf]
      %v2828 = vld [vmem:[%s2 + $0x218] sm:$0xf]
      %v2829 = vld [vmem:[%s2 + $0x21c] sm:$0xf]
      %v2830 = vld [vmem:[%s2 + $0x220] sm:$0xf]
      %v2831 = vld [vmem:[%s2 + $0x224] sm:$0xf]
      %v2832 = vld [vmem:[%s2 + $0x228] sm:$0xf]
      %v2833 = vld [vmem:[%s2 + $0x22c] sm:$0xf]
      %v2834 = vld [vmem:[%s2 + $0x230] sm:$0xf]
      %v2835 = vld [vmem:[%s2 + $0x234] sm:$0xf]
      %v2836 = vld [vmem:[%s2 + $0x238] sm:$0xf]
      %v2837 = vld [vmem:[%s2 + $0x23c] sm:$0xf]
      %v2854 = vunpack.c.l.b16 %v2822
      %v2855 = vunpack.c.l.b16 %v2823
      %v2856 = vunpack.c.l.b16 %v2824
      %v2857 = vunpack.c.l.b16 %v2825
      %v2858 = vunpack.c.l.b16 %v2826
      %v2859 = vunpack.c.l.b16 %v2827
      %v2860 = vunpack.c.l.b16 %v2828
      %v2861 = vunpack.c.l.b16 %v2829
      %v2862 = vunpack.c.l.b16 %v2830
      %v2863 = vunpack.c.l.b16 %v2831
      %v2864 = vunpack.c.l.b16 %v2832
      %v2865 = vunpack.c.l.b16 %v2833
      %v2866 = vunpack.c.l.b16 %v2834
      %v2867 = vunpack.c.l.b16 %v2835
      %v2868 = vunpack.c.l.b16 %v2836
      %v2869 = vunpack.c.l.b16 %v2837
      %v2870 = vpack.c.b16 %v2855, %v2854
      %v2871 = vpack.c.b16 %v2857, %v2856
      %v2872 = vpack.c.b16 %v2859, %v2858
      %v2873 = vpack.c.b16 %v2861, %v2860
      %v2874 = vpack.c.b16 %v2863, %v2862
      %v2875 = vpack.c.b16 %v2865, %v2864
      %v2876 = vpack.c.b16 %v2867, %v2866
      %v2877 = vpack.c.b16 %v2869, %v2868
      %2886 = vmatprep.subr.bf16.mxu0 0
      %2887 = vmatpush1.bf16.msra.mxu0 %v2877
      %2888 = vmatprep.subr.bf16.mxu0 0
      %2889 = vmatpush1.bf16.msra.mxu0 %v2876
      %2890 = vmatprep.subr.bf16.mxu0 0
      %2891 = vmatpush1.bf16.msra.mxu0 %v2875
      %2892 = vmatprep.subr.bf16.mxu0 0
      %2893 = vmatpush1.bf16.msra.mxu0 %v2874
      %2894 = vmatprep.subr.bf16.mxu0 0
      %2895 = vmatpush1.bf16.msra.mxu0 %v2873
      %2896 = vmatprep.subr.bf16.mxu0 0
      %2897 = vmatpush1.bf16.msra.mxu0 %v2872
      %2898 = vmatprep.subr.bf16.mxu0 0
      %2899 = vmatpush1.bf16.msra.mxu0 %v2871
      %2900 = vmatprep.subr.bf16.mxu0 0
      %2901 = vmatpush1.bf16.msra.mxu0 %v2870
      %2902 = vmatprep.subr.bf16.mxu0 0
      %2903 = vmatpush2.bf16.msra.mxu0 0
      %2904 = vmatprep.subr.bf16.mxu0 0
      %2905 = vmatpush2.bf16.msra.mxu0 0
      %2906 = vmatprep.subr.bf16.mxu0 0
      %2907 = vmatpush2.bf16.msra.mxu0 0
      %2908 = vmatprep.subr.bf16.mxu0 0
      %2909 = vmatpush2.bf16.msra.mxu0 0
      %2910 = vmatprep.subr.bf16.mxu0 0
      %2911 = vmatpush2.bf16.msra.mxu0 0
      %2912 = vmatprep.subr.bf16.mxu0 0
      %2913 = vmatpush2.bf16.msra.mxu0 0
      %2914 = vmatprep.subr.bf16.mxu0 0
      %2915 = vmatpush2.bf16.msra.mxu0 0
      %2916 = vmatprep.subr.bf16.mxu0 0
      %2917 = vmatpush2.bf16.msra.mxu0 0
      %2918 = vmatprep.mubr.bf16.mxu0 0
      %2919 = vmatmul.mubr.bf16.gmra.mxu0 %v2806
      %v2920 = vpop.f32.mrf.mxu0
      %v2921 = vadd.f32 0.0, %v2920
      %v2922 = vpop.f32.mrf.mxu0
      %v2923 = vpop.f32.mrf.mxu0
      %v2924 = vadd.f32 0.0, %v2923
      %v2925 = vpop.f32.mrf.mxu0
      %2926 = vmatprep.mubr.bf16.mxu0 0
      %2927 = vmatmul.mubr.bf16.gmra.mxu0 %v2807
      %v2928 = vpop.f32.mrf.mxu0
      %v2929 = vadd.f32 0.0, %v2928
      %v2930 = vpop.f32.mrf.mxu0
      %v2931 = vpop.f32.mrf.mxu0
      %v2932 = vadd.f32 0.0, %v2931
      %v2933 = vpop.f32.mrf.mxu0
      %2934 = vmatprep.mubr.bf16.mxu0 0
      %2935 = vmatmul.mubr.bf16.gmra.mxu0 %v2808
      %v2936 = vpop.f32.mrf.mxu0
      %v2937 = vadd.f32 0.0, %v2936
      %v2938 = vpop.f32.mrf.mxu0
      %v2939 = vpop.f32.mrf.mxu0
      %v2940 = vadd.f32 0.0, %v2939
      %v2941 = vpop.f32.mrf.mxu0
      %2942 = vmatprep.mubr.bf16.mxu0 0
      %2943 = vmatmul.mubr.bf16.gmra.mxu0 %v2809
      %v2944 = vpop.f32.mrf.mxu0
      %v2945 = vadd.f32 0.0, %v2944
      %v2946 = vpop.f32.mrf.mxu0
      %v2947 = vpop.f32.mrf.mxu0
      %v2948 = vadd.f32 0.0, %v2947
      %v2949 = vpop.f32.mrf.mxu0
      %2950 = vmatprep.mubr.bf16.mxu0 0
      %2951 = vmatmul.mubr.bf16.gmra.mxu0 %v2810
      %v2952 = vpop.f32.mrf.mxu0
      %v2953 = vadd.f32 0.0, %v2952
      %v2954 = vpop.f32.mrf.mxu0
      %v2955 = vpop.f32.mrf.mxu0
      %v2956 = vadd.f32 0.0, %v2955
      %v2957 = vpop.f32.mrf.mxu0
      %2958 = vmatprep.mubr.bf16.mxu0 0
      %2959 = vmatmul.mubr.bf16.gmra.mxu0 %v2811
      %v2960 = vpop.f32.mrf.mxu0
      %v2961 = vadd.f32 0.0, %v2960
      %v2962 = vpop.f32.mrf.mxu0
      %v2963 = vpop.f32.mrf.mxu0
      %v2964 = vadd.f32 0.0, %v2963
      %v2965 = vpop.f32.mrf.mxu0
      %2966 = vmatprep.mubr.bf16.mxu0 0
      %2967 = vmatmul.mubr.bf16.gmra.mxu0 %v2812
      %v2968 = vpop.f32.mrf.mxu0
      %v2969 = vadd.f32 0.0, %v2968
      %v2970 = vpop.f32.mrf.mxu0
      %v2971 = vpop.f32.mrf.mxu0
      %v2972 = vadd.f32 0.0, %v2971
      %v2973 = vpop.f32.mrf.mxu0
      %2974 = vmatprep.mubr.bf16.mxu0 0
      %2975 = vmatmul.mubr.bf16.gmra.mxu0 %v2813
      %v2976 = vpop.f32.mrf.mxu0
      %v2977 = vadd.f32 0.0, %v2976
      %v2978 = vpop.f32.mrf.mxu0
      %v2979 = vpop.f32.mrf.mxu0
      %v2980 = vadd.f32 0.0, %v2979
      %v2981 = vpop.f32.mrf.mxu0
      %2982 = vmatprep.mubr.bf16.mxu0 0
      %2983 = vmatmul.mubr.bf16.gmra.mxu0 %v2814
      %v2984 = vpop.f32.mrf.mxu0
      %v2985 = vadd.f32 0.0, %v2984
      %v2986 = vpop.f32.mrf.mxu0
      %v2987 = vpop.f32.mrf.mxu0
      %v2988 = vadd.f32 0.0, %v2987
      %v2989 = vpop.f32.mrf.mxu0
      %2990 = vmatprep.mubr.bf16.mxu0 0
      %2991 = vmatmul.mubr.bf16.gmra.mxu0 %v2815
      %v2992 = vpop.f32.mrf.mxu0
      %v2993 = vadd.f32 0.0, %v2992
      %v2994 = vpop.f32.mrf.mxu0
      %v2995 = vpop.f32.mrf.mxu0
      %v2996 = vadd.f32 0.0, %v2995
      %v2997 = vpop.f32.mrf.mxu0
      %2998 = vmatprep.mubr.bf16.mxu0 0
      %2999 = vmatmul.mubr.bf16.gmra.mxu0 %v2816
      %v3000 = vpop.f32.mrf.mxu0
      %v3001 = vadd.f32 0.0, %v3000
      %v3002 = vpop.f32.mrf.mxu0
      %v3003 = vpop.f32.mrf.mxu0
      %v3004 = vadd.f32 0.0, %v3003
      %v3005 = vpop.f32.mrf.mxu0
      %3006 = vmatprep.mubr.bf16.mxu0 0
      %3007 = vmatmul.mubr.bf16.gmra.mxu0 %v2817
      %v3008 = vpop.f32.mrf.mxu0
      %v3009 = vadd.f32 0.0, %v3008
      %v3010 = vpop.f32.mrf.mxu0
      %v3011 = vpop.f32.mrf.mxu0
      %v3012 = vadd.f32 0.0, %v3011
      %v3013 = vpop.f32.mrf.mxu0
      %3014 = vmatprep.mubr.bf16.mxu0 0
      %3015 = vmatmul.mubr.bf16.gmra.mxu0 %v2818
      %v3016 = vpop.f32.mrf.mxu0
      %v3017 = vadd.f32 0.0, %v3016
      %v3018 = vpop.f32.mrf.mxu0
      %v3019 = vpop.f32.mrf.mxu0
      %v3020 = vadd.f32 0.0, %v3019
      %v3021 = vpop.f32.mrf.mxu0
      %3022 = vmatprep.mubr.bf16.mxu0 0
      %3023 = vmatmul.mubr.bf16.gmra.mxu0 %v2819
      %v3024 = vpop.f32.mrf.mxu0
      %v3025 = vadd.f32 0.0, %v3024
      %v3026 = vpop.f32.mrf.mxu0
      %v3027 = vpop.f32.mrf.mxu0
      %v3028 = vadd.f32 0.0, %v3027
      %v3029 = vpop.f32.mrf.mxu0
      %3030 = vmatprep.mubr.bf16.mxu0 0
      %3031 = vmatmul.mubr.bf16.gmra.mxu0 %v2820
      %v3032 = vpop.f32.mrf.mxu0
      %v3033 = vadd.f32 0.0, %v3032
      %v3034 = vpop.f32.mrf.mxu0
      %v3035 = vpop.f32.mrf.mxu0
      %v3036 = vadd.f32 0.0, %v3035
      %v3037 = vpop.f32.mrf.mxu0
      %3038 = vmatprep.mubr.bf16.mxu0 0
      %3039 = vmatmul.mubr.bf16.gmra.mxu0 %v2821
      %v3040 = vpop.f32.mrf.mxu0
      %v3041 = vadd.f32 0.0, %v3040
      %v3042 = vpop.f32.mrf.mxu0
      %v3043 = vpop.f32.mrf.mxu0
      %v3044 = vadd.f32 0.0, %v3043
      %v3045 = vpop.f32.mrf.mxu0
      %3046 = vdwg.mxu0
      %v3047 = vadd.f32 %v2742, %v2921
      %v3048 = vadd.f32 %v2743, %v2924
      %v3049 = vadd.f32 %v2744, %v2929
      %v3050 = vadd.f32 %v2745, %v2932
      %v3051 = vadd.f32 %v2746, %v2937
      %v3052 = vadd.f32 %v2747, %v2940
      %v3053 = vadd.f32 %v2748, %v2945
      %v3054 = vadd.f32 %v2749, %v2948
      %v3055 = vadd.f32 %v2750, %v2953
      %v3056 = vadd.f32 %v2751, %v2956
      %v3057 = vadd.f32 %v2752, %v2961
      %v3058 = vadd.f32 %v2753, %v2964
      %v3059 = vadd.f32 %v2754, %v2969
      %v3060 = vadd.f32 %v2755, %v2972
      %v3061 = vadd.f32 %v2756, %v2977
      %v3062 = vadd.f32 %v2757, %v2980
      %v3063 = vadd.f32 %v2758, %v2985
      %v3064 = vadd.f32 %v2759, %v2988
      %v3065 = vadd.f32 %v2760, %v2993
      %v3066 = vadd.f32 %v2761, %v2996
      %v3067 = vadd.f32 %v2762, %v3001
      %v3068 = vadd.f32 %v2763, %v3004
      %v3069 = vadd.f32 %v2764, %v3009
      %v3070 = vadd.f32 %v2765, %v3012
      %v3071 = vadd.f32 %v2766, %v3017
      %v3072 = vadd.f32 %v2767, %v3020
      %v3073 = vadd.f32 %v2768, %v3025
      %v3074 = vadd.f32 %v2769, %v3028
      %v3075 = vadd.f32 %v2770, %v3033
      %v3076 = vadd.f32 %v2771, %v3036
      %v3077 = vadd.f32 %v2772, %v3041
      %v3078 = vadd.f32 %v2773, %v3044
      %3079 = vst [vmem:[%s277] sm:$0xff] %v3047
      %3080 = vst [vmem:[%s277 + $0x8] sm:$0xff] %v3048
      %3081 = vst [vmem:[%s277 + $0x10] sm:$0xff] %v3049
      %3082 = vst [vmem:[%s277 + $0x18] sm:$0xff] %v3050
      %3083 = vst [vmem:[%s277 + $0x20] sm:$0xff] %v3051
      %3084 = vst [vmem:[%s277 + $0x28] sm:$0xff] %v3052
      %3085 = vst [vmem:[%s277 + $0x30] sm:$0xff] %v3053
      %3086 = vst [vmem:[%s277 + $0x38] sm:$0xff] %v3054
      %3087 = vst [vmem:[%s277 + $0x40] sm:$0xff] %v3055
      %3088 = vst [vmem:[%s277 + $0x48] sm:$0xff] %v3056
      %3089 = vst [vmem:[%s277 + $0x50] sm:$0xff] %v3057
      %3090 = vst [vmem:[%s277 + $0x58] sm:$0xff] %v3058
      %3091 = vst [vmem:[%s277 + $0x60] sm:$0xff] %v3059
      %3092 = vst [vmem:[%s277 + $0x68] sm:$0xff] %v3060
      %3093 = vst [vmem:[%s277 + $0x70] sm:$0xff] %v3061
      %3094 = vst [vmem:[%s277 + $0x78] sm:$0xff] %v3062
      %3095 = vst [vmem:[%s277 + $0x80] sm:$0xff] %v3063
      %3096 = vst [vmem:[%s277 + $0x88] sm:$0xff] %v3064
      %3097 = vst [vmem:[%s277 + $0x90] sm:$0xff] %v3065
      %3098 = vst [vmem:[%s277 + $0x98] sm:$0xff] %v3066
      %3099 = vst [vmem:[%s277 + $0xa0] sm:$0xff] %v3067
      %3100 = vst [vmem:[%s277 + $0xa8] sm:$0xff] %v3068
      %3101 = vst [vmem:[%s277 + $0xb0] sm:$0xff] %v3069
      %3102 = vst [vmem:[%s277 + $0xb8] sm:$0xff] %v3070
      %3103 = vst [vmem:[%s277 + $0xc0] sm:$0xff] %v3071
      %3104 = vst [vmem:[%s277 + $0xc8] sm:$0xff] %v3072
      %3105 = vst [vmem:[%s277 + $0xd0] sm:$0xff] %v3073
      %3106 = vst [vmem:[%s277 + $0xd8] sm:$0xff] %v3074
      %3107 = vst [vmem:[%s277 + $0xe0] sm:$0xff] %v3075
      %3108 = vst [vmem:[%s277 + $0xe8] sm:$0xff] %v3076
      %3109 = vst [vmem:[%s277 + $0xf0] sm:$0xff] %v3077
      %3110 = vst [vmem:[%s277 + $0xf8] sm:$0xff] %v3078
      %v3111 = vld [vmem:[%s271] sm:$0xff]
      %v3112 = vld [vmem:[%s271 + $0x8] sm:$0xff]
      %v3113 = vld [vmem:[%s271 + $0x10] sm:$0xff]
      %v3114 = vld [vmem:[%s271 + $0x18] sm:$0xff]
      %v3115 = vld [vmem:[%s271 + $0x20] sm:$0xff]
      %v3116 = vld [vmem:[%s271 + $0x28] sm:$0xff]
      %v3117 = vld [vmem:[%s271 + $0x30] sm:$0xff]
      %v3118 = vld [vmem:[%s271 + $0x38] sm:$0xff]
      %v3119 = vld [vmem:[%s271 + $0x40] sm:$0xff]
      %v3120 = vld [vmem:[%s271 + $0x48] sm:$0xff]
      %v3121 = vld [vmem:[%s271 + $0x50] sm:$0xff]
      %v3122 = vld [vmem:[%s271 + $0x58] sm:$0xff]
      %v3123 = vld [vmem:[%s271 + $0x60] sm:$0xff]
      %v3124 = vld [vmem:[%s271 + $0x68] sm:$0xff]
      %v3125 = vld [vmem:[%s271 + $0x70] sm:$0xff]
      %v3126 = vld [vmem:[%s271 + $0x78] sm:$0xff]
      %v3127 = vld [vmem:[%s271 + $0x80] sm:$0xff]
      %v3128 = vld [vmem:[%s271 + $0x88] sm:$0xff]
      %v3129 = vld [vmem:[%s271 + $0x90] sm:$0xff]
      %v3130 = vld [vmem:[%s271 + $0x98] sm:$0xff]
      %v3131 = vld [vmem:[%s271 + $0xa0] sm:$0xff]
      %v3132 = vld [vmem:[%s271 + $0xa8] sm:$0xff]
      %v3133 = vld [vmem:[%s271 + $0xb0] sm:$0xff]
      %v3134 = vld [vmem:[%s271 + $0xb8] sm:$0xff]
      %v3135 = vld [vmem:[%s271 + $0xc0] sm:$0xff]
      %v3136 = vld [vmem:[%s271 + $0xc8] sm:$0xff]
      %v3137 = vld [vmem:[%s271 + $0xd0] sm:$0xff]
      %v3138 = vld [vmem:[%s271 + $0xd8] sm:$0xff]
      %v3139 = vld [vmem:[%s271 + $0xe0] sm:$0xff]
      %v3140 = vld [vmem:[%s271 + $0xe8] sm:$0xff]
      %v3141 = vld [vmem:[%s271 + $0xf0] sm:$0xff]
      %v3142 = vld [vmem:[%s271 + $0xf8] sm:$0xff]
      %3144 = vset.pattern.permute.xlu0 0
      %3145 = vperm.xlu0 %3144, %v3111
      %v3146 = vpop.permute.xlu0 %3145
      %3149 = vset.pattern.permute.xlu0 0
      %3150 = vperm.xlu0 %3149, %v3112
      %v3151 = vpop.permute.xlu0 %3150
      %3154 = vset.pattern.permute.xlu0 0
      %3155 = vperm.xlu0 %3154, %v3113
      %v3156 = vpop.permute.xlu0 %3155
      %3159 = vset.pattern.permute.xlu0 0
      %3160 = vperm.xlu0 %3159, %v3114
      %v3161 = vpop.permute.xlu0 %3160
      %3164 = vset.pattern.permute.xlu0 0
      %3165 = vperm.xlu0 %3164, %v3115
      %v3166 = vpop.permute.xlu0 %3165
      %3169 = vset.pattern.permute.xlu0 0
      %3170 = vperm.xlu0 %3169, %v3116
      %v3171 = vpop.permute.xlu0 %3170
      %3174 = vset.pattern.permute.xlu0 0
      %3175 = vperm.xlu0 %3174, %v3117
      %v3176 = vpop.permute.xlu0 %3175
      %3179 = vset.pattern.permute.xlu0 0
      %3180 = vperm.xlu0 %3179, %v3118
      %v3181 = vpop.permute.xlu0 %3180
      %3184 = vset.pattern.permute.xlu0 0
      %3185 = vperm.xlu0 %3184, %v3119
      %v3186 = vpop.permute.xlu0 %3185
      %3189 = vset.pattern.permute.xlu0 0
      %3190 = vperm.xlu0 %3189, %v3120
      %v3191 = vpop.permute.xlu0 %3190
      %3194 = vset.pattern.permute.xlu0 0
      %3195 = vperm.xlu0 %3194, %v3121
      %v3196 = vpop.permute.xlu0 %3195
      %3199 = vset.pattern.permute.xlu0 0
      %3200 = vperm.xlu0 %3199, %v3122
      %v3201 = vpop.permute.xlu0 %3200
      %3204 = vset.pattern.permute.xlu0 0
      %3205 = vperm.xlu0 %3204, %v3123
      %v3206 = vpop.permute.xlu0 %3205
      %3209 = vset.pattern.permute.xlu0 0
      %3210 = vperm.xlu0 %3209, %v3124
      %v3211 = vpop.permute.xlu0 %3210
      %3214 = vset.pattern.permute.xlu0 0
      %3215 = vperm.xlu0 %3214, %v3125
      %v3216 = vpop.permute.xlu0 %3215
      %3219 = vset.pattern.permute.xlu0 0
      %3220 = vperm.xlu0 %3219, %v3126
      %v3221 = vpop.permute.xlu0 %3220
      %3224 = vset.pattern.permute.xlu0 0
      %3225 = vperm.xlu0 %3224, %v3127
      %v3226 = vpop.permute.xlu0 %3225
      %3229 = vset.pattern.permute.xlu0 0
      %3230 = vperm.xlu0 %3229, %v3128
      %v3231 = vpop.permute.xlu0 %3230
      %3234 = vset.pattern.permute.xlu0 0
      %3235 = vperm.xlu0 %3234, %v3129
      %v3236 = vpop.permute.xlu0 %3235
      %3239 = vset.pattern.permute.xlu0 0
      %3240 = vperm.xlu0 %3239, %v3130
      %v3241 = vpop.permute.xlu0 %3240
      %3244 = vset.pattern.permute.xlu0 0
      %3245 = vperm.xlu0 %3244, %v3131
      %v3246 = vpop.permute.xlu0 %3245
      %3249 = vset.pattern.permute.xlu0 0
      %3250 = vperm.xlu0 %3249, %v3132
      %v3251 = vpop.permute.xlu0 %3250
      %3254 = vset.pattern.permute.xlu0 0
      %3255 = vperm.xlu0 %3254, %v3133
      %v3256 = vpop.permute.xlu0 %3255
      %3259 = vset.pattern.permute.xlu0 0
      %3260 = vperm.xlu0 %3259, %v3134
      %v3261 = vpop.permute.xlu0 %3260
      %3264 = vset.pattern.permute.xlu0 0
      %3265 = vperm.xlu0 %3264, %v3135
      %v3266 = vpop.permute.xlu0 %3265
      %3269 = vset.pattern.permute.xlu0 0
      %3270 = vperm.xlu0 %3269, %v3136
      %v3271 = vpop.permute.xlu0 %3270
      %3274 = vset.pattern.permute.xlu0 0
      %3275 = vperm.xlu0 %3274, %v3137
      %v3276 = vpop.permute.xlu0 %3275
      %3279 = vset.pattern.permute.xlu0 0
      %3280 = vperm.xlu0 %3279, %v3138
      %v3281 = vpop.permute.xlu0 %3280
      %3284 = vset.pattern.permute.xlu0 0
      %3285 = vperm.xlu0 %3284, %v3139
      %v3286 = vpop.permute.xlu0 %3285
      %3289 = vset.pattern.permute.xlu0 0
      %3290 = vperm.xlu0 %3289, %v3140
      %v3291 = vpop.permute.xlu0 %3290
      %3294 = vset.pattern.permute.xlu0 0
      %3295 = vperm.xlu0 %3294, %v3141
      %v3296 = vpop.permute.xlu0 %3295
      %3299 = vset.pattern.permute.xlu0 0
      %3300 = vperm.xlu0 %3299, %v3142
      %v3301 = vpop.permute.xlu0 %3300
      %v3303 = vmul.f32 %v3047, %v3146
      %v3304 = vmul.f32 %v3048, %v3151
      %v3305 = vmul.f32 %v3049, %v3156
      %v3306 = vmul.f32 %v3050, %v3161
      %v3307 = vmul.f32 %v3051, %v3166
      %v3308 = vmul.f32 %v3052, %v3171
      %v3309 = vmul.f32 %v3053, %v3176
      %v3310 = vmul.f32 %v3054, %v3181
      %v3311 = vmul.f32 %v3055, %v3186
      %v3312 = vmul.f32 %v3056, %v3191
      %v3313 = vmul.f32 %v3057, %v3196
      %v3314 = vmul.f32 %v3058, %v3201
      %v3315 = vmul.f32 %v3059, %v3206
      %v3316 = vmul.f32 %v3060, %v3211
      %v3317 = vmul.f32 %v3061, %v3216
      %v3318 = vmul.f32 %v3062, %v3221
      %v3319 = vmul.f32 %v3063, %v3226
      %v3320 = vmul.f32 %v3064, %v3231
      %v3321 = vmul.f32 %v3065, %v3236
      %v3322 = vmul.f32 %v3066, %v3241
      %v3323 = vmul.f32 %v3067, %v3246
      %v3324 = vmul.f32 %v3068, %v3251
      %v3325 = vmul.f32 %v3069, %v3256
      %v3326 = vmul.f32 %v3070, %v3261
      %v3327 = vmul.f32 %v3071, %v3266
      %v3328 = vmul.f32 %v3072, %v3271
      %v3329 = vmul.f32 %v3073, %v3276
      %v3330 = vmul.f32 %v3074, %v3281
      %v3331 = vmul.f32 %v3075, %v3286
      %v3332 = vmul.f32 %v3076, %v3291
      %v3333 = vmul.f32 %v3077, %v3296
      %v3334 = vmul.f32 %v3078, %v3301
      %v3335 = vadd.f32 %v3303, %v3304
      %v3336 = vadd.f32 %v3335, %v3305
      %v3337 = vadd.f32 %v3336, %v3306
      %v3338 = vadd.f32 %v3337, %v3307
      %v3339 = vadd.f32 %v3338, %v3308
      %v3340 = vadd.f32 %v3339, %v3309
      %v3341 = vadd.f32 %v3340, %v3310
      %v3342 = vadd.f32 %v3341, %v3311
      %v3343 = vadd.f32 %v3342, %v3312
      %v3344 = vadd.f32 %v3343, %v3313
      %v3345 = vadd.f32 %v3344, %v3314
      %v3346 = vadd.f32 %v3345, %v3315
      %v3347 = vadd.f32 %v3346, %v3316
      %v3348 = vadd.f32 %v3347, %v3317
      %v3349 = vadd.f32 %v3348, %v3318
      %v3350 = vadd.f32 %v3349, %v3319
      %v3351 = vadd.f32 %v3350, %v3320
      %v3352 = vadd.f32 %v3351, %v3321
      %v3353 = vadd.f32 %v3352, %v3322
      %v3354 = vadd.f32 %v3353, %v3323
      %v3355 = vadd.f32 %v3354, %v3324
      %v3356 = vadd.f32 %v3355, %v3325
      %v3357 = vadd.f32 %v3356, %v3326
      %v3358 = vadd.f32 %v3357, %v3327
      %v3359 = vadd.f32 %v3358, %v3328
      %v3360 = vadd.f32 %v3359, %v3329
      %v3361 = vadd.f32 %v3360, %v3330
      %v3362 = vadd.f32 %v3361, %v3331
      %v3363 = vadd.f32 %v3362, %v3332
      %v3364 = vadd.f32 %v3363, %v3333
      %v3365 = vadd.f32 %v3364, %v3334
      %v3366 = vrot.slane %v3365, 4
      %v3367 = vadd.f32 %v3365, %v3366
      %v3368 = vrot.slane %v3367, 2
      %v3369 = vadd.f32 %v3367, %v3368
      %v3370 = vrot.slane %v3369, 1
      %v3371 = vadd.f32 %v3369, %v3370
      %3372 = vst [vmem:[%s282] sm:$0x1] %v3371
      %v3373 = vmul.f32 %v3303, %v3047
      %v3374 = vmul.f32 %v3304, %v3048
      %v3375 = vmul.f32 %v3305, %v3049
      %v3376 = vmul.f32 %v3306, %v3050
      %v3377 = vmul.f32 %v3307, %v3051
      %v3378 = vmul.f32 %v3308, %v3052
      %v3379 = vmul.f32 %v3309, %v3053
      %v3380 = vmul.f32 %v3310, %v3054
      %v3381 = vmul.f32 %v3311, %v3055
      %v3382 = vmul.f32 %v3312, %v3056
      %v3383 = vmul.f32 %v3313, %v3057
      %v3384 = vmul.f32 %v3314, %v3058
      %v3385 = vmul.f32 %v3315, %v3059
      %v3386 = vmul.f32 %v3316, %v3060
      %v3387 = vmul.f32 %v3317, %v3061
      %v3388 = vmul.f32 %v3318, %v3062
      %v3389 = vmul.f32 %v3319, %v3063
      %v3390 = vmul.f32 %v3320, %v3064
      %v3391 = vmul.f32 %v3321, %v3065
      %v3392 = vmul.f32 %v3322, %v3066
      %v3393 = vmul.f32 %v3323, %v3067
      %v3394 = vmul.f32 %v3324, %v3068
      %v3395 = vmul.f32 %v3325, %v3069
      %v3396 = vmul.f32 %v3326, %v3070
      %v3397 = vmul.f32 %v3327, %v3071
      %v3398 = vmul.f32 %v3328, %v3072
      %v3399 = vmul.f32 %v3329, %v3073
      %v3400 = vmul.f32 %v3330, %v3074
      %v3401 = vmul.f32 %v3331, %v3075
      %v3402 = vmul.f32 %v3332, %v3076
      %v3403 = vmul.f32 %v3333, %v3077
      %v3404 = vmul.f32 %v3334, %v3078
      %v3405 = vadd.f32 %v3373, %v3374
      %v3406 = vadd.f32 %v3405, %v3375
      %v3407 = vadd.f32 %v3406, %v3376
      %v3408 = vadd.f32 %v3407, %v3377
      %v3409 = vadd.f32 %v3408, %v3378
      %v3410 = vadd.f32 %v3409, %v3379
      %v3411 = vadd.f32 %v3410, %v3380
      %v3412 = vadd.f32 %v3411, %v3381
      %v3413 = vadd.f32 %v3412, %v3382
      %v3414 = vadd.f32 %v3413, %v3383
      %v3415 = vadd.f32 %v3414, %v3384
      %v3416 = vadd.f32 %v3415, %v3385
      %v3417 = vadd.f32 %v3416, %v3386
      %v3418 = vadd.f32 %v3417, %v3387
      %v3419 = vadd.f32 %v3418, %v3388
      %v3420 = vadd.f32 %v3419, %v3389
      %v3421 = vadd.f32 %v3420, %v3390
      %v3422 = vadd.f32 %v3421, %v3391
      %v3423 = vadd.f32 %v3422, %v3392
      %v3424 = vadd.f32 %v3423, %v3393
      %v3425 = vadd.f32 %v3424, %v3394
      %v3426 = vadd.f32 %v3425, %v3395
      %v3427 = vadd.f32 %v3426, %v3396
      %v3428 = vadd.f32 %v3427, %v3397
      %v3429 = vadd.f32 %v3428, %v3398
      %v3430 = vadd.f32 %v3429, %v3399
      %v3431 = vadd.f32 %v3430, %v3400
      %v3432 = vadd.f32 %v3431, %v3401
      %v3433 = vadd.f32 %v3432, %v3402
      %v3434 = vadd.f32 %v3433, %v3403
      %v3435 = vadd.f32 %v3434, %v3404
      %v3436 = vrot.slane %v3435, 4
      %v3437 = vadd.f32 %v3435, %v3436
      %v3438 = vrot.slane %v3437, 2
      %v3439 = vadd.f32 %v3437, %v3438
      %v3440 = vrot.slane %v3439, 1
      %v3441 = vadd.f32 %v3439, %v3440
      %3442 = vst [vmem:[%s282 + $0x1] sm:$0x1] %v3441
      %3443 = vst [vmem:[%s282 + $0x2] sm:$0x3f] 0.0
      %s3444 = smul.u32 32, %s17
      %p3445 = scmp.lt.s32.totalorder %s3444, 95
      %s3446 = scalar_select %p3445, %s3444, 95
      %s3447 = smul.addr %s3446, 8
      %s3448 = scalar_lea.vmem %s4, %s3447
      %p3449 = scmp.lt.s32.totalorder %s17, 2
      %s3450 = scalar_select %p3449, %s17, 2
      %s3451 = smul.addr %s3450, 8
      %s3452 = scalar_lea.vmem %s5, %s3451
      // Predicated region
      $region37: #{bottleneck_forward.4} parent=35 // pred_check
        %p3453 = pneg %p134
      $region38: #{bottleneck_forward.4} parent=35 // pred_check_branch
        %3455 = sbr.rel (%p3453) target = $region40
      $region39: #{bottleneck_forward.4} parent=35 // pred_region
        %s3456 = smul.u32 32, %s17
      $region40: #{bottleneck_forward.4} parent=35 // pred_fallthru
        _
      // Predicated region
      $region41: #{bottleneck_forward.4} parent=35 // pred_check
        %p3457 = pneg %p160
      $region42: #{bottleneck_forward.4} parent=35 // pred_check_branch
        %3459 = sbr.rel (%p3457) target = $region44
      $region43: #{bottleneck_forward.4} parent=35 // pred_region
        _
      $region44: #{bottleneck_forward.4} parent=35 // pred_fallthru
        _
    $region36: #{bottleneck_forward.4} parent=5 // pred_fallthru
      _
    %p3460 = scmp.le.s32.totalorder 2, %s12
    // Predicated region
    $region45: #{bottleneck_forward.4} parent=5 // pred_check
      %p3461 = pneg %p3460
    $region46: #{bottleneck_forward.4} parent=5 // pred_check_branch
      %3463 = sbr.rel (%p3461) target = $region48
    $region47: #{bottleneck_forward.4} parent=5 // pred_region
      %s3464 = ssub.s32 %s12, 2
      // Predicated region
      $region49: #{bottleneck_forward.4} parent=47 // pred_check
        %p3465 = pneg %p140
      $region50: #{bottleneck_forward.4} parent=47 // pred_check_branch
        %3467 = sbr.rel (%p3465) target = $region52
      $region51: #{bottleneck_forward.4} parent=47 // pred_region
        %s3468 = smul.u32 32, %s18
        %p3469 = scmp.lt.s32.totalorder %s3468, 95
        %s3470 = scalar_select %p3469, %s3468, 95
        %s3471 = smul.addr %s3470, 8
        %s3472 = scalar_lea.vmem %s4, %s3471
      $region52: #{bottleneck_forward.4} parent=47 // pred_fallthru
        _
      // Predicated region
      $region53: #{bottleneck_forward.4} parent=47 // pred_check
        %p3473 = pneg %p166
      $region54: #{bottleneck_forward.4} parent=47 // pred_check_branch
        %3475 = sbr.rel (%p3473) target = $region56
      $region55: #{bottleneck_forward.4} parent=47 // pred_region
        %p3476 = scmp.lt.s32.totalorder %s18, 2
        %s3477 = scalar_select %p3476, %s18, 2
        %s3478 = smul.addr %s3477, 8
        %s3479 = scalar_lea.vmem %s5, %s3478
      $region56: #{bottleneck_forward.4} parent=47 // pred_fallthru
        _
    $region48: #{bottleneck_forward.4} parent=5 // pred_fallthru
      _
  $region6: #{bottleneck_forward.4} parent=0 // loop_footer
    %s16 = sadd.s32 1, %s12
  $region7: #{bottleneck_forward.4} parent=0 // loop_footer_branch
    %11 = sbr.rel target = $region3
  $region8: #{bottleneck_forward.4} parent=0 // loop_exit
    _

</llo_original>
